<compile_context>
chip_gen: v5e
topology: v5e:2x2
jax: 0.10.0
libtpu: 0.0.40
codegen_flags: <defaults>
</compile_context>

<pallas_src>
import functools

import jax
import jax.numpy as jnp
from jax.experimental import pallas as pl
from jax.experimental.pallas import tpu as pltpu

_EPS = 1e-5          # torch.nn.BatchNorm3d default eps
_LANE = 128
_VMEM_LIMIT = 32 * 1024 * 1024


def _round_up(x, m):
    return (x + m - 1) // m * m


# --------------------------------------------------------------------------- #
# Pass 1: 3x3x3 conv as 27 shifted GEMMs (MXU, bf16 x bf16 -> f32) fused with
# masked per-channel sum / sum-of-squares accumulation for BatchNorm.
# Layout: per (n, d_out) grid step the kernel sees, for kd = 0,1,2, one depth
# slice of the padded input flattened over the (H+2, W+2) plane plus a halo of
# zero rows, so every tap is a contiguous row window at a static offset.
# Rows on the pad ring produce garbage ("ext" rows); they are masked out of the
# statistics and discarded in the wrapper.
# --------------------------------------------------------------------------- #
def _make_conv_stats_kernel(rows, width, halo):
    def kernel(x0_ref, x1_ref, x2_ref, w_ref, mask_ref, y_ref, sum_ref, sq_ref):
        @pl.when((pl.program_id(0) == 0) & (pl.program_id(1) == 0))
        def _init():
            sum_ref[...] = jnp.zeros_like(sum_ref)
            sq_ref[...] = jnp.zeros_like(sq_ref)

        x_refs = (x0_ref, x1_ref, x2_ref)
        acc = None
        for kd in range(3):
            xr = x_refs[kd]
            for kh in range(3):
                for kw in range(3):
                    off = halo + (kh - 1) * (width + 2) + (kw - 1)  # static
                    k = kd * 9 + kh * 3 + kw
                    slab = xr[off:off + rows, :].astype(jnp.bfloat16)
                    part = jnp.dot(slab, w_ref[k],
                                   preferred_element_type=jnp.float32)
                    acc = part if acc is None else acc + part

        y_ref[...] = acc
        masked = acc * mask_ref[...]          # zero out pad-ring rows for stats
        sum_ref[...] += jnp.sum(masked, axis=0, keepdims=True)
        sq_ref[...] += jnp.sum(masked * acc, axis=0, keepdims=True)

    return kernel


def _conv3d_bn_stats(x_in, w_taps, mask, *, width, halo):
    """x_in: (N, D+2, R+2*halo, CP) f32, w_taps: (27, CP, CP) bf16,
    mask: (R, 1) f32 -> (y_ext (N, D, R, CP) f32, sum (1, CP), sumsq (1, CP))."""
    n, d_pad, r_in, cp = x_in.shape
    d = d_pad - 2
    r = mask.shape[0]

    kernel = _make_conv_stats_kernel(r, width, halo)

    def x_spec(kd):
        return pl.BlockSpec((None, None, r_in, cp),
                            lambda ni, di, kd=kd: (ni, di + kd, 0, 0))

    return pl.pallas_call(
        kernel,
        grid=(n, d),
        in_specs=[
            x_spec(0), x_spec(1), x_spec(2),
            pl.BlockSpec((27, cp, cp), lambda ni, di: (0, 0, 0)),   # resident
            pl.BlockSpec((r, 1), lambda ni, di: (0, 0)),            # resident
        ],
        out_specs=[
            pl.BlockSpec((None, None, r, cp), lambda ni, di: (ni, di, 0, 0)),
            pl.BlockSpec((1, cp), lambda ni, di: (0, 0)),   # VMEM-resident accumulators
            pl.BlockSpec((1, cp), lambda ni, di: (0, 0)),
        ],
        out_shape=[
            jax.ShapeDtypeStruct((n, d, r, cp), jnp.float32),
            jax.ShapeDtypeStruct((1, cp), jnp.float32),
            jax.ShapeDtypeStruct((1, cp), jnp.float32),
        ],
        # Stats accumulate across the whole grid -> both axes must stay serial.
        compiler_params=pltpu.CompilerParams(
            dimension_semantics=("arbitrary", "arbitrary"),
            vmem_limit_bytes=_VMEM_LIMIT),
    )(x_in, x_in, x_in, w_taps, mask)


# --------------------------------------------------------------------------- #
# Pass 2: y * scale + shift (+ residual) -> ReLU, masked so that pad-ring rows
# are exact zeros (which makes the result directly reusable as the spatially
# zero-padded input of the next conv).
# --------------------------------------------------------------------------- #
def _bn_act_kernel(y_ref, scale_ref, shift_ref, mask_ref, o_ref):
    y = y_ref[...] * scale_ref[...] + shift_ref[...]
    o_ref[...] = (jnp.maximum(y, 0.0) * mask_ref[...]).astype(o_ref.dtype)


def _bn_add_act_kernel(y_ref, scale_ref, shift_ref, mask_ref, r_ref, o_ref):
    y = y_ref[...] * scale_ref[...] + shift_ref[...] + r_ref[...]
    o_ref[...] = (jnp.maximum(y, 0.0) * mask_ref[...]).astype(o_ref.dtype)


def _bn_act(y_ext, scale, shift, mask, residual=None):
    n, d, r, cp = y_ext.shape
    args = [y_ext, scale, shift, mask]
    kernel = _bn_act_kernel
    in_specs = [
        pl.BlockSpec((None, None, r, cp), lambda ni, di: (ni, di, 0, 0)),
        pl.BlockSpec((1, cp), lambda ni, di: (0, 0)),
        pl.BlockSpec((1, cp), lambda ni, di: (0, 0)),
        pl.BlockSpec((r, 1), lambda ni, di: (0, 0)),
    ]
    if residual is not None:
        args.append(residual)
        kernel = _bn_add_act_kernel
        in_specs.append(
            pl.BlockSpec((None, None, r, cp), lambda ni, di: (ni, di, 0, 0)))

    return pl.pallas_call(
        kernel,
        grid=(n, d),
        in_specs=in_specs,
        out_specs=pl.BlockSpec((None, None, r, cp), lambda ni, di: (ni, di, 0, 0)),
        out_shape=jax.ShapeDtypeStruct((n, d, r, cp), jnp.float32),
        compiler_params=pltpu.CompilerParams(
            dimension_semantics=("parallel", "parallel"),
            vmem_limit_bytes=_VMEM_LIMIT),
    )(*args)


# ------------------------------- JAX glue ---------------------------------- #
def basic_block_forward(x_ncdhw, params):
    """Forward of BasicBlock(in_planes=planes, stride=1, downsample=None)."""
    n, c, d, h, w = x_ncdhw.shape
    planes = params["conv1_w"].shape[0]
    assert planes == c, "stride=1 / downsample=None requires in_planes == planes"

    cp = _round_up(c, _LANE)               # lane-dense channel padding
    r = (h + 2) * (w + 2)                  # flattened padded (H, W) plane
    hb = w + 3                             # halo rows (>= max tap row offset)

    # channels-last, channel-padded, f32
    x_cl = jnp.transpose(x_ncdhw, (0, 2, 3, 4, 1)).astype(jnp.float32)
    x_cp = jnp.pad(x_cl, ((0, 0),) * 4 + ((0, cp - c),))
    # "ext" layout: H/W zero-padded and flattened -> (N, D, R, CP)
    x_ext = jnp.pad(x_cp, ((0, 0), (0, 0), (1, 1), (1, 1), (0, 0))).reshape(n, d, r, cp)

    # validity mask over ext rows (1 inside the original HxW plane, 0 on the pad ring)
    hp = jnp.arange(h + 2)[:, None]
    wp = jnp.arange(w + 2)[None, :]
    valid = (hp >= 1) & (hp <= h) & (wp >= 1) & (wp <= w)
    mask = valid.reshape(r, 1).astype(jnp.float32)

    count = float(n * d * h * w)

    def conv_input(act_ext):
        # zero-pad depth by 1 and add the row halo; slabs are cast to bf16 in-kernel
        return jnp.pad(act_ext, ((0, 0), (1, 1), (hb, hb), (0, 0)))

    def weight_taps(w_conv):
        # PyTorch (Cout, Cin, 3, 3, 3) -> (27, CP, CP) bf16, taps ordered (kd, kh, kw)
        co, ci = w_conv.shape[:2]
        wt = jnp.transpose(w_conv, (2, 3, 4, 1, 0)).reshape(27, ci, co)
        wt = jnp.pad(wt, ((0, 0), (0, cp - ci), (0, cp - co)))
        return wt.astype(jnp.bfloat16)

    def bn_affine(s, sq, gamma, beta):
        mean = s / count
        var = jnp.maximum(sq / count - mean * mean, 0.0)   # biased var (train mode)
        g = jnp.pad(gamma.astype(jnp.float32), (0, cp - gamma.shape[0])).reshape(1, cp)
        b = jnp.pad(beta.astype(jnp.float32), (0, cp - beta.shape[0])).reshape(1, cp)
        scale = g * jax.lax.rsqrt(var + _EPS)
        shift = b - mean * scale
        return scale, shift

    # ---- conv1 + bn1 + relu
    y1, s1, q1 = _conv3d_bn_stats(conv_input(x_ext), weight_taps(params["conv1_w"]),
                                  mask, width=w, halo=hb)
    sc1, sh1 = bn_affine(s1, q1, params["bn1_gamma"], params["bn1_beta"])
    a1 = _bn_act(y1, sc1, sh1, mask)        # pad ring zeroed -> valid conv2 input

    # ---- conv2 + bn2 + residual + relu
    y2, s2, q2 = _conv3d_bn_stats(conv_input(a1), weight_taps(params["conv2_w"]),
                                  mask, width=w, halo=hb)
    sc2, sh2 = bn_affine(s2, q2, params["bn2_gamma"], params["bn2_beta"])
    out_ext = _bn_act(y2, sc2, sh2, mask, residual=x_ext)

    out = out_ext.reshape(n, d, h + 2, w + 2, cp)[:, :, 1:h + 1, 1:w + 1, :c]
    return jnp.transpose(out, (0, 4, 1, 2, 3))     # back to NCDHW


# -------------------------- pure-JAX reference ------------------------------ #
def _reference_forward(x, params):
    def conv(v, wt):
        w_dhwio = jnp.transpose(wt, (2, 3, 4, 1, 0))
        return jax.lax.conv_general_dilated(
            v, w_dhwio, window_strides=(1, 1, 1),
            padding=((1, 1), (1, 1), (1, 1)),
            dimension_numbers=("NDHWC", "DHWIO", "NDHWC"))

    def bn(v, g, b):
        mean = jnp.mean(v, axis=(0, 1, 2, 3), keepdims=True)
        var = jnp.mean(jnp.square(v - mean), axis=(0, 1, 2, 3), keepdims=True)
        return (v - mean) * jax.lax.rsqrt(var + _EPS) * g + b

    xc = jnp.transpose(x, (0, 2, 3, 4, 1)).astype(jnp.float32)
    y = jax.nn.relu(bn(conv(xc, params["conv1_w"]),
                       params["bn1_gamma"], params["bn1_beta"]))
    y = bn(conv(y, params["conv2_w"]), params["bn2_gamma"], params["bn2_beta"]) + xc
    y = jax.nn.relu(y)
    return jnp.transpose(y, (0, 4, 1, 2, 3))


# --------------------------------- main ------------------------------------- #
if __name__ == "__main__":
    # Small shapes consistent with the module: N=2, in_planes=planes=8, D=H=W=8.
    N, C, D, H, W = 2, 8, 8, 8, 8
    planes = C

    key = jax.random.PRNGKey(0)
    kx, kw1, kw2, kg1, kb1, kg2, kb2 = jax.random.split(key, 7)

    x = jax.random.normal(kx, (N, C, D, H, W), jnp.float32)

    fan1 = C * 27
    fan2 = planes * 27
    params = {
        "conv1_w": jax.random.normal(kw1, (planes, C, 3, 3, 3), jnp.float32)
                   * (2.0 / fan1) ** 0.5,
        "conv2_w": jax.random.normal(kw2, (planes, planes, 3, 3, 3), jnp.float32)
                   * (2.0 / fan2) ** 0.5,
        "bn1_gamma": 1.0 + 0.1 * jax.random.normal(kg1, (planes,), jnp.float32),
        "bn1_beta": 0.1 * jax.random.normal(kb1, (planes,), jnp.float32),
        "bn2_gamma": 1.0 + 0.1 * jax.random.normal(kg2, (planes,), jnp.float32),
        "bn2_beta": 0.1 * jax.random.normal(kb2, (planes,), jnp.float32),
    }

    out = jax.jit(basic_block_forward)(x, params)
    out = jax.block_until_ready(out)

    assert out.shape == (N, planes, D, H, W), out.shape
    assert out.dtype == jnp.float32
    assert bool(jnp.all(jnp.isfinite(out)))
    assert bool(jnp.all(out >= 0.0))       # final ReLU

    # gross-error check vs pure-JAX reference (loose tolerance: bf16 MXU operands)
    ref = _reference_forward(x, params)
    max_err = float(jnp.max(jnp.abs(out - ref)))
    assert bool(jnp.allclose(out, ref, rtol=1e-1, atol=2e-1)), max_err

    print("KERNEL_OK")
</pallas_src>

<mosaic_0001>
module attributes {stable_mosaic.version = 11 : i64} {
  func.func @kernel(%arg0: i32, %arg1: i32, %arg2: memref<1x1x122x128xf32, #tpu.memory_space<vmem>>, %arg3: memref<1x1x122x128xf32, #tpu.memory_space<vmem>>, %arg4: memref<1x1x122x128xf32, #tpu.memory_space<vmem>>, %arg5: memref<27x128x128xbf16, #tpu.memory_space<vmem>>, %arg6: memref<100x1xf32, #tpu.memory_space<vmem>>, %arg7: memref<1x1x100x128xf32, #tpu.memory_space<vmem>>, %arg8: memref<1x128xf32, #tpu.memory_space<vmem>>, %arg9: memref<1x128xf32, #tpu.memory_space<vmem>>) attributes {dimension_semantics = [#tpu.dimension_semantics<arbitrary>, #tpu.dimension_semantics<arbitrary>], iteration_bounds = array<i64: 2, 8>, scalar_prefetch = 0 : i64, scratch_operands = 0 : i64, tpu.core_type = #tpu.core_type<tc>, window_params = [{transform_indices = @transform_0, window_bounds = array<i64: 1, 1, 122, 128>}, {transform_indices = @transform_1, window_bounds = array<i64: 1, 1, 122, 128>}, {transform_indices = @transform_2, window_bounds = array<i64: 1, 1, 122, 128>}, {pipeline_mode = #tpu.pipeline_mode<synchronous>, transform_indices = @transform_3, window_bounds = array<i64: 27, 128, 128>}, {pipeline_mode = #tpu.pipeline_mode<synchronous>, transform_indices = @transform_4, window_bounds = array<i64: 100, 1>}, {transform_indices = @transform_5, window_bounds = array<i64: 1, 1, 100, 128>}, {pipeline_mode = #tpu.pipeline_mode<synchronous>, transform_indices = @transform_6, window_bounds = array<i64: 1, 128>}, {pipeline_mode = #tpu.pipeline_mode<synchronous>, transform_indices = @transform_7, window_bounds = array<i64: 1, 128>}]} {
    %c0_i32 = arith.constant 0 : i32
    %0 = arith.cmpi eq, %arg0, %c0_i32 : i32
    %c0_i32_0 = arith.constant 0 : i32
    %1 = arith.cmpi eq, %arg1, %c0_i32_0 : i32
    %2 = arith.andi %0, %1 : i1
    %3 = arith.extui %2 : i1 to i32
    %c0_i32_1 = arith.constant 0 : i32
    %4 = arith.cmpi ne, %3, %c0_i32_1 : i32
    scf.if %4 {
      %cst_206 = arith.constant 0.000000e+00 : f32
      %210 = vector.broadcast %cst_206 : f32 to vector<1x128xf32>
      %c0_207 = arith.constant 0 : index
      %c0_208 = arith.constant 0 : index
      %211 = vector.load %arg8[%c0_207, %c0_208] : memref<1x128xf32, #tpu.memory_space<vmem>>, vector<1x128xf32>
      tpu.vector_store %arg8[%c0_207, %c0_208], %210 {strides = array<i32>} : memref<1x128xf32, #tpu.memory_space<vmem>>, vector<1x128xf32>,
      %cst_209 = arith.constant 0.000000e+00 : f32
      %212 = vector.broadcast %cst_209 : f32 to vector<1x128xf32>
      %c0_210 = arith.constant 0 : index
      %c0_211 = arith.constant 0 : index
      %213 = vector.load %arg9[%c0_210, %c0_211] : memref<1x128xf32, #tpu.memory_space<vmem>>, vector<1x128xf32>
      tpu.vector_store %arg9[%c0_210, %c0_211], %212 {strides = array<i32>} : memref<1x128xf32, #tpu.memory_space<vmem>>, vector<1x128xf32>,
    } else {
    }
    %c0 = arith.constant 0 : index
    %c0_2 = arith.constant 0 : index
    %c0_3 = arith.constant 0 : index
    %c0_4 = arith.constant 0 : index
    %5 = vector.load %arg2[%c0, %c0_2, %c0_3, %c0_4] : memref<1x1x122x128xf32, #tpu.memory_space<vmem>>, vector<1x1x100x128xf32>
    %6 = vector.shape_cast %5 : vector<1x1x100x128xf32> to vector<100x128xf32>
    %7 = arith.truncf %6 : vector<100x128xf32> to vector<100x128xbf16>
    %c0_5 = arith.constant 0 : index
    %c0_6 = arith.constant 0 : index
    %c0_7 = arith.constant 0 : index
    %8 = vector.load %arg5[%c0_5, %c0_6, %c0_7] : memref<27x128x128xbf16, #tpu.memory_space<vmem>>, vector<1x128x128xbf16>
    %9 = vector.shape_cast %8 : vector<1x128x128xbf16> to vector<128x128xbf16>
    %cst = arith.constant dense<0.000000e+00> : vector<100x128xf32>
    %10 = tpu.matmul %7, %9, %cst {dimension_numbers = #tpu.dot_dimension_numbers<[1], [0], [0], [1], [0, 0, 1, 1], [], []>} : vector<100x128xbf16>, vector<128x128xbf16>, vector<100x128xf32> -> vector<100x128xf32>
    %c0_8 = arith.constant 0 : index
    %c0_9 = arith.constant 0 : index
    %c1 = arith.constant 1 : index
    %c0_10 = arith.constant 0 : index
    %11 = vector.load %arg2[%c0_8, %c0_9, %c1, %c0_10] : memref<1x1x122x128xf32, #tpu.memory_space<vmem>>, vector<1x1x100x128xf32>
    %12 = vector.shape_cast %11 : vector<1x1x100x128xf32> to vector<100x128xf32>
    %13 = arith.truncf %12 : vector<100x128xf32> to vector<100x128xbf16>
    %c1_11 = arith.constant 1 : index
    %c0_12 = arith.constant 0 : index
    %c0_13 = arith.constant 0 : index
    %14 = vector.load %arg5[%c1_11, %c0_12, %c0_13] : memref<27x128x128xbf16, #tpu.memory_space<vmem>>, vector<1x128x128xbf16>
    %15 = vector.shape_cast %14 : vector<1x128x128xbf16> to vector<128x128xbf16>
    %cst_14 = arith.constant dense<0.000000e+00> : vector<100x128xf32>
    %16 = tpu.matmul %13, %15, %cst_14 {dimension_numbers = #tpu.dot_dimension_numbers<[1], [0], [0], [1], [0, 0, 1, 1], [], []>} : vector<100x128xbf16>, vector<128x128xbf16>, vector<100x128xf32> -> vector<100x128xf32>
    %17 = arith.addf %10, %16 : vector<100x128xf32>
    %c0_15 = arith.constant 0 : index
    %c0_16 = arith.constant 0 : index
    %c2 = arith.constant 2 : index
    %c0_17 = arith.constant 0 : index
    %18 = vector.load %arg2[%c0_15, %c0_16, %c2, %c0_17] : memref<1x1x122x128xf32, #tpu.memory_space<vmem>>, vector<1x1x100x128xf32>
    %19 = vector.shape_cast %18 : vector<1x1x100x128xf32> to vector<100x128xf32>
    %20 = arith.truncf %19 : vector<100x128xf32> to vector<100x128xbf16>
    %c2_18 = arith.constant 2 : index
    %c0_19 = arith.constant 0 : index
    %c0_20 = arith.constant 0 : index
    %21 = vector.load %arg5[%c2_18, %c0_19, %c0_20] : memref<27x128x128xbf16, #tpu.memory_space<vmem>>, vector<1x128x128xbf16>
    %22 = vector.shape_cast %21 : vector<1x128x128xbf16> to vector<128x128xbf16>
    %cst_21 = arith.constant dense<0.000000e+00> : vector<100x128xf32>
    %23 = tpu.matmul %20, %22, %cst_21 {dimension_numbers = #tpu.dot_dimension_numbers<[1], [0], [0], [1], [0, 0, 1, 1], [], []>} : vector<100x128xbf16>, vector<128x128xbf16>, vector<100x128xf32> -> vector<100x128xf32>
    %24 = arith.addf %17, %23 : vector<100x128xf32>
    %c0_22 = arith.constant 0 : index
    %c0_23 = arith.constant 0 : index
    %c10 = arith.constant 10 : index
    %c0_24 = arith.constant 0 : index
    %25 = vector.load %arg2[%c0_22, %c0_23, %c10, %c0_24] : memref<1x1x122x128xf32, #tpu.memory_space<vmem>>, vector<1x1x100x128xf32>
    %26 = vector.shape_cast %25 : vector<1x1x100x128xf32> to vector<100x128xf32>
    %27 = arith.truncf %26 : vector<100x128xf32> to vector<100x128xbf16>
    %c3 = arith.constant 3 : index
    %c0_25 = arith.constant 0 : index
    %c0_26 = arith.constant 0 : index
    %28 = vector.load %arg5[%c3, %c0_25, %c0_26] : memref<27x128x128xbf16, #tpu.memory_space<vmem>>, vector<1x128x128xbf16>
    %29 = vector.shape_cast %28 : vector<1x128x128xbf16> to vector<128x128xbf16>
    %cst_27 = arith.constant dense<0.000000e+00> : vector<100x128xf32>
    %30 = tpu.matmul %27, %29, %cst_27 {dimension_numbers = #tpu.dot_dimension_numbers<[1], [0], [0], [1], [0, 0, 1, 1], [], []>} : vector<100x128xbf16>, vector<128x128xbf16>, vector<100x128xf32> -> vector<100x128xf32>
    %31 = arith.addf %24, %30 : vector<100x128xf32>
    %c0_28 = arith.constant 0 : index
    %c0_29 = arith.constant 0 : index
    %c11 = arith.constant 11 : index
    %c0_30 = arith.constant 0 : index
    %32 = vector.load %arg2[%c0_28, %c0_29, %c11, %c0_30] : memref<1x1x122x128xf32, #tpu.memory_space<vmem>>, vector<1x1x100x128xf32>
    %33 = vector.shape_cast %32 : vector<1x1x100x128xf32> to vector<100x128xf32>
    %34 = arith.truncf %33 : vector<100x128xf32> to vector<100x128xbf16>
    %c4 = arith.constant 4 : index
    %c0_31 = arith.constant 0 : index
    %c0_32 = arith.constant 0 : index
    %35 = vector.load %arg5[%c4, %c0_31, %c0_32] : memref<27x128x128xbf16, #tpu.memory_space<vmem>>, vector<1x128x128xbf16>
    %36 = vector.shape_cast %35 : vector<1x128x128xbf16> to vector<128x128xbf16>
    %cst_33 = arith.constant dense<0.000000e+00> : vector<100x128xf32>
    %37 = tpu.matmul %34, %36, %cst_33 {dimension_numbers = #tpu.dot_dimension_numbers<[1], [0], [0], [1], [0, 0, 1, 1], [], []>} : vector<100x128xbf16>, vector<128x128xbf16>, vector<100x128xf32> -> vector<100x128xf32>
    %38 = arith.addf %31, %37 : vector<100x128xf32>
    %c0_34 = arith.constant 0 : index
    %c0_35 = arith.constant 0 : index
    %c12 = arith.constant 12 : index
    %c0_36 = arith.constant 0 : index
    %39 = vector.load %arg2[%c0_34, %c0_35, %c12, %c0_36] : memref<1x1x122x128xf32, #tpu.memory_space<vmem>>, vector<1x1x100x128xf32>
    %40 = vector.shape_cast %39 : vector<1x1x100x128xf32> to vector<100x128xf32>
    %41 = arith.truncf %40 : vector<100x128xf32> to vector<100x128xbf16>
    %c5 = arith.constant 5 : index
    %c0_37 = arith.constant 0 : index
    %c0_38 = arith.constant 0 : index
    %42 = vector.load %arg5[%c5, %c0_37, %c0_38] : memref<27x128x128xbf16, #tpu.memory_space<vmem>>, vector<1x128x128xbf16>
    %43 = vector.shape_cast %42 : vector<1x128x128xbf16> to vector<128x128xbf16>
    %cst_39 = arith.constant dense<0.000000e+00> : vector<100x128xf32>
    %44 = tpu.matmul %41, %43, %cst_39 {dimension_numbers = #tpu.dot_dimension_numbers<[1], [0], [0], [1], [0, 0, 1, 1], [], []>} : vector<100x128xbf16>, vector<128x128xbf16>, vector<100x128xf32> -> vector<100x128xf32>
    %45 = arith.addf %38, %44 : vector<100x128xf32>
    %c0_40 = arith.constant 0 : index
    %c0_41 = arith.constant 0 : index
    %c20 = arith.constant 20 : index
    %c0_42 = arith.constant 0 : index
    %46 = vector.load %arg2[%c0_40, %c0_41, %c20, %c0_42] : memref<1x1x122x128xf32, #tpu.memory_space<vmem>>, vector<1x1x100x128xf32>
    %47 = vector.shape_cast %46 : vector<1x1x100x128xf32> to vector<100x128xf32>
    %48 = arith.truncf %47 : vector<100x128xf32> to vector<100x128xbf16>
    %c6 = arith.constant 6 : index
    %c0_43 = arith.constant 0 : index
    %c0_44 = arith.constant 0 : index
    %49 = vector.load %arg5[%c6, %c0_43, %c0_44] : memref<27x128x128xbf16, #tpu.memory_space<vmem>>, vector<1x128x128xbf16>
    %50 = vector.shape_cast %49 : vector<1x128x128xbf16> to vector<128x128xbf16>
    %cst_45 = arith.constant dense<0.000000e+00> : vector<100x128xf32>
    %51 = tpu.matmul %48, %50, %cst_45 {dimension_numbers = #tpu.dot_dimension_numbers<[1], [0], [0], [1], [0, 0, 1, 1], [], []>} : vector<100x128xbf16>, vector<128x128xbf16>, vector<100x128xf32> -> vector<100x128xf32>
    %52 = arith.addf %45, %51 : vector<100x128xf32>
    %c0_46 = arith.constant 0 : index
    %c0_47 = arith.constant 0 : index
    %c21 = arith.constant 21 : index
    %c0_48 = arith.constant 0 : index
    %53 = vector.load %arg2[%c0_46, %c0_47, %c21, %c0_48] : memref<1x1x122x128xf32, #tpu.memory_space<vmem>>, vector<1x1x100x128xf32>
    %54 = vector.shape_cast %53 : vector<1x1x100x128xf32> to vector<100x128xf32>
    %55 = arith.truncf %54 : vector<100x128xf32> to vector<100x128xbf16>
    %c7 = arith.constant 7 : index
    %c0_49 = arith.constant 0 : index
    %c0_50 = arith.constant 0 : index
    %56 = vector.load %arg5[%c7, %c0_49, %c0_50] : memref<27x128x128xbf16, #tpu.memory_space<vmem>>, vector<1x128x128xbf16>
    %57 = vector.shape_cast %56 : vector<1x128x128xbf16> to vector<128x128xbf16>
    %cst_51 = arith.constant dense<0.000000e+00> : vector<100x128xf32>
    %58 = tpu.matmul %55, %57, %cst_51 {dimension_numbers = #tpu.dot_dimension_numbers<[1], [0], [0], [1], [0, 0, 1, 1], [], []>} : vector<100x128xbf16>, vector<128x128xbf16>, vector<100x128xf32> -> vector<100x128xf32>
    %59 = arith.addf %52, %58 : vector<100x128xf32>
    %c0_52 = arith.constant 0 : index
    %c0_53 = arith.constant 0 : index
    %c22 = arith.constant 22 : index
    %c0_54 = arith.constant 0 : index
    %60 = vector.load %arg2[%c0_52, %c0_53, %c22, %c0_54] : memref<1x1x122x128xf32, #tpu.memory_space<vmem>>, vector<1x1x100x128xf32>
    %61 = vector.shape_cast %60 : vector<1x1x100x128xf32> to vector<100x128xf32>
    %62 = arith.truncf %61 : vector<100x128xf32> to vector<100x128xbf16>
    %c8 = arith.constant 8 : index
    %c0_55 = arith.constant 0 : index
    %c0_56 = arith.constant 0 : index
    %63 = vector.load %arg5[%c8, %c0_55, %c0_56] : memref<27x128x128xbf16, #tpu.memory_space<vmem>>, vector<1x128x128xbf16>
    %64 = vector.shape_cast %63 : vector<1x128x128xbf16> to vector<128x128xbf16>
    %cst_57 = arith.constant dense<0.000000e+00> : vector<100x128xf32>
    %65 = tpu.matmul %62, %64, %cst_57 {dimension_numbers = #tpu.dot_dimension_numbers<[1], [0], [0], [1], [0, 0, 1, 1], [], []>} : vector<100x128xbf16>, vector<128x128xbf16>, vector<100x128xf32> -> vector<100x128xf32>
    %66 = arith.addf %59, %65 : vector<100x128xf32>
    %c0_58 = arith.constant 0 : index
    %c0_59 = arith.constant 0 : index
    %c0_60 = arith.constant 0 : index
    %c0_61 = arith.constant 0 : index
    %67 = vector.load %arg3[%c0_58, %c0_59, %c0_60, %c0_61] : memref<1x1x122x128xf32, #tpu.memory_space<vmem>>, vector<1x1x100x128xf32>
    %68 = vector.shape_cast %67 : vector<1x1x100x128xf32> to vector<100x128xf32>
    %69 = arith.truncf %68 : vector<100x128xf32> to vector<100x128xbf16>
    %c9 = arith.constant 9 : index
    %c0_62 = arith.constant 0 : index
    %c0_63 = arith.constant 0 : index
    %70 = vector.load %arg5[%c9, %c0_62, %c0_63] : memref<27x128x128xbf16, #tpu.memory_space<vmem>>, vector<1x128x128xbf16>
    %71 = vector.shape_cast %70 : vector<1x128x128xbf16> to vector<128x128xbf16>
    %cst_64 = arith.constant dense<0.000000e+00> : vector<100x128xf32>
    %72 = tpu.matmul %69, %71, %cst_64 {dimension_numbers = #tpu.dot_dimension_numbers<[1], [0], [0], [1], [0, 0, 1, 1], [], []>} : vector<100x128xbf16>, vector<128x128xbf16>, vector<100x128xf32> -> vector<100x128xf32>
    %73 = arith.addf %66, %72 : vector<100x128xf32>
    %c0_65 = arith.constant 0 : index
    %c0_66 = arith.constant 0 : index
    %c1_67 = arith.constant 1 : index
    %c0_68 = arith.constant 0 : index
    %74 = vector.load %arg3[%c0_65, %c0_66, %c1_67, %c0_68] : memref<1x1x122x128xf32, #tpu.memory_space<vmem>>, vector<1x1x100x128xf32>
    %75 = vector.shape_cast %74 : vector<1x1x100x128xf32> to vector<100x128xf32>
    %76 = arith.truncf %75 : vector<100x128xf32> to vector<100x128xbf16>
    %c10_69 = arith.constant 10 : index
    %c0_70 = arith.constant 0 : index
    %c0_71 = arith.constant 0 : index
    %77 = vector.load %arg5[%c10_69, %c0_70, %c0_71] : memref<27x128x128xbf16, #tpu.memory_space<vmem>>, vector<1x128x128xbf16>
    %78 = vector.shape_cast %77 : vector<1x128x128xbf16> to vector<128x128xbf16>
    %cst_72 = arith.constant dense<0.000000e+00> : vector<100x128xf32>
    %79 = tpu.matmul %76, %78, %cst_72 {dimension_numbers = #tpu.dot_dimension_numbers<[1], [0], [0], [1], [0, 0, 1, 1], [], []>} : vector<100x128xbf16>, vector<128x128xbf16>, vector<100x128xf32> -> vector<100x128xf32>
    %80 = arith.addf %73, %79 : vector<100x128xf32>
    %c0_73 = arith.constant 0 : index
    %c0_74 = arith.constant 0 : index
    %c2_75 = arith.constant 2 : index
    %c0_76 = arith.constant 0 : index
    %81 = vector.load %arg3[%c0_73, %c0_74, %c2_75, %c0_76] : memref<1x1x122x128xf32, #tpu.memory_space<vmem>>, vector<1x1x100x128xf32>
    %82 = vector.shape_cast %81 : vector<1x1x100x128xf32> to vector<100x128xf32>
    %83 = arith.truncf %82 : vector<100x128xf32> to vector<100x128xbf16>
    %c11_77 = arith.constant 11 : index
    %c0_78 = arith.constant 0 : index
    %c0_79 = arith.constant 0 : index
    %84 = vector.load %arg5[%c11_77, %c0_78, %c0_79] : memref<27x128x128xbf16, #tpu.memory_space<vmem>>, vector<1x128x128xbf16>
    %85 = vector.shape_cast %84 : vector<1x128x128xbf16> to vector<128x128xbf16>
    %cst_80 = arith.constant dense<0.000000e+00> : vector<100x128xf32>
    %86 = tpu.matmul %83, %85, %cst_80 {dimension_numbers = #tpu.dot_dimension_numbers<[1], [0], [0], [1], [0, 0, 1, 1], [], []>} : vector<100x128xbf16>, vector<128x128xbf16>, vector<100x128xf32> -> vector<100x128xf32>
    %87 = arith.addf %80, %86 : vector<100x128xf32>
    %c0_81 = arith.constant 0 : index
    %c0_82 = arith.constant 0 : index
    %c10_83 = arith.constant 10 : index
    %c0_84 = arith.constant 0 : index
    %88 = vector.load %arg3[%c0_81, %c0_82, %c10_83, %c0_84] : memref<1x1x122x128xf32, #tpu.memory_space<vmem>>, vector<1x1x100x128xf32>
    %89 = vector.shape_cast %88 : vector<1x1x100x128xf32> to vector<100x128xf32>
    %90 = arith.truncf %89 : vector<100x128xf32> to vector<100x128xbf16>
    %c12_85 = arith.constant 12 : index
    %c0_86 = arith.constant 0 : index
    %c0_87 = arith.constant 0 : index
    %91 = vector.load %arg5[%c12_85, %c0_86, %c0_87] : memref<27x128x128xbf16, #tpu.memory_space<vmem>>, vector<1x128x128xbf16>
    %92 = vector.shape_cast %91 : vector<1x128x128xbf16> to vector<128x128xbf16>
    %cst_88 = arith.constant dense<0.000000e+00> : vector<100x128xf32>
    %93 = tpu.matmul %90, %92, %cst_88 {dimension_numbers = #tpu.dot_dimension_numbers<[1], [0], [0], [1], [0, 0, 1, 1], [], []>} : vector<100x128xbf16>, vector<128x128xbf16>, vector<100x128xf32> -> vector<100x128xf32>
    %94 = arith.addf %87, %93 : vector<100x128xf32>
    %c0_89 = arith.constant 0 : index
    %c0_90 = arith.constant 0 : index
    %c11_91 = arith.constant 11 : index
    %c0_92 = arith.constant 0 : index
    %95 = vector.load %arg3[%c0_89, %c0_90, %c11_91, %c0_92] : memref<1x1x122x128xf32, #tpu.memory_space<vmem>>, vector<1x1x100x128xf32>
    %96 = vector.shape_cast %95 : vector<1x1x100x128xf32> to vector<100x128xf32>
    %97 = arith.truncf %96 : vector<100x128xf32> to vector<100x128xbf16>
    %c13 = arith.constant 13 : index
    %c0_93 = arith.constant 0 : index
    %c0_94 = arith.constant 0 : index
    %98 = vector.load %arg5[%c13, %c0_93, %c0_94] : memref<27x128x128xbf16, #tpu.memory_space<vmem>>, vector<1x128x128xbf16>
    %99 = vector.shape_cast %98 : vector<1x128x128xbf16> to vector<128x128xbf16>
    %cst_95 = arith.constant dense<0.000000e+00> : vector<100x128xf32>
    %100 = tpu.matmul %97, %99, %cst_95 {dimension_numbers = #tpu.dot_dimension_numbers<[1], [0], [0], [1], [0, 0, 1, 1], [], []>} : vector<100x128xbf16>, vector<128x128xbf16>, vector<100x128xf32> -> vector<100x128xf32>
    %101 = arith.addf %94, %100 : vector<100x128xf32>
    %c0_96 = arith.constant 0 : index
    %c0_97 = arith.constant 0 : index
    %c12_98 = arith.constant 12 : index
    %c0_99 = arith.constant 0 : index
    %102 = vector.load %arg3[%c0_96, %c0_97, %c12_98, %c0_99] : memref<1x1x122x128xf32, #tpu.memory_space<vmem>>, vector<1x1x100x128xf32>
    %103 = vector.shape_cast %102 : vector<1x1x100x128xf32> to vector<100x128xf32>
    %104 = arith.truncf %103 : vector<100x128xf32> to vector<100x128xbf16>
    %c14 = arith.constant 14 : index
    %c0_100 = arith.constant 0 : index
    %c0_101 = arith.constant 0 : index
    %105 = vector.load %arg5[%c14, %c0_100, %c0_101] : memref<27x128x128xbf16, #tpu.memory_space<vmem>>, vector<1x128x128xbf16>
    %106 = vector.shape_cast %105 : vector<1x128x128xbf16> to vector<128x128xbf16>
    %cst_102 = arith.constant dense<0.000000e+00> : vector<100x128xf32>
    %107 = tpu.matmul %104, %106, %cst_102 {dimension_numbers = #tpu.dot_dimension_numbers<[1], [0], [0], [1], [0, 0, 1, 1], [], []>} : vector<100x128xbf16>, vector<128x128xbf16>, vector<100x128xf32> -> vector<100x128xf32>
    %108 = arith.addf %101, %107 : vector<100x128xf32>
    %c0_103 = arith.constant 0 : index
    %c0_104 = arith.constant 0 : index
    %c20_105 = arith.constant 20 : index
    %c0_106 = arith.constant 0 : index
    %109 = vector.load %arg3[%c0_103, %c0_104, %c20_105, %c0_106] : memref<1x1x122x128xf32, #tpu.memory_space<vmem>>, vector<1x1x100x128xf32>
    %110 = vector.shape_cast %109 : vector<1x1x100x128xf32> to vector<100x128xf32>
    %111 = arith.truncf %110 : vector<100x128xf32> to vector<100x128xbf16>
    %c15 = arith.constant 15 : index
    %c0_107 = arith.constant 0 : index
    %c0_108 = arith.constant 0 : index
    %112 = vector.load %arg5[%c15, %c0_107, %c0_108] : memref<27x128x128xbf16, #tpu.memory_space<vmem>>, vector<1x128x128xbf16>
    %113 = vector.shape_cast %112 : vector<1x128x128xbf16> to vector<128x128xbf16>
    %cst_109 = arith.constant dense<0.000000e+00> : vector<100x128xf32>
    %114 = tpu.matmul %111, %113, %cst_109 {dimension_numbers = #tpu.dot_dimension_numbers<[1], [0], [0], [1], [0, 0, 1, 1], [], []>} : vector<100x128xbf16>, vector<128x128xbf16>, vector<100x128xf32> -> vector<100x128xf32>
    %115 = arith.addf %108, %114 : vector<100x128xf32>
    %c0_110 = arith.constant 0 : index
    %c0_111 = arith.constant 0 : index
    %c21_112 = arith.constant 21 : index
    %c0_113 = arith.constant 0 : index
    %116 = vector.load %arg3[%c0_110, %c0_111, %c21_112, %c0_113] : memref<1x1x122x128xf32, #tpu.memory_space<vmem>>, vector<1x1x100x128xf32>
    %117 = vector.shape_cast %116 : vector<1x1x100x128xf32> to vector<100x128xf32>
    %118 = arith.truncf %117 : vector<100x128xf32> to vector<100x128xbf16>
    %c16 = arith.constant 16 : index
    %c0_114 = arith.constant 0 : index
    %c0_115 = arith.constant 0 : index
    %119 = vector.load %arg5[%c16, %c0_114, %c0_115] : memref<27x128x128xbf16, #tpu.memory_space<vmem>>, vector<1x128x128xbf16>
    %120 = vector.shape_cast %119 : vector<1x128x128xbf16> to vector<128x128xbf16>
    %cst_116 = arith.constant dense<0.000000e+00> : vector<100x128xf32>
    %121 = tpu.matmul %118, %120, %cst_116 {dimension_numbers = #tpu.dot_dimension_numbers<[1], [0], [0], [1], [0, 0, 1, 1], [], []>} : vector<100x128xbf16>, vector<128x128xbf16>, vector<100x128xf32> -> vector<100x128xf32>
    %122 = arith.addf %115, %121 : vector<100x128xf32>
    %c0_117 = arith.constant 0 : index
    %c0_118 = arith.constant 0 : index
    %c22_119 = arith.constant 22 : index
    %c0_120 = arith.constant 0 : index
    %123 = vector.load %arg3[%c0_117, %c0_118, %c22_119, %c0_120] : memref<1x1x122x128xf32, #tpu.memory_space<vmem>>, vector<1x1x100x128xf32>
    %124 = vector.shape_cast %123 : vector<1x1x100x128xf32> to vector<100x128xf32>
    %125 = arith.truncf %124 : vector<100x128xf32> to vector<100x128xbf16>
    %c17 = arith.constant 17 : index
    %c0_121 = arith.constant 0 : index
    %c0_122 = arith.constant 0 : index
    %126 = vector.load %arg5[%c17, %c0_121, %c0_122] : memref<27x128x128xbf16, #tpu.memory_space<vmem>>, vector<1x128x128xbf16>
    %127 = vector.shape_cast %126 : vector<1x128x128xbf16> to vector<128x128xbf16>
    %cst_123 = arith.constant dense<0.000000e+00> : vector<100x128xf32>
    %128 = tpu.matmul %125, %127, %cst_123 {dimension_numbers = #tpu.dot_dimension_numbers<[1], [0], [0], [1], [0, 0, 1, 1], [], []>} : vector<100x128xbf16>, vector<128x128xbf16>, vector<100x128xf32> -> vector<100x128xf32>
    %129 = arith.addf %122, %128 : vector<100x128xf32>
    %c0_124 = arith.constant 0 : index
    %c0_125 = arith.constant 0 : index
    %c0_126 = arith.constant 0 : index
    %c0_127 = arith.constant 0 : index
    %130 = vector.load %arg4[%c0_124, %c0_125, %c0_126, %c0_127] : memref<1x1x122x128xf32, #tpu.memory_space<vmem>>, vector<1x1x100x128xf32>
    %131 = vector.shape_cast %130 : vector<1x1x100x128xf32> to vector<100x128xf32>
    %132 = arith.truncf %131 : vector<100x128xf32> to vector<100x128xbf16>
    %c18 = arith.constant 18 : index
    %c0_128 = arith.constant 0 : index
    %c0_129 = arith.constant 0 : index
    %133 = vector.load %arg5[%c18, %c0_128, %c0_129] : memref<27x128x128xbf16, #tpu.memory_space<vmem>>, vector<1x128x128xbf16>
    %134 = vector.shape_cast %133 : vector<1x128x128xbf16> to vector<128x128xbf16>
    %cst_130 = arith.constant dense<0.000000e+00> : vector<100x128xf32>
    %135 = tpu.matmul %132, %134, %cst_130 {dimension_numbers = #tpu.dot_dimension_numbers<[1], [0], [0], [1], [0, 0, 1, 1], [], []>} : vector<100x128xbf16>, vector<128x128xbf16>, vector<100x128xf32> -> vector<100x128xf32>
    %136 = arith.addf %129, %135 : vector<100x128xf32>
    %c0_131 = arith.constant 0 : index
    %c0_132 = arith.constant 0 : index
    %c1_133 = arith.constant 1 : index
    %c0_134 = arith.constant 0 : index
    %137 = vector.load %arg4[%c0_131, %c0_132, %c1_133, %c0_134] : memref<1x1x122x128xf32, #tpu.memory_space<vmem>>, vector<1x1x100x128xf32>
    %138 = vector.shape_cast %137 : vector<1x1x100x128xf32> to vector<100x128xf32>
    %139 = arith.truncf %138 : vector<100x128xf32> to vector<100x128xbf16>
    %c19 = arith.constant 19 : index
    %c0_135 = arith.constant 0 : index
    %c0_136 = arith.constant 0 : index
    %140 = vector.load %arg5[%c19, %c0_135, %c0_136] : memref<27x128x128xbf16, #tpu.memory_space<vmem>>, vector<1x128x128xbf16>
    %141 = vector.shape_cast %140 : vector<1x128x128xbf16> to vector<128x128xbf16>
    %cst_137 = arith.constant dense<0.000000e+00> : vector<100x128xf32>
    %142 = tpu.matmul %139, %141, %cst_137 {dimension_numbers = #tpu.dot_dimension_numbers<[1], [0], [0], [1], [0, 0, 1, 1], [], []>} : vector<100x128xbf16>, vector<128x128xbf16>, vector<100x128xf32> -> vector<100x128xf32>
    %143 = arith.addf %136, %142 : vector<100x128xf32>
    %c0_138 = arith.constant 0 : index
    %c0_139 = arith.constant 0 : index
    %c2_140 = arith.constant 2 : index
    %c0_141 = arith.constant 0 : index
    %144 = vector.load %arg4[%c0_138, %c0_139, %c2_140, %c0_141] : memref<1x1x122x128xf32, #tpu.memory_space<vmem>>, vector<1x1x100x128xf32>
    %145 = vector.shape_cast %144 : vector<1x1x100x128xf32> to vector<100x128xf32>
    %146 = arith.truncf %145 : vector<100x128xf32> to vector<100x128xbf16>
    %c20_142 = arith.constant 20 : index
    %c0_143 = arith.constant 0 : index
    %c0_144 = arith.constant 0 : index
    %147 = vector.load %arg5[%c20_142, %c0_143, %c0_144] : memref<27x128x128xbf16, #tpu.memory_space<vmem>>, vector<1x128x128xbf16>
    %148 = vector.shape_cast %147 : vector<1x128x128xbf16> to vector<128x128xbf16>
    %cst_145 = arith.constant dense<0.000000e+00> : vector<100x128xf32>
    %149 = tpu.matmul %146, %148, %cst_145 {dimension_numbers = #tpu.dot_dimension_numbers<[1], [0], [0], [1], [0, 0, 1, 1], [], []>} : vector<100x128xbf16>, vector<128x128xbf16>, vector<100x128xf32> -> vector<100x128xf32>
    %150 = arith.addf %143, %149 : vector<100x128xf32>
    %c0_146 = arith.constant 0 : index
    %c0_147 = arith.constant 0 : index
    %c10_148 = arith.constant 10 : index
    %c0_149 = arith.constant 0 : index
    %151 = vector.load %arg4[%c0_146, %c0_147, %c10_148, %c0_149] : memref<1x1x122x128xf32, #tpu.memory_space<vmem>>, vector<1x1x100x128xf32>
    %152 = vector.shape_cast %151 : vector<1x1x100x128xf32> to vector<100x128xf32>
    %153 = arith.truncf %152 : vector<100x128xf32> to vector<100x128xbf16>
    %c21_150 = arith.constant 21 : index
    %c0_151 = arith.constant 0 : index
    %c0_152 = arith.constant 0 : index
    %154 = vector.load %arg5[%c21_150, %c0_151, %c0_152] : memref<27x128x128xbf16, #tpu.memory_space<vmem>>, vector<1x128x128xbf16>
    %155 = vector.shape_cast %154 : vector<1x128x128xbf16> to vector<128x128xbf16>
    %cst_153 = arith.constant dense<0.000000e+00> : vector<100x128xf32>
    %156 = tpu.matmul %153, %155, %cst_153 {dimension_numbers = #tpu.dot_dimension_numbers<[1], [0], [0], [1], [0, 0, 1, 1], [], []>} : vector<100x128xbf16>, vector<128x128xbf16>, vector<100x128xf32> -> vector<100x128xf32>
    %157 = arith.addf %150, %156 : vector<100x128xf32>
    %c0_154 = arith.constant 0 : index
    %c0_155 = arith.constant 0 : index
    %c11_156 = arith.constant 11 : index
    %c0_157 = arith.constant 0 : index
    %158 = vector.load %arg4[%c0_154, %c0_155, %c11_156, %c0_157] : memref<1x1x122x128xf32, #tpu.memory_space<vmem>>, vector<1x1x100x128xf32>
    %159 = vector.shape_cast %158 : vector<1x1x100x128xf32> to vector<100x128xf32>
    %160 = arith.truncf %159 : vector<100x128xf32> to vector<100x128xbf16>
    %c22_158 = arith.constant 22 : index
    %c0_159 = arith.constant 0 : index
    %c0_160 = arith.constant 0 : index
    %161 = vector.load %arg5[%c22_158, %c0_159, %c0_160] : memref<27x128x128xbf16, #tpu.memory_space<vmem>>, vector<1x128x128xbf16>
    %162 = vector.shape_cast %161 : vector<1x128x128xbf16> to vector<128x128xbf16>
    %cst_161 = arith.constant dense<0.000000e+00> : vector<100x128xf32>
    %163 = tpu.matmul %160, %162, %cst_161 {dimension_numbers = #tpu.dot_dimension_numbers<[1], [0], [0], [1], [0, 0, 1, 1], [], []>} : vector<100x128xbf16>, vector<128x128xbf16>, vector<100x128xf32> -> vector<100x128xf32>
    %164 = arith.addf %157, %163 : vector<100x128xf32>
    %c0_162 = arith.constant 0 : index
    %c0_163 = arith.constant 0 : index
    %c12_164 = arith.constant 12 : index
    %c0_165 = arith.constant 0 : index
    %165 = vector.load %arg4[%c0_162, %c0_163, %c12_164, %c0_165] : memref<1x1x122x128xf32, #tpu.memory_space<vmem>>, vector<1x1x100x128xf32>
    %166 = vector.shape_cast %165 : vector<1x1x100x128xf32> to vector<100x128xf32>
    %167 = arith.truncf %166 : vector<100x128xf32> to vector<100x128xbf16>
    %c23 = arith.constant 23 : index
    %c0_166 = arith.constant 0 : index
    %c0_167 = arith.constant 0 : index
    %168 = vector.load %arg5[%c23, %c0_166, %c0_167] : memref<27x128x128xbf16, #tpu.memory_space<vmem>>, vector<1x128x128xbf16>
    %169 = vector.shape_cast %168 : vector<1x128x128xbf16> to vector<128x128xbf16>
    %cst_168 = arith.constant dense<0.000000e+00> : vector<100x128xf32>
    %170 = tpu.matmul %167, %169, %cst_168 {dimension_numbers = #tpu.dot_dimension_numbers<[1], [0], [0], [1], [0, 0, 1, 1], [], []>} : vector<100x128xbf16>, vector<128x128xbf16>, vector<100x128xf32> -> vector<100x128xf32>
    %171 = arith.addf %164, %170 : vector<100x128xf32>
    %c0_169 = arith.constant 0 : index
    %c0_170 = arith.constant 0 : index
    %c20_171 = arith.constant 20 : index
    %c0_172 = arith.constant 0 : index
    %172 = vector.load %arg4[%c0_169, %c0_170, %c20_171, %c0_172] : memref<1x1x122x128xf32, #tpu.memory_space<vmem>>, vector<1x1x100x128xf32>
    %173 = vector.shape_cast %172 : vector<1x1x100x128xf32> to vector<100x128xf32>
    %174 = arith.truncf %173 : vector<100x128xf32> to vector<100x128xbf16>
    %c24 = arith.constant 24 : index
    %c0_173 = arith.constant 0 : index
    %c0_174 = arith.constant 0 : index
    %175 = vector.load %arg5[%c24, %c0_173, %c0_174] : memref<27x128x128xbf16, #tpu.memory_space<vmem>>, vector<1x128x128xbf16>
    %176 = vector.shape_cast %175 : vector<1x128x128xbf16> to vector<128x128xbf16>
    %cst_175 = arith.constant dense<0.000000e+00> : vector<100x128xf32>
    %177 = tpu.matmul %174, %176, %cst_175 {dimension_numbers = #tpu.dot_dimension_numbers<[1], [0], [0], [1], [0, 0, 1, 1], [], []>} : vector<100x128xbf16>, vector<128x128xbf16>, vector<100x128xf32> -> vector<100x128xf32>
    %178 = arith.addf %171, %177 : vector<100x128xf32>
    %c0_176 = arith.constant 0 : index
    %c0_177 = arith.constant 0 : index
    %c21_178 = arith.constant 21 : index
    %c0_179 = arith.constant 0 : index
    %179 = vector.load %arg4[%c0_176, %c0_177, %c21_178, %c0_179] : memref<1x1x122x128xf32, #tpu.memory_space<vmem>>, vector<1x1x100x128xf32>
    %180 = vector.shape_cast %179 : vector<1x1x100x128xf32> to vector<100x128xf32>
    %181 = arith.truncf %180 : vector<100x128xf32> to vector<100x128xbf16>
    %c25 = arith.constant 25 : index
    %c0_180 = arith.constant 0 : index
    %c0_181 = arith.constant 0 : index
    %182 = vector.load %arg5[%c25, %c0_180, %c0_181] : memref<27x128x128xbf16, #tpu.memory_space<vmem>>, vector<1x128x128xbf16>
    %183 = vector.shape_cast %182 : vector<1x128x128xbf16> to vector<128x128xbf16>
    %cst_182 = arith.constant dense<0.000000e+00> : vector<100x128xf32>
    %184 = tpu.matmul %181, %183, %cst_182 {dimension_numbers = #tpu.dot_dimension_numbers<[1], [0], [0], [1], [0, 0, 1, 1], [], []>} : vector<100x128xbf16>, vector<128x128xbf16>, vector<100x128xf32> -> vector<100x128xf32>
    %185 = arith.addf %178, %184 : vector<100x128xf32>
    %c0_183 = arith.constant 0 : index
    %c0_184 = arith.constant 0 : index
    %c22_185 = arith.constant 22 : index
    %c0_186 = arith.constant 0 : index
    %186 = vector.load %arg4[%c0_183, %c0_184, %c22_185, %c0_186] : memref<1x1x122x128xf32, #tpu.memory_space<vmem>>, vector<1x1x100x128xf32>
    %187 = vector.shape_cast %186 : vector<1x1x100x128xf32> to vector<100x128xf32>
    %188 = arith.truncf %187 : vector<100x128xf32> to vector<100x128xbf16>
    %c26 = arith.constant 26 : index
    %c0_187 = arith.constant 0 : index
    %c0_188 = arith.constant 0 : index
    %189 = vector.load %arg5[%c26, %c0_187, %c0_188] : memref<27x128x128xbf16, #tpu.memory_space<vmem>>, vector<1x128x128xbf16>
    %190 = vector.shape_cast %189 : vector<1x128x128xbf16> to vector<128x128xbf16>
    %cst_189 = arith.constant dense<0.000000e+00> : vector<100x128xf32>
    %191 = tpu.matmul %188, %190, %cst_189 {dimension_numbers = #tpu.dot_dimension_numbers<[1], [0], [0], [1], [0, 0, 1, 1], [], []>} : vector<100x128xbf16>, vector<128x128xbf16>, vector<100x128xf32> -> vector<100x128xf32>
    %192 = arith.addf %185, %191 : vector<100x128xf32>
    %c0_190 = arith.constant 0 : index
    %c0_191 = arith.constant 0 : index
    %c0_192 = arith.constant 0 : index
    %c0_193 = arith.constant 0 : index
    %193 = vector.load %arg7[%c0_190, %c0_191, %c0_192, %c0_193] : memref<1x1x100x128xf32, #tpu.memory_space<vmem>>, vector<1x1x100x128xf32>
    %194 = vector.shape_cast %193 : vector<1x1x100x128xf32> to vector<100x128xf32>
    %195 = vector.shape_cast %192 : vector<100x128xf32> to vector<1x1x100x128xf32>
    tpu.vector_store %arg7[%c0_190, %c0_191, %c0_192, %c0_193], %195 {strides = array<i32>} : memref<1x1x100x128xf32, #tpu.memory_space<vmem>>, vector<1x1x100x128xf32>,
    %c0_194 = arith.constant 0 : index
    %c0_195 = arith.constant 0 : index
    %196 = vector.load %arg6[%c0_194, %c0_195] : memref<100x1xf32, #tpu.memory_space<vmem>>, vector<100x1xf32>
    %197 = vector.broadcast %196 : vector<100x1xf32> to vector<100x128xf32>
    %198 = arith.mulf %192, %197 : vector<100x128xf32>
    %c0_196 = arith.constant 0 : index
    %c0_197 = arith.constant 0 : index
    %199 = vector.load %arg8[%c0_196, %c0_197] : memref<1x128xf32, #tpu.memory_space<vmem>>, vector<1x128xf32>
    %cst_198 = arith.constant dense<0.000000e+00> : vector<128xf32>
    %200 = vector.multi_reduction <add>, %198, %cst_198 [0] : vector<100x128xf32> to vector<128xf32>
    %201 = vector.shape_cast %200 : vector<128xf32> to vector<1x128xf32>
    %202 = arith.addf %199, %201 : vector<1x128xf32>
    %c0_199 = arith.constant 0 : index
    %c0_200 = arith.constant 0 : index
    %203 = vector.load %arg8[%c0_199, %c0_200] : memref<1x128xf32, #tpu.memory_space<vmem>>, vector<1x128xf32>
    tpu.vector_store %arg8[%c0_199, %c0_200], %202 {strides = array<i32>} : memref<1x128xf32, #tpu.memory_space<vmem>>, vector<1x128xf32>,
    %c0_201 = arith.constant 0 : index
    %c0_202 = arith.constant 0 : index
    %204 = vector.load %arg9[%c0_201, %c0_202] : memref<1x128xf32, #tpu.memory_space<vmem>>, vector<1x128xf32>
    %205 = arith.mulf %198, %192 : vector<100x128xf32>
    %cst_203 = arith.constant dense<0.000000e+00> : vector<128xf32>
    %206 = vector.multi_reduction <add>, %205, %cst_203 [0] : vector<100x128xf32> to vector<128xf32>
    %207 = vector.shape_cast %206 : vector<128xf32> to vector<1x128xf32>
    %208 = arith.addf %204, %207 : vector<1x128xf32>
    %c0_204 = arith.constant 0 : index
    %c0_205 = arith.constant 0 : index
    %209 = vector.load %arg9[%c0_204, %c0_205] : memref<1x128xf32, #tpu.memory_space<vmem>>, vector<1x128xf32>
    tpu.vector_store %arg9[%c0_204, %c0_205], %208 {strides = array<i32>} : memref<1x128xf32, #tpu.memory_space<vmem>>, vector<1x128xf32>,
    return
  }
  func.func @transform_0(%arg0: i32, %arg1: i32) -> (i32, i32, i32, i32) {
    %c0_i32 = arith.constant 0 : i32
    %0 = arith.addi %arg1, %c0_i32 : i32
    %c0_i32_0 = arith.constant 0 : i32
    %c0_i32_1 = arith.constant 0 : i32
    %c0_i32_2 = arith.constant 0 : i32
    return %arg0, %0, %c0_i32_0, %c0_i32_1 : i32, i32, i32, i32
  }
  func.func @transform_1(%arg0: i32, %arg1: i32) -> (i32, i32, i32, i32) {
    %c1_i32 = arith.constant 1 : i32
    %0 = arith.addi %arg1, %c1_i32 : i32
    %c0_i32 = arith.constant 0 : i32
    %c0_i32_0 = arith.constant 0 : i32
    %c0_i32_1 = arith.constant 0 : i32
    return %arg0, %0, %c0_i32, %c0_i32_0 : i32, i32, i32, i32
  }
  func.func @transform_2(%arg0: i32, %arg1: i32) -> (i32, i32, i32, i32) {
    %c2_i32 = arith.constant 2 : i32
    %0 = arith.addi %arg1, %c2_i32 : i32
    %c0_i32 = arith.constant 0 : i32
    %c0_i32_0 = arith.constant 0 : i32
    %c0_i32_1 = arith.constant 0 : i32
    return %arg0, %0, %c0_i32, %c0_i32_0 : i32, i32, i32, i32
  }
  func.func @transform_3(%arg0: i32, %arg1: i32) -> (i32, i32, i32) {
    %c0_i32 = arith.constant 0 : i32
    %c0_i32_0 = arith.constant 0 : i32
    %c0_i32_1 = arith.constant 0 : i32
    %c0_i32_2 = arith.constant 0 : i32
    return %c0_i32, %c0_i32_0, %c0_i32_1 : i32, i32, i32
  }
  func.func @transform_4(%arg0: i32, %arg1: i32) -> (i32, i32) {
    %c0_i32 = arith.constant 0 : i32
    %c0_i32_0 = arith.constant 0 : i32
    %c0_i32_1 = arith.constant 0 : i32
    return %c0_i32, %c0_i32_0 : i32, i32
  }
  func.func @transform_5(%arg0: i32, %arg1: i32) -> (i32, i32, i32, i32) {
    %c0_i32 = arith.constant 0 : i32
    %c0_i32_0 = arith.constant 0 : i32
    %c0_i32_1 = arith.constant 0 : i32
    return %arg0, %arg1, %c0_i32, %c0_i32_0 : i32, i32, i32, i32
  }
  func.func @transform_6(%arg0: i32, %arg1: i32) -> (i32, i32) {
    %c0_i32 = arith.constant 0 : i32
    %c0_i32_0 = arith.constant 0 : i32
    %c0_i32_1 = arith.constant 0 : i32
    return %c0_i32, %c0_i32_0 : i32, i32
  }
  func.func @transform_7(%arg0: i32, %arg1: i32) -> (i32, i32) {
    %c0_i32 = arith.constant 0 : i32
    %c0_i32_0 = arith.constant 0 : i32
    %c0_i32_1 = arith.constant 0 : i32
    return %c0_i32, %c0_i32_0 : i32, i32
  }
}

module attributes {stable_mosaic.version = 11 : i64} {
  func.func @_bn_act_kernel(%arg0: i32, %arg1: i32, %arg2: memref<1x1x100x128xf32, #tpu.memory_space<vmem>>, %arg3: memref<1x128xf32, #tpu.memory_space<vmem>>, %arg4: memref<1x128xf32, #tpu.memory_space<vmem>>, %arg5: memref<100x1xf32, #tpu.memory_space<vmem>>, %arg6: memref<1x1x100x128xf32, #tpu.memory_space<vmem>>) attributes {dimension_semantics = [#tpu.dimension_semantics<parallel>, #tpu.dimension_semantics<parallel>], iteration_bounds = array<i64: 2, 8>, scalar_prefetch = 0 : i64, scratch_operands = 0 : i64, tpu.core_type = #tpu.core_type<tc>, window_params = [{transform_indices = @transform_0, window_bounds = array<i64: 1, 1, 100, 128>}, {pipeline_mode = #tpu.pipeline_mode<synchronous>, transform_indices = @transform_1, window_bounds = array<i64: 1, 128>}, {pipeline_mode = #tpu.pipeline_mode<synchronous>, transform_indices = @transform_2, window_bounds = array<i64: 1, 128>}, {pipeline_mode = #tpu.pipeline_mode<synchronous>, transform_indices = @transform_3, window_bounds = array<i64: 100, 1>}, {transform_indices = @transform_4, window_bounds = array<i64: 1, 1, 100, 128>}]} {
    %c0 = arith.constant 0 : index
    %c0_0 = arith.constant 0 : index
    %c0_1 = arith.constant 0 : index
    %c0_2 = arith.constant 0 : index
    %0 = vector.load %arg2[%c0, %c0_0, %c0_1, %c0_2] : memref<1x1x100x128xf32, #tpu.memory_space<vmem>>, vector<1x1x100x128xf32>
    %1 = vector.shape_cast %0 : vector<1x1x100x128xf32> to vector<100x128xf32>
    %c0_3 = arith.constant 0 : index
    %c0_4 = arith.constant 0 : index
    %2 = vector.load %arg3[%c0_3, %c0_4] : memref<1x128xf32, #tpu.memory_space<vmem>>, vector<1x128xf32>
    %3 = vector.broadcast %2 : vector<1x128xf32> to vector<100x128xf32>
    %4 = arith.mulf %1, %3 : vector<100x128xf32>
    %c0_5 = arith.constant 0 : index
    %c0_6 = arith.constant 0 : index
    %5 = vector.load %arg4[%c0_5, %c0_6] : memref<1x128xf32, #tpu.memory_space<vmem>>, vector<1x128xf32>
    %6 = vector.broadcast %5 : vector<1x128xf32> to vector<100x128xf32>
    %7 = arith.addf %4, %6 : vector<100x128xf32>
    %cst = arith.constant 0.000000e+00 : f32
    %8 = vector.broadcast %cst : f32 to vector<100x128xf32>
    %9 = arith.maximumf %7, %8 : vector<100x128xf32>
    %c0_7 = arith.constant 0 : index
    %c0_8 = arith.constant 0 : index
    %10 = vector.load %arg5[%c0_7, %c0_8] : memref<100x1xf32, #tpu.memory_space<vmem>>, vector<100x1xf32>
    %11 = vector.broadcast %10 : vector<100x1xf32> to vector<100x128xf32>
    %12 = arith.mulf %9, %11 : vector<100x128xf32>
    %c0_9 = arith.constant 0 : index
    %c0_10 = arith.constant 0 : index
    %c0_11 = arith.constant 0 : index
    %c0_12 = arith.constant 0 : index
    %13 = vector.load %arg6[%c0_9, %c0_10, %c0_11, %c0_12] : memref<1x1x100x128xf32, #tpu.memory_space<vmem>>, vector<1x1x100x128xf32>
    %14 = vector.shape_cast %13 : vector<1x1x100x128xf32> to vector<100x128xf32>
    %15 = vector.shape_cast %12 : vector<100x128xf32> to vector<1x1x100x128xf32>
    tpu.vector_store %arg6[%c0_9, %c0_10, %c0_11, %c0_12], %15 {strides = array<i32>} : memref<1x1x100x128xf32, #tpu.memory_space<vmem>>, vector<1x1x100x128xf32>,
    return
  }
  func.func @transform_0(%arg0: i32, %arg1: i32) -> (i32, i32, i32, i32) {
    %c0_i32 = arith.constant 0 : i32
    %c0_i32_0 = arith.constant 0 : i32
    %c0_i32_1 = arith.constant 0 : i32
    return %arg0, %arg1, %c0_i32, %c0_i32_0 : i32, i32, i32, i32
  }
  func.func @transform_1(%arg0: i32, %arg1: i32) -> (i32, i32) {
    %c0_i32 = arith.constant 0 : i32
    %c0_i32_0 = arith.constant 0 : i32
    %c0_i32_1 = arith.constant 0 : i32
    return %c0_i32, %c0_i32_0 : i32, i32
  }
  func.func @transform_2(%arg0: i32, %arg1: i32) -> (i32, i32) {
    %c0_i32 = arith.constant 0 : i32
    %c0_i32_0 = arith.constant 0 : i32
    %c0_i32_1 = arith.constant 0 : i32
    return %c0_i32, %c0_i32_0 : i32, i32
  }
  func.func @transform_3(%arg0: i32, %arg1: i32) -> (i32, i32) {
    %c0_i32 = arith.constant 0 : i32
    %c0_i32_0 = arith.constant 0 : i32
    %c0_i32_1 = arith.constant 0 : i32
    return %c0_i32, %c0_i32_0 : i32, i32
  }
  func.func @transform_4(%arg0: i32, %arg1: i32) -> (i32, i32, i32, i32) {
    %c0_i32 = arith.constant 0 : i32
    %c0_i32_0 = arith.constant 0 : i32
    %c0_i32_1 = arith.constant 0 : i32
    return %arg0, %arg1, %c0_i32, %c0_i32_0 : i32, i32, i32, i32
  }
}

module attributes {stable_mosaic.version = 11 : i64} {
  func.func @_bn_add_act_kernel(%arg0: i32, %arg1: i32, %arg2: memref<1x1x100x128xf32, #tpu.memory_space<vmem>>, %arg3: memref<1x128xf32, #tpu.memory_space<vmem>>, %arg4: memref<1x128xf32, #tpu.memory_space<vmem>>, %arg5: memref<100x1xf32, #tpu.memory_space<vmem>>, %arg6: memref<1x1x100x128xf32, #tpu.memory_space<vmem>>, %arg7: memref<1x1x100x128xf32, #tpu.memory_space<vmem>>) attributes {dimension_semantics = [#tpu.dimension_semantics<parallel>, #tpu.dimension_semantics<parallel>], iteration_bounds = array<i64: 2, 8>, scalar_prefetch = 0 : i64, scratch_operands = 0 : i64, tpu.core_type = #tpu.core_type<tc>, window_params = [{transform_indices = @transform_0, window_bounds = array<i64: 1, 1, 100, 128>}, {pipeline_mode = #tpu.pipeline_mode<synchronous>, transform_indices = @transform_1, window_bounds = array<i64: 1, 128>}, {pipeline_mode = #tpu.pipeline_mode<synchronous>, transform_indices = @transform_2, window_bounds = array<i64: 1, 128>}, {pipeline_mode = #tpu.pipeline_mode<synchronous>, transform_indices = @transform_3, window_bounds = array<i64: 100, 1>}, {transform_indices = @transform_4, window_bounds = array<i64: 1, 1, 100, 128>}, {transform_indices = @transform_5, window_bounds = array<i64: 1, 1, 100, 128>}]} {
    %c0 = arith.constant 0 : index
    %c0_0 = arith.constant 0 : index
    %c0_1 = arith.constant 0 : index
    %c0_2 = arith.constant 0 : index
    %0 = vector.load %arg2[%c0, %c0_0, %c0_1, %c0_2] : memref<1x1x100x128xf32, #tpu.memory_space<vmem>>, vector<1x1x100x128xf32>
    %1 = vector.shape_cast %0 : vector<1x1x100x128xf32> to vector<100x128xf32>
    %c0_3 = arith.constant 0 : index
    %c0_4 = arith.constant 0 : index
    %2 = vector.load %arg3[%c0_3, %c0_4] : memref<1x128xf32, #tpu.memory_space<vmem>>, vector<1x128xf32>
    %3 = vector.broadcast %2 : vector<1x128xf32> to vector<100x128xf32>
    %4 = arith.mulf %1, %3 : vector<100x128xf32>
    %c0_5 = arith.constant 0 : index
    %c0_6 = arith.constant 0 : index
    %5 = vector.load %arg4[%c0_5, %c0_6] : memref<1x128xf32, #tpu.memory_space<vmem>>, vector<1x128xf32>
    %6 = vector.broadcast %5 : vector<1x128xf32> to vector<100x128xf32>
    %7 = arith.addf %4, %6 : vector<100x128xf32>
    %c0_7 = arith.constant 0 : index
    %c0_8 = arith.constant 0 : index
    %c0_9 = arith.constant 0 : index
    %c0_10 = arith.constant 0 : index
    %8 = vector.load %arg6[%c0_7, %c0_8, %c0_9, %c0_10] : memref<1x1x100x128xf32, #tpu.memory_space<vmem>>, vector<1x1x100x128xf32>
    %9 = vector.shape_cast %8 : vector<1x1x100x128xf32> to vector<100x128xf32>
    %10 = arith.addf %7, %9 : vector<100x128xf32>
    %cst = arith.constant 0.000000e+00 : f32
    %11 = vector.broadcast %cst : f32 to vector<100x128xf32>
    %12 = arith.maximumf %10, %11 : vector<100x128xf32>
    %c0_11 = arith.constant 0 : index
    %c0_12 = arith.constant 0 : index
    %13 = vector.load %arg5[%c0_11, %c0_12] : memref<100x1xf32, #tpu.memory_space<vmem>>, vector<100x1xf32>
    %14 = vector.broadcast %13 : vector<100x1xf32> to vector<100x128xf32>
    %15 = arith.mulf %12, %14 : vector<100x128xf32>
    %c0_13 = arith.constant 0 : index
    %c0_14 = arith.constant 0 : index
    %c0_15 = arith.constant 0 : index
    %c0_16 = arith.constant 0 : index
    %16 = vector.load %arg7[%c0_13, %c0_14, %c0_15, %c0_16] : memref<1x1x100x128xf32, #tpu.memory_space<vmem>>, vector<1x1x100x128xf32>
    %17 = vector.shape_cast %16 : vector<1x1x100x128xf32> to vector<100x128xf32>
    %18 = vector.shape_cast %15 : vector<100x128xf32> to vector<1x1x100x128xf32>
    tpu.vector_store %arg7[%c0_13, %c0_14, %c0_15, %c0_16], %18 {strides = array<i32>} : memref<1x1x100x128xf32, #tpu.memory_space<vmem>>, vector<1x1x100x128xf32>,
    return
  }
  func.func @transform_0(%arg0: i32, %arg1: i32) -> (i32, i32, i32, i32) {
    %c0_i32 = arith.constant 0 : i32
    %c0_i32_0 = arith.constant 0 : i32
    %c0_i32_1 = arith.constant 0 : i32
    return %arg0, %arg1, %c0_i32, %c0_i32_0 : i32, i32, i32, i32
  }
  func.func @transform_1(%arg0: i32, %arg1: i32) -> (i32, i32) {
    %c0_i32 = arith.constant 0 : i32
    %c0_i32_0 = arith.constant 0 : i32
    %c0_i32_1 = arith.constant 0 : i32
    return %c0_i32, %c0_i32_0 : i32, i32
  }
  func.func @transform_2(%arg0: i32, %arg1: i32) -> (i32, i32) {
    %c0_i32 = arith.constant 0 : i32
    %c0_i32_0 = arith.constant 0 : i32
    %c0_i32_1 = arith.constant 0 : i32
    return %c0_i32, %c0_i32_0 : i32, i32
  }
  func.func @transform_3(%arg0: i32, %arg1: i32) -> (i32, i32) {
    %c0_i32 = arith.constant 0 : i32
    %c0_i32_0 = arith.constant 0 : i32
    %c0_i32_1 = arith.constant 0 : i32
    return %c0_i32, %c0_i32_0 : i32, i32
  }
  func.func @transform_4(%arg0: i32, %arg1: i32) -> (i32, i32, i32, i32) {
    %c0_i32 = arith.constant 0 : i32
    %c0_i32_0 = arith.constant 0 : i32
    %c0_i32_1 = arith.constant 0 : i32
    return %arg0, %arg1, %c0_i32, %c0_i32_0 : i32, i32, i32, i32
  }
  func.func @transform_5(%arg0: i32, %arg1: i32) -> (i32, i32, i32, i32) {
    %c0_i32 = arith.constant 0 : i32
    %c0_i32_0 = arith.constant 0 : i32
    %c0_i32_1 = arith.constant 0 : i32
    return %arg0, %arg1, %c0_i32, %c0_i32_0 : i32, i32, i32, i32
  }
}

</mosaic_0001>

<llo_original>
// kernel: basic_block_forward.5
$region0: #{basic_block_forward.5}
  #allocation0 [shape = 'u32[]', space=smem, size = 0x4, offset = 0x4, fixed_abs, tag = 'smem constant byte address 0x4 - core index']
  #allocation1 [shape = 'u32[72,128]{1,0:T(1,128)}', space=vmem, size = 0x9000, scoped, tag = 'internal scratch']
  %s0 = inlined_call_operand.vmem [shape: f32[2,8,100,128], index: 0, kind: input, shape index: {}]
  %s1 = inlined_call_operand.vmem [shape: f32[1,128], index: 1, kind: input, shape index: {}]
  %s2 = inlined_call_operand.vmem [shape: f32[1,128], index: 2, kind: input, shape index: {}]
  %s3 = inlined_call_operand.vmem [shape: f32[100,1], index: 3, kind: input, shape index: {}]
  %s4 = inlined_call_operand.vmem [shape: f32[2,8,100,128], index: 4, kind: output, shape index: {}]
  %s5 = sld [smem:[#allocation0]]
  $region49: #{basic_block_forward.5} parent=0
    _
  %s7 = ssub.s32 1, %s5
  %s8 = scalar_select 0, %s7, %s5
  loop: start=0, step=1, limit=18
  $region2: #{basic_block_forward.5} parent=0 // loop_pre_header
    _
  $region3: #{basic_block_forward.5} parent=0 // loop_header
    %s10 = sphi 0, %s14
    %p11 = scmp.ge.s32.totalorder %s10, 18
    %s17 = sphi 0, %s29
    %s18 = sphi 0, %s25
    %s19 = sphi 0, %s17
    %s20 = sphi 0, %s18
    %s21 = sphi 0, %s19
    %s22 = sphi 0, %s20
    %s34 = sphi 0, %s36
    %s37 = sphi 0, %s34
    %s38 = sphi 0, %s37
    %s54 = sphi 0, %s38
    %s58 = sphi 0, %s58
    %s60 = sphi 0, %s58
    %s61 = sphi 0, %s60
    %s75 = sphi 0, %s61
    %s79 = sphi 0, %s79
    %s81 = sphi 0, %s79
    %s82 = sphi 0, %s81
    %s96 = sphi 0, %s82
    %s100 = sphi 0, %s100
    %s102 = sphi 0, %s100
    %s103 = sphi 0, %s102
    %s117 = sphi 0, %s103
    %s125 = sphi 0, %s127
    %s128 = sphi 0, %s125
    %s129 = sphi 0, %s128
    %s145 = sphi 0, %s129
  $region4: #{basic_block_forward.5} parent=0 // loop_header_branch
    %13 = sbr.rel (%p11) target = $region8
  $region5: #{basic_block_forward.5} parent=0 // loop_body
    %s15 = ssub.s32 %s10, 1
    %s16 = ssub.s32 %s10, 2
    %s23 = sadd.s32 1, %s18
    %p24 = scmp.ge.s32.totalorder %s23, 8
    %s25 = scalar_select %p24, 0, %s23
    %s26 = sadd.s32 1, %s17
    %s27 = scalar_select %p24, %s26, %s17
    %p28 = scmp.ge.s32.totalorder %s27, 2
    %s29 = scalar_select %p28, 0, %s27
    %s30 = ssub.s32 %s17, %s29
    %s31 = ssub.s32 %s18, %s25
    %s32 = sor.u32 %s30, %s31
    %p33 = scmp.eq.s32.totalorder %s32, 0
    %s35 = sadd.s32 %s34, 1
    %s36 = scalar_select %p33, %s34, %s35
    %p39 = pneg %p33
    %p40 = scmp.eq.s32.totalorder %s10, 15
    %p41 = por %p39, %p40
    %p42 = scmp.ne.s32.totalorder %s34, %s37
    %p43 = scmp.eq.s32.totalorder %s10, 0
    %p44 = por %p42, %p43
    %p45 = scmp.ne.s32.totalorder %s34, %s37
    %p46 = scmp.eq.s32.totalorder %s15, 15
    %p47 = por %p45, %p46
    %p48 = scmp.ne.s32.totalorder %s37, %s38
    %p49 = scmp.eq.s32.totalorder %s15, 0
    %p50 = por %p48, %p49
    %p51 = scmp.ne.s32.totalorder %s37, %s38
    %p52 = scmp.eq.s32.totalorder %s16, 15
    %p53 = por %p51, %p52
    %p55 = scmp.ne.s32.totalorder %s38, %s54
    %p56 = scmp.eq.s32.totalorder %s16, 0
    %p57 = por %p55, %p56
    %s59 = sadd.s32 %s58, 1
    %p62 = scmp.eq.s32.totalorder %s10, 15
    %p63 = scmp.ne.s32.totalorder %s58, %s60
    %p64 = scmp.eq.s32.totalorder %s10, 0
    %p65 = por %p63, %p64
    %p66 = scmp.ne.s32.totalorder %s58, %s60
    %p67 = scmp.eq.s32.totalorder %s15, 15
    %p68 = por %p66, %p67
    %p69 = scmp.ne.s32.totalorder %s60, %s61
    %p70 = scmp.eq.s32.totalorder %s15, 0
    %p71 = por %p69, %p70
    %p72 = scmp.ne.s32.totalorder %s60, %s61
    %p73 = scmp.eq.s32.totalorder %s16, 15
    %p74 = por %p72, %p73
    %p76 = scmp.ne.s32.totalorder %s61, %s75
    %p77 = scmp.eq.s32.totalorder %s16, 0
    %p78 = por %p76, %p77
    %s80 = sadd.s32 %s79, 1
    %p83 = scmp.eq.s32.totalorder %s10, 15
    %p84 = scmp.ne.s32.totalorder %s79, %s81
    %p85 = scmp.eq.s32.totalorder %s10, 0
    %p86 = por %p84, %p85
    %p87 = scmp.ne.s32.totalorder %s79, %s81
    %p88 = scmp.eq.s32.totalorder %s15, 15
    %p89 = por %p87, %p88
    %p90 = scmp.ne.s32.totalorder %s81, %s82
    %p91 = scmp.eq.s32.totalorder %s15, 0
    %p92 = por %p90, %p91
    %p93 = scmp.ne.s32.totalorder %s81, %s82
    %p94 = scmp.eq.s32.totalorder %s16, 15
    %p95 = por %p93, %p94
    %p97 = scmp.ne.s32.totalorder %s82, %s96
    %p98 = scmp.eq.s32.totalorder %s16, 0
    %p99 = por %p97, %p98
    %s101 = sadd.s32 %s100, 1
    %p104 = scmp.eq.s32.totalorder %s10, 15
    %p105 = scmp.ne.s32.totalorder %s100, %s102
    %p106 = scmp.eq.s32.totalorder %s10, 0
    %p107 = por %p105, %p106
    %p108 = scmp.ne.s32.totalorder %s100, %s102
    %p109 = scmp.eq.s32.totalorder %s15, 15
    %p110 = por %p108, %p109
    %p111 = scmp.ne.s32.totalorder %s102, %s103
    %p112 = scmp.eq.s32.totalorder %s15, 0
    %p113 = por %p111, %p112
    %p114 = scmp.ne.s32.totalorder %s102, %s103
    %p115 = scmp.eq.s32.totalorder %s16, 15
    %p116 = por %p114, %p115
    %p118 = scmp.ne.s32.totalorder %s103, %s117
    %p119 = scmp.eq.s32.totalorder %s16, 0
    %p120 = por %p118, %p119
    %s121 = ssub.s32 %s17, %s29
    %s122 = ssub.s32 %s18, %s25
    %s123 = sor.u32 %s121, %s122
    %p124 = scmp.eq.s32.totalorder %s123, 0
    %s126 = sadd.s32 %s125, 1
    %s127 = scalar_select %p124, %s125, %s126
    %p130 = pneg %p124
    %p131 = scmp.eq.s32.totalorder %s10, 15
    %p132 = por %p130, %p131
    %p133 = scmp.ne.s32.totalorder %s125, %s128
    %p134 = scmp.eq.s32.totalorder %s10, 0
    %p135 = por %p133, %p134
    %p136 = scmp.ne.s32.totalorder %s125, %s128
    %p137 = scmp.eq.s32.totalorder %s15, 15
    %p138 = por %p136, %p137
    %p139 = scmp.ne.s32.totalorder %s128, %s129
    %p140 = scmp.eq.s32.totalorder %s15, 0
    %p141 = por %p139, %p140
    %p142 = scmp.ne.s32.totalorder %s128, %s129
    %p143 = scmp.eq.s32.totalorder %s16, 15
    %p144 = por %p142, %p143
    %p146 = scmp.ne.s32.totalorder %s129, %s145
    %p147 = scmp.eq.s32.totalorder %s16, 0
    %p148 = por %p146, %p147
    %p149 = scmp.le.s32.totalorder 1, %s10
    %p150 = scmp.lt.s32.totalorder %s10, 17
    %p151 = pnand %p149, %p150
    %p152 = pneg %p151
    // Predicated region
    $region9: #{basic_block_forward.5} parent=5 // pred_check
      _
    $region10: #{basic_block_forward.5} parent=5 // pred_check_branch
      %154 = sbr.rel (%p151) target = $region12
    $region11: #{basic_block_forward.5} parent=5 // pred_region
      %s155 = ssub.s32 %s10, 1
      // Predicated region
      $region13: #{basic_block_forward.5} parent=11 // pred_check
        %p156 = pneg %p71
      $region14: #{basic_block_forward.5} parent=11 // pred_check_branch
        %158 = sbr.rel (%p156) target = $region16
      $region15: #{basic_block_forward.5} parent=11 // pred_region
        _
      $region16: #{basic_block_forward.5} parent=11 // pred_fallthru
        _
      // Predicated region
      $region17: #{basic_block_forward.5} parent=11 // pred_check
        %p159 = pneg %p92
      $region18: #{basic_block_forward.5} parent=11 // pred_check_branch
        %161 = sbr.rel (%p159) target = $region20
      $region19: #{basic_block_forward.5} parent=11 // pred_region
        _
      $region20: #{basic_block_forward.5} parent=11 // pred_fallthru
        _
      // Predicated region
      $region21: #{basic_block_forward.5} parent=11 // pred_check
        %p162 = pneg %p113
      $region22: #{basic_block_forward.5} parent=11 // pred_check_branch
        %164 = sbr.rel (%p162) target = $region24
      $region23: #{basic_block_forward.5} parent=11 // pred_region
        _
      $region24: #{basic_block_forward.5} parent=11 // pred_fallthru
        _
    $region12: #{basic_block_forward.5} parent=5 // pred_fallthru
      _
    %p165 = scmp.lt.s32.totalorder %s10, 16
    // Predicated region
    $region25: #{basic_block_forward.5} parent=5 // pred_check
      %p166 = pneg %p165
    $region26: #{basic_block_forward.5} parent=5 // pred_check_branch
      %168 = sbr.rel (%p166) target = $region28
    $region27: #{basic_block_forward.5} parent=5 // pred_region
      // Predicated region
      $region29: #{basic_block_forward.5} parent=27 // pred_check
        %p169 = pneg %p44
      $region30: #{basic_block_forward.5} parent=27 // pred_check_branch
        %171 = sbr.rel (%p169) target = $region32
      $region31: #{basic_block_forward.5} parent=27 // pred_region
        %p172 = scmp.lt.s32.totalorder %s17, 1
        %s173 = scalar_select %p172, %s17, 1
        %p174 = scmp.lt.s32.totalorder %s18, 7
        %s175 = scalar_select %p174, %s18, 7
        %s176 = smul.addr %s175, 13
        %s177 = smul.addr %s173, 104
        %s178 = sadd.s32 %s176, %s177
        %s179 = smul.addr %s178, 8
        %s180 = scalar_lea.vmem %s0, %s179
      $region32: #{basic_block_forward.5} parent=27 // pred_fallthru
        _
    $region28: #{basic_block_forward.5} parent=5 // pred_fallthru
      _
    %p181 = scmp.le.s32.totalorder 1, %s10
    %p182 = scmp.lt.s32.totalorder %s10, 17
    %p183 = pnand %p181, %p182
    %p184 = pneg %p183
    // Predicated region
    $region33: #{basic_block_forward.5} parent=5 // pred_check
      _
    $region34: #{basic_block_forward.5} parent=5 // pred_check_branch
      %186 = sbr.rel (%p183) target = $region36
    $region35: #{basic_block_forward.5} parent=5 // pred_region
      %s187 = ssub.s32 %s10, 1
      %p188 = scmp.lt.s32.totalorder %s19, 1
      %s189 = scalar_select %p188, %s19, 1
      %p190 = scmp.lt.s32.totalorder %s20, 7
      %s191 = scalar_select %p190, %s20, 7
      %s192 = smul.addr %s191, 13
      %s193 = smul.addr %s189, 104
      %s194 = sadd.s32 %s192, %s193
      %s195 = smul.addr %s194, 8
      %s196 = scalar_lea.vmem %s0, %s195
      %p197 = pneg %p50
      %p198 = pneg %p47
      %p199 = pneg %p71
      %p200 = pneg %p68
      %p201 = pneg %p92
      %p202 = pneg %p89
      %p203 = pneg %p113
      %p204 = pneg %p110
      %p205 = pneg %p141
      %p206 = pneg %p138
      %p207 = scmp.lt.s32.totalorder %s19, 1
      %s208 = scalar_select %p207, %s19, 1
      %p209 = scmp.lt.s32.totalorder %s20, 7
      %s210 = scalar_select %p209, %s20, 7
      %s211 = smul.addr %s210, 13
      %s212 = smul.addr %s208, 104
      %s213 = sadd.s32 %s211, %s212
      %s214 = smul.addr %s213, 8
      %s215 = scalar_lea.vmem %s4, %s214
      %p216 = scmp.lt.s32.totalorder %s19, 1
      %s217 = scalar_select %p216, %s19, 1
      %p218 = scmp.lt.s32.totalorder %s20, 7
      %s219 = scalar_select %p218, %s20, 7
      %s220 = smul.addr %s219, 13
      %s221 = smul.addr %s217, 104
      %s222 = sadd.s32 %s220, %s221
      %s223 = smul.addr %s222, 8
      %s224 = scalar_lea.vmem %s0, %s223
      %p225 = scmp.lt.s32.totalorder %s19, 1
      %s226 = scalar_select %p225, %s19, 1
      %p227 = scmp.lt.s32.totalorder %s20, 7
      %s228 = scalar_select %p227, %s20, 7
      %s229 = smul.addr %s228, 13
      %s230 = smul.addr %s226, 104
      %s231 = sadd.s32 %s229, %s230
      %s232 = smul.addr %s231, 8
      %s233 = scalar_lea.vmem %s4, %s232
      %v234 = vld [vmem:[%s224] sm:$0xff]
      %v235 = vld [vmem:[%s224 + $0x8] sm:$0xff]
      %v236 = vld [vmem:[%s224 + $0x10] sm:$0xff]
      %v237 = vld [vmem:[%s224 + $0x18] sm:$0xff]
      %v238 = vld [vmem:[%s224 + $0x20] sm:$0xff]
      %v239 = vld [vmem:[%s224 + $0x28] sm:$0xff]
      %v240 = vld [vmem:[%s224 + $0x30] sm:$0xff]
      %v241 = vld [vmem:[%s224 + $0x38] sm:$0xff]
      %v242 = vld [vmem:[%s224 + $0x40] sm:$0xff]
      %v243 = vld [vmem:[%s224 + $0x48] sm:$0xff]
      %v244 = vld [vmem:[%s224 + $0x50] sm:$0xff]
      %v245 = vld [vmem:[%s224 + $0x58] sm:$0xff]
      %v246 = vld [vmem:[%s224 + $0x60] sm:$0xf]
      %v247 = vld [vmem:[%s1] sm:$0x1]
      %v249 = vperm.slane %v247, 0
      %v251 = vmul.f32 %v234, %v249
      %v252 = vmul.f32 %v235, %v249
      %v253 = vmul.f32 %v236, %v249
      %v254 = vmul.f32 %v237, %v249
      %v255 = vmul.f32 %v238, %v249
      %v256 = vmul.f32 %v239, %v249
      %v257 = vmul.f32 %v240, %v249
      %v258 = vmul.f32 %v241, %v249
      %v259 = vmul.f32 %v242, %v249
      %v260 = vmul.f32 %v243, %v249
      %v261 = vmul.f32 %v244, %v249
      %v262 = vmul.f32 %v245, %v249
      %v263 = vmul.f32 %v246, %v249
      %v264 = vld [vmem:[%s2] sm:$0x1]
      %v266 = vperm.slane %v264, 0
      %v268 = vadd.f32 %v251, %v266
      %v269 = vadd.f32 %v252, %v266
      %v270 = vadd.f32 %v253, %v266
      %v271 = vadd.f32 %v254, %v266
      %v272 = vadd.f32 %v255, %v266
      %v273 = vadd.f32 %v256, %v266
      %v274 = vadd.f32 %v257, %v266
      %v275 = vadd.f32 %v258, %v266
      %v276 = vadd.f32 %v259, %v266
      %v277 = vadd.f32 %v260, %v266
      %v278 = vadd.f32 %v261, %v266
      %v279 = vadd.f32 %v262, %v266
      %v280 = vadd.f32 %v263, %v266
      %v281 = vmax.f32 %v268, 0.0
      %v282 = vmax.f32 %v269, 0.0
      %v283 = vmax.f32 %v270, 0.0
      %v284 = vmax.f32 %v271, 0.0
      %v285 = vmax.f32 %v272, 0.0
      %v286 = vmax.f32 %v273, 0.0
      %v287 = vmax.f32 %v274, 0.0
      %v288 = vmax.f32 %v275, 0.0
      %v289 = vmax.f32 %v276, 0.0
      %v290 = vmax.f32 %v277, 0.0
      %v291 = vmax.f32 %v278, 0.0
      %v292 = vmax.f32 %v279, 0.0
      %v293 = vmax.f32 %v280, 0.0
      %v294 = vld [vmem:[%s3] sm:$0xff]
      %v295 = vld [vmem:[%s3 + $0x8] sm:$0xff]
      %v296 = vld [vmem:[%s3 + $0x10] sm:$0xff]
      %v297 = vld [vmem:[%s3 + $0x18] sm:$0xff]
      %v298 = vld [vmem:[%s3 + $0x20] sm:$0xff]
      %v299 = vld [vmem:[%s3 + $0x28] sm:$0xff]
      %v300 = vld [vmem:[%s3 + $0x30] sm:$0xff]
      %v301 = vld [vmem:[%s3 + $0x38] sm:$0xff]
      %v302 = vld [vmem:[%s3 + $0x40] sm:$0xff]
      %v303 = vld [vmem:[%s3 + $0x48] sm:$0xff]
      %v304 = vld [vmem:[%s3 + $0x50] sm:$0xff]
      %v305 = vld [vmem:[%s3 + $0x58] sm:$0xff]
      %v306 = vld [vmem:[%s3 + $0x60] sm:$0xf]
      %308 = vset.pattern.permute.xlu0 0
      %309 = vperm.xlu0 %308, %v294
      %v310 = vpop.permute.xlu0 %309
      %313 = vset.pattern.permute.xlu0 0
      %314 = vperm.xlu0 %313, %v295
      %v315 = vpop.permute.xlu0 %314
      %318 = vset.pattern.permute.xlu0 0
      %319 = vperm.xlu0 %318, %v296
      %v320 = vpop.permute.xlu0 %319
      %323 = vset.pattern.permute.xlu0 0
      %324 = vperm.xlu0 %323, %v297
      %v325 = vpop.permute.xlu0 %324
      %328 = vset.pattern.permute.xlu0 0
      %329 = vperm.xlu0 %328, %v298
      %v330 = vpop.permute.xlu0 %329
      %333 = vset.pattern.permute.xlu0 0
      %334 = vperm.xlu0 %333, %v299
      %v335 = vpop.permute.xlu0 %334
      %338 = vset.pattern.permute.xlu0 0
      %339 = vperm.xlu0 %338, %v300
      %v340 = vpop.permute.xlu0 %339
      %343 = vset.pattern.permute.xlu0 0
      %344 = vperm.xlu0 %343, %v301
      %v345 = vpop.permute.xlu0 %344
      %348 = vset.pattern.permute.xlu0 0
      %349 = vperm.xlu0 %348, %v302
      %v350 = vpop.permute.xlu0 %349
      %353 = vset.pattern.permute.xlu0 0
      %354 = vperm.xlu0 %353, %v303
      %v355 = vpop.permute.xlu0 %354
      %358 = vset.pattern.permute.xlu0 0
      %359 = vperm.xlu0 %358, %v304
      %v360 = vpop.permute.xlu0 %359
      %363 = vset.pattern.permute.xlu0 0
      %364 = vperm.xlu0 %363, %v305
      %v365 = vpop.permute.xlu0 %364
      %368 = vset.pattern.permute.xlu0 0
      %369 = vperm.xlu0 %368, %v306
      %v370 = vpop.permute.xlu0 %369
      %v372 = vmul.f32 %v281, %v310
      %v373 = vmul.f32 %v282, %v315
      %v374 = vmul.f32 %v283, %v320
      %v375 = vmul.f32 %v284, %v325
      %v376 = vmul.f32 %v285, %v330
      %v377 = vmul.f32 %v286, %v335
      %v378 = vmul.f32 %v287, %v340
      %v379 = vmul.f32 %v288, %v345
      %v380 = vmul.f32 %v289, %v350
      %v381 = vmul.f32 %v290, %v355
      %v382 = vmul.f32 %v291, %v360
      %v383 = vmul.f32 %v292, %v365
      %v384 = vmul.f32 %v293, %v370
      %385 = vst [vmem:[%s233] sm:$0xff] %v372
      %386 = vst [vmem:[%s233 + $0x8] sm:$0xff] %v373
      %387 = vst [vmem:[%s233 + $0x10] sm:$0xff] %v374
      %388 = vst [vmem:[%s233 + $0x18] sm:$0xff] %v375
      %389 = vst [vmem:[%s233 + $0x20] sm:$0xff] %v376
      %390 = vst [vmem:[%s233 + $0x28] sm:$0xff] %v377
      %391 = vst [vmem:[%s233 + $0x30] sm:$0xff] %v378
      %392 = vst [vmem:[%s233 + $0x38] sm:$0xff] %v379
      %393 = vst [vmem:[%s233 + $0x40] sm:$0xff] %v380
      %394 = vst [vmem:[%s233 + $0x48] sm:$0xff] %v381
      %395 = vst [vmem:[%s233 + $0x50] sm:$0xff] %v382
      %396 = vst [vmem:[%s233 + $0x58] sm:$0xff] %v383
      %397 = vst [vmem:[%s233 + $0x60] sm:$0xf] %v384
      %p398 = scmp.lt.s32.totalorder %s19, 1
      %s399 = scalar_select %p398, %s19, 1
      %p400 = scmp.lt.s32.totalorder %s20, 7
      %s401 = scalar_select %p400, %s20, 7
      %s402 = smul.addr %s401, 13
      %s403 = smul.addr %s399, 104
      %s404 = sadd.s32 %s402, %s403
      %s405 = smul.addr %s404, 8
      %s406 = scalar_lea.vmem %s4, %s405
      // Predicated region
      $region37: #{basic_block_forward.5} parent=35 // pred_check
        %p407 = pneg %p138
      $region38: #{basic_block_forward.5} parent=35 // pred_check_branch
        %409 = sbr.rel (%p407) target = $region40
      $region39: #{basic_block_forward.5} parent=35 // pred_region
        _
      $region40: #{basic_block_forward.5} parent=35 // pred_fallthru
        _
    $region36: #{basic_block_forward.5} parent=5 // pred_fallthru
      _
    %p410 = scmp.le.s32.totalorder 2, %s10
    // Predicated region
    $region41: #{basic_block_forward.5} parent=5 // pred_check
      %p411 = pneg %p410
    $region42: #{basic_block_forward.5} parent=5 // pred_check_branch
      %413 = sbr.rel (%p411) target = $region44
    $region43: #{basic_block_forward.5} parent=5 // pred_region
      %s414 = ssub.s32 %s10, 2
      // Predicated region
      $region45: #{basic_block_forward.5} parent=43 // pred_check
        %p415 = pneg %p144
      $region46: #{basic_block_forward.5} parent=43 // pred_check_branch
        %417 = sbr.rel (%p415) target = $region48
      $region47: #{basic_block_forward.5} parent=43 // pred_region
        %p418 = scmp.lt.s32.totalorder %s21, 1
        %s419 = scalar_select %p418, %s21, 1
        %p420 = scmp.lt.s32.totalorder %s22, 7
        %s421 = scalar_select %p420, %s22, 7
        %s422 = smul.addr %s421, 13
        %s423 = smul.addr %s419, 104
        %s424 = sadd.s32 %s422, %s423
        %s425 = smul.addr %s424, 8
        %s426 = scalar_lea.vmem %s4, %s425
      $region48: #{basic_block_forward.5} parent=43 // pred_fallthru
        _
    $region44: #{basic_block_forward.5} parent=5 // pred_fallthru
      _
  $region6: #{basic_block_forward.5} parent=0 // loop_footer
    %s14 = sadd.s32 1, %s10
  $region7: #{basic_block_forward.5} parent=0 // loop_footer_branch
    %9 = sbr.rel target = $region3
  $region8: #{basic_block_forward.5} parent=0 // loop_exit
    _

// kernel: basic_block_forward.7
$region0: #{basic_block_forward.7}
  #allocation0 [shape = 'u32[]', space=smem, size = 0x4, offset = 0x4, fixed_abs, tag = 'smem constant byte address 0x4 - core index']
  #allocation1 [shape = 'u32[72,128]{1,0:T(1,128)}', space=vmem, size = 0x9000, scoped, tag = 'internal scratch']
  %s0 = inlined_call_operand.vmem [shape: f32[2,8,100,128], index: 0, kind: input, shape index: {}]
  %s1 = inlined_call_operand.vmem [shape: f32[1,128], index: 1, kind: input, shape index: {}]
  %s2 = inlined_call_operand.vmem [shape: f32[1,128], index: 2, kind: input, shape index: {}]
  %s3 = inlined_call_operand.vmem [shape: f32[100,1], index: 3, kind: input, shape index: {}]
  %s4 = inlined_call_operand.vmem [shape: f32[2,8,100,128], index: 4, kind: input, shape index: {}]
  %s5 = inlined_call_operand.vmem [shape: f32[2,8,100,128], index: 5, kind: output, shape index: {}]
  %s6 = sld [smem:[#allocation0]]
  $region53: #{basic_block_forward.7} parent=0
    _
  %s8 = ssub.s32 1, %s6
  %s9 = scalar_select 0, %s8, %s6
  loop: start=0, step=1, limit=18
  $region2: #{basic_block_forward.7} parent=0 // loop_pre_header
    _
  $region3: #{basic_block_forward.7} parent=0 // loop_header
    %s11 = sphi 0, %s15
    %p12 = scmp.ge.s32.totalorder %s11, 18
    %s18 = sphi 0, %s30
    %s19 = sphi 0, %s26
    %s20 = sphi 0, %s18
    %s21 = sphi 0, %s19
    %s22 = sphi 0, %s20
    %s23 = sphi 0, %s21
    %s35 = sphi 0, %s37
    %s38 = sphi 0, %s35
    %s39 = sphi 0, %s38
    %s55 = sphi 0, %s39
    %s59 = sphi 0, %s59
    %s61 = sphi 0, %s59
    %s62 = sphi 0, %s61
    %s76 = sphi 0, %s62
    %s80 = sphi 0, %s80
    %s82 = sphi 0, %s80
    %s83 = sphi 0, %s82
    %s97 = sphi 0, %s83
    %s101 = sphi 0, %s101
    %s103 = sphi 0, %s101
    %s104 = sphi 0, %s103
    %s118 = sphi 0, %s104
    %s126 = sphi 0, %s128
    %s129 = sphi 0, %s126
    %s130 = sphi 0, %s129
    %s146 = sphi 0, %s130
    %s154 = sphi 0, %s156
    %s157 = sphi 0, %s154
    %s158 = sphi 0, %s157
    %s174 = sphi 0, %s158
  $region4: #{basic_block_forward.7} parent=0 // loop_header_branch
    %14 = sbr.rel (%p12) target = $region8
  $region5: #{basic_block_forward.7} parent=0 // loop_body
    %s16 = ssub.s32 %s11, 1
    %s17 = ssub.s32 %s11, 2
    %s24 = sadd.s32 1, %s19
    %p25 = scmp.ge.s32.totalorder %s24, 8
    %s26 = scalar_select %p25, 0, %s24
    %s27 = sadd.s32 1, %s18
    %s28 = scalar_select %p25, %s27, %s18
    %p29 = scmp.ge.s32.totalorder %s28, 2
    %s30 = scalar_select %p29, 0, %s28
    %s31 = ssub.s32 %s18, %s30
    %s32 = ssub.s32 %s19, %s26
    %s33 = sor.u32 %s31, %s32
    %p34 = scmp.eq.s32.totalorder %s33, 0
    %s36 = sadd.s32 %s35, 1
    %s37 = scalar_select %p34, %s35, %s36
    %p40 = pneg %p34
    %p41 = scmp.eq.s32.totalorder %s11, 15
    %p42 = por %p40, %p41
    %p43 = scmp.ne.s32.totalorder %s35, %s38
    %p44 = scmp.eq.s32.totalorder %s11, 0
    %p45 = por %p43, %p44
    %p46 = scmp.ne.s32.totalorder %s35, %s38
    %p47 = scmp.eq.s32.totalorder %s16, 15
    %p48 = por %p46, %p47
    %p49 = scmp.ne.s32.totalorder %s38, %s39
    %p50 = scmp.eq.s32.totalorder %s16, 0
    %p51 = por %p49, %p50
    %p52 = scmp.ne.s32.totalorder %s38, %s39
    %p53 = scmp.eq.s32.totalorder %s17, 15
    %p54 = por %p52, %p53
    %p56 = scmp.ne.s32.totalorder %s39, %s55
    %p57 = scmp.eq.s32.totalorder %s17, 0
    %p58 = por %p56, %p57
    %s60 = sadd.s32 %s59, 1
    %p63 = scmp.eq.s32.totalorder %s11, 15
    %p64 = scmp.ne.s32.totalorder %s59, %s61
    %p65 = scmp.eq.s32.totalorder %s11, 0
    %p66 = por %p64, %p65
    %p67 = scmp.ne.s32.totalorder %s59, %s61
    %p68 = scmp.eq.s32.totalorder %s16, 15
    %p69 = por %p67, %p68
    %p70 = scmp.ne.s32.totalorder %s61, %s62
    %p71 = scmp.eq.s32.totalorder %s16, 0
    %p72 = por %p70, %p71
    %p73 = scmp.ne.s32.totalorder %s61, %s62
    %p74 = scmp.eq.s32.totalorder %s17, 15
    %p75 = por %p73, %p74
    %p77 = scmp.ne.s32.totalorder %s62, %s76
    %p78 = scmp.eq.s32.totalorder %s17, 0
    %p79 = por %p77, %p78
    %s81 = sadd.s32 %s80, 1
    %p84 = scmp.eq.s32.totalorder %s11, 15
    %p85 = scmp.ne.s32.totalorder %s80, %s82
    %p86 = scmp.eq.s32.totalorder %s11, 0
    %p87 = por %p85, %p86
    %p88 = scmp.ne.s32.totalorder %s80, %s82
    %p89 = scmp.eq.s32.totalorder %s16, 15
    %p90 = por %p88, %p89
    %p91 = scmp.ne.s32.totalorder %s82, %s83
    %p92 = scmp.eq.s32.totalorder %s16, 0
    %p93 = por %p91, %p92
    %p94 = scmp.ne.s32.totalorder %s82, %s83
    %p95 = scmp.eq.s32.totalorder %s17, 15
    %p96 = por %p94, %p95
    %p98 = scmp.ne.s32.totalorder %s83, %s97
    %p99 = scmp.eq.s32.totalorder %s17, 0
    %p100 = por %p98, %p99
    %s102 = sadd.s32 %s101, 1
    %p105 = scmp.eq.s32.totalorder %s11, 15
    %p106 = scmp.ne.s32.totalorder %s101, %s103
    %p107 = scmp.eq.s32.totalorder %s11, 0
    %p108 = por %p106, %p107
    %p109 = scmp.ne.s32.totalorder %s101, %s103
    %p110 = scmp.eq.s32.totalorder %s16, 15
    %p111 = por %p109, %p110
    %p112 = scmp.ne.s32.totalorder %s103, %s104
    %p113 = scmp.eq.s32.totalorder %s16, 0
    %p114 = por %p112, %p113
    %p115 = scmp.ne.s32.totalorder %s103, %s104
    %p116 = scmp.eq.s32.totalorder %s17, 15
    %p117 = por %p115, %p116
    %p119 = scmp.ne.s32.totalorder %s104, %s118
    %p120 = scmp.eq.s32.totalorder %s17, 0
    %p121 = por %p119, %p120
    %s122 = ssub.s32 %s18, %s30
    %s123 = ssub.s32 %s19, %s26
    %s124 = sor.u32 %s122, %s123
    %p125 = scmp.eq.s32.totalorder %s124, 0
    %s127 = sadd.s32 %s126, 1
    %s128 = scalar_select %p125, %s126, %s127
    %p131 = pneg %p125
    %p132 = scmp.eq.s32.totalorder %s11, 15
    %p133 = por %p131, %p132
    %p134 = scmp.ne.s32.totalorder %s126, %s129
    %p135 = scmp.eq.s32.totalorder %s11, 0
    %p136 = por %p134, %p135
    %p137 = scmp.ne.s32.totalorder %s126, %s129
    %p138 = scmp.eq.s32.totalorder %s16, 15
    %p139 = por %p137, %p138
    %p140 = scmp.ne.s32.totalorder %s129, %s130
    %p141 = scmp.eq.s32.totalorder %s16, 0
    %p142 = por %p140, %p141
    %p143 = scmp.ne.s32.totalorder %s129, %s130
    %p144 = scmp.eq.s32.totalorder %s17, 15
    %p145 = por %p143, %p144
    %p147 = scmp.ne.s32.totalorder %s130, %s146
    %p148 = scmp.eq.s32.totalorder %s17, 0
    %p149 = por %p147, %p148
    %s150 = ssub.s32 %s18, %s30
    %s151 = ssub.s32 %s19, %s26
    %s152 = sor.u32 %s150, %s151
    %p153 = scmp.eq.s32.totalorder %s152, 0
    %s155 = sadd.s32 %s154, 1
    %s156 = scalar_select %p153, %s154, %s155
    %p159 = pneg %p153
    %p160 = scmp.eq.s32.totalorder %s11, 15
    %p161 = por %p159, %p160
    %p162 = scmp.ne.s32.totalorder %s154, %s157
    %p163 = scmp.eq.s32.totalorder %s11, 0
    %p164 = por %p162, %p163
    %p165 = scmp.ne.s32.totalorder %s154, %s157
    %p166 = scmp.eq.s32.totalorder %s16, 15
    %p167 = por %p165, %p166
    %p168 = scmp.ne.s32.totalorder %s157, %s158
    %p169 = scmp.eq.s32.totalorder %s16, 0
    %p170 = por %p168, %p169
    %p171 = scmp.ne.s32.totalorder %s157, %s158
    %p172 = scmp.eq.s32.totalorder %s17, 15
    %p173 = por %p171, %p172
    %p175 = scmp.ne.s32.totalorder %s158, %s174
    %p176 = scmp.eq.s32.totalorder %s17, 0
    %p177 = por %p175, %p176
    %p178 = scmp.le.s32.totalorder 1, %s11
    %p179 = scmp.lt.s32.totalorder %s11, 17
    %p180 = pnand %p178, %p179
    %p181 = pneg %p180
    // Predicated region
    $region9: #{basic_block_forward.7} parent=5 // pred_check
      _
    $region10: #{basic_block_forward.7} parent=5 // pred_check_branch
      %183 = sbr.rel (%p180) target = $region12
    $region11: #{basic_block_forward.7} parent=5 // pred_region
      %s184 = ssub.s32 %s11, 1
      // Predicated region
      $region13: #{basic_block_forward.7} parent=11 // pred_check
        %p185 = pneg %p72
      $region14: #{basic_block_forward.7} parent=11 // pred_check_branch
        %187 = sbr.rel (%p185) target = $region16
      $region15: #{basic_block_forward.7} parent=11 // pred_region
        _
      $region16: #{basic_block_forward.7} parent=11 // pred_fallthru
        _
      // Predicated region
      $region17: #{basic_block_forward.7} parent=11 // pred_check
        %p188 = pneg %p93
      $region18: #{basic_block_forward.7} parent=11 // pred_check_branch
        %190 = sbr.rel (%p188) target = $region20
      $region19: #{basic_block_forward.7} parent=11 // pred_region
        _
      $region20: #{basic_block_forward.7} parent=11 // pred_fallthru
        _
      // Predicated region
      $region21: #{basic_block_forward.7} parent=11 // pred_check
        %p191 = pneg %p114
      $region22: #{basic_block_forward.7} parent=11 // pred_check_branch
        %193 = sbr.rel (%p191) target = $region24
      $region23: #{basic_block_forward.7} parent=11 // pred_region
        _
      $region24: #{basic_block_forward.7} parent=11 // pred_fallthru
        _
    $region12: #{basic_block_forward.7} parent=5 // pred_fallthru
      _
    %p194 = scmp.lt.s32.totalorder %s11, 16
    // Predicated region
    $region25: #{basic_block_forward.7} parent=5 // pred_check
      %p195 = pneg %p194
    $region26: #{basic_block_forward.7} parent=5 // pred_check_branch
      %197 = sbr.rel (%p195) target = $region28
    $region27: #{basic_block_forward.7} parent=5 // pred_region
      // Predicated region
      $region29: #{basic_block_forward.7} parent=27 // pred_check
        %p198 = pneg %p45
      $region30: #{basic_block_forward.7} parent=27 // pred_check_branch
        %200 = sbr.rel (%p198) target = $region32
      $region31: #{basic_block_forward.7} parent=27 // pred_region
        %p201 = scmp.lt.s32.totalorder %s18, 1
        %s202 = scalar_select %p201, %s18, 1
        %p203 = scmp.lt.s32.totalorder %s19, 7
        %s204 = scalar_select %p203, %s19, 7
        %s205 = smul.addr %s204, 13
        %s206 = smul.addr %s202, 104
        %s207 = sadd.s32 %s205, %s206
        %s208 = smul.addr %s207, 8
        %s209 = scalar_lea.vmem %s0, %s208
      $region32: #{basic_block_forward.7} parent=27 // pred_fallthru
        _
      // Predicated region
      $region33: #{basic_block_forward.7} parent=27 // pred_check
        %p210 = pneg %p136
      $region34: #{basic_block_forward.7} parent=27 // pred_check_branch
        %212 = sbr.rel (%p210) target = $region36
      $region35: #{basic_block_forward.7} parent=27 // pred_region
        %p213 = scmp.lt.s32.totalorder %s18, 1
        %s214 = scalar_select %p213, %s18, 1
        %p215 = scmp.lt.s32.totalorder %s19, 7
        %s216 = scalar_select %p215, %s19, 7
        %s217 = smul.addr %s216, 13
        %s218 = smul.addr %s214, 104
        %s219 = sadd.s32 %s217, %s218
        %s220 = smul.addr %s219, 8
        %s221 = scalar_lea.vmem %s4, %s220
      $region36: #{basic_block_forward.7} parent=27 // pred_fallthru
        _
    $region28: #{basic_block_forward.7} parent=5 // pred_fallthru
      _
    %p222 = scmp.le.s32.totalorder 1, %s11
    %p223 = scmp.lt.s32.totalorder %s11, 17
    %p224 = pnand %p222, %p223
    %p225 = pneg %p224
    // Predicated region
    $region37: #{basic_block_forward.7} parent=5 // pred_check
      _
    $region38: #{basic_block_forward.7} parent=5 // pred_check_branch
      %227 = sbr.rel (%p224) target = $region40
    $region39: #{basic_block_forward.7} parent=5 // pred_region
      %s228 = ssub.s32 %s11, 1
      %p229 = scmp.lt.s32.totalorder %s20, 1
      %s230 = scalar_select %p229, %s20, 1
      %p231 = scmp.lt.s32.totalorder %s21, 7
      %s232 = scalar_select %p231, %s21, 7
      %s233 = smul.addr %s232, 13
      %s234 = smul.addr %s230, 104
      %s235 = sadd.s32 %s233, %s234
      %s236 = smul.addr %s235, 8
      %s237 = scalar_lea.vmem %s0, %s236
      %p238 = pneg %p51
      %p239 = pneg %p48
      %p240 = pneg %p72
      %p241 = pneg %p69
      %p242 = pneg %p93
      %p243 = pneg %p90
      %p244 = pneg %p114
      %p245 = pneg %p111
      %p246 = scmp.lt.s32.totalorder %s20, 1
      %s247 = scalar_select %p246, %s20, 1
      %p248 = scmp.lt.s32.totalorder %s21, 7
      %s249 = scalar_select %p248, %s21, 7
      %s250 = smul.addr %s249, 13
      %s251 = smul.addr %s247, 104
      %s252 = sadd.s32 %s250, %s251
      %s253 = smul.addr %s252, 8
      %s254 = scalar_lea.vmem %s4, %s253
      %p255 = pneg %p142
      %p256 = pneg %p139
      %p257 = pneg %p170
      %p258 = pneg %p167
      %p259 = scmp.lt.s32.totalorder %s20, 1
      %s260 = scalar_select %p259, %s20, 1
      %p261 = scmp.lt.s32.totalorder %s21, 7
      %s262 = scalar_select %p261, %s21, 7
      %s263 = smul.addr %s262, 13
      %s264 = smul.addr %s260, 104
      %s265 = sadd.s32 %s263, %s264
      %s266 = smul.addr %s265, 8
      %s267 = scalar_lea.vmem %s5, %s266
      %p268 = scmp.lt.s32.totalorder %s20, 1
      %s269 = scalar_select %p268, %s20, 1
      %p270 = scmp.lt.s32.totalorder %s21, 7
      %s271 = scalar_select %p270, %s21, 7
      %s272 = smul.addr %s271, 13
      %s273 = smul.addr %s269, 104
      %s274 = sadd.s32 %s272, %s273
      %s275 = smul.addr %s274, 8
      %s276 = scalar_lea.vmem %s0, %s275
      %p277 = scmp.lt.s32.totalorder %s20, 1
      %s278 = scalar_select %p277, %s20, 1
      %p279 = scmp.lt.s32.totalorder %s21, 7
      %s280 = scalar_select %p279, %s21, 7
      %s281 = smul.addr %s280, 13
      %s282 = smul.addr %s278, 104
      %s283 = sadd.s32 %s281, %s282
      %s284 = smul.addr %s283, 8
      %s285 = scalar_lea.vmem %s4, %s284
      %p286 = scmp.lt.s32.totalorder %s20, 1
      %s287 = scalar_select %p286, %s20, 1
      %p288 = scmp.lt.s32.totalorder %s21, 7
      %s289 = scalar_select %p288, %s21, 7
      %s290 = smul.addr %s289, 13
      %s291 = smul.addr %s287, 104
      %s292 = sadd.s32 %s290, %s291
      %s293 = smul.addr %s292, 8
      %s294 = scalar_lea.vmem %s5, %s293
      %v295 = vld [vmem:[%s276] sm:$0xff]
      %v296 = vld [vmem:[%s276 + $0x8] sm:$0xff]
      %v297 = vld [vmem:[%s276 + $0x10] sm:$0xff]
      %v298 = vld [vmem:[%s276 + $0x18] sm:$0xff]
      %v299 = vld [vmem:[%s276 + $0x20] sm:$0xff]
      %v300 = vld [vmem:[%s276 + $0x28] sm:$0xff]
      %v301 = vld [vmem:[%s276 + $0x30] sm:$0xff]
      %v302 = vld [vmem:[%s276 + $0x38] sm:$0xff]
      %v303 = vld [vmem:[%s276 + $0x40] sm:$0xff]
      %v304 = vld [vmem:[%s276 + $0x48] sm:$0xff]
      %v305 = vld [vmem:[%s276 + $0x50] sm:$0xff]
      %v306 = vld [vmem:[%s276 + $0x58] sm:$0xff]
      %v307 = vld [vmem:[%s276 + $0x60] sm:$0xf]
      %v308 = vld [vmem:[%s1] sm:$0x1]
      %v310 = vperm.slane %v308, 0
      %v312 = vmul.f32 %v295, %v310
      %v313 = vmul.f32 %v296, %v310
      %v314 = vmul.f32 %v297, %v310
      %v315 = vmul.f32 %v298, %v310
      %v316 = vmul.f32 %v299, %v310
      %v317 = vmul.f32 %v300, %v310
      %v318 = vmul.f32 %v301, %v310
      %v319 = vmul.f32 %v302, %v310
      %v320 = vmul.f32 %v303, %v310
      %v321 = vmul.f32 %v304, %v310
      %v322 = vmul.f32 %v305, %v310
      %v323 = vmul.f32 %v306, %v310
      %v324 = vmul.f32 %v307, %v310
      %v325 = vld [vmem:[%s2] sm:$0x1]
      %v327 = vperm.slane %v325, 0
      %v329 = vadd.f32 %v312, %v327
      %v330 = vadd.f32 %v313, %v327
      %v331 = vadd.f32 %v314, %v327
      %v332 = vadd.f32 %v315, %v327
      %v333 = vadd.f32 %v316, %v327
      %v334 = vadd.f32 %v317, %v327
      %v335 = vadd.f32 %v318, %v327
      %v336 = vadd.f32 %v319, %v327
      %v337 = vadd.f32 %v320, %v327
      %v338 = vadd.f32 %v321, %v327
      %v339 = vadd.f32 %v322, %v327
      %v340 = vadd.f32 %v323, %v327
      %v341 = vadd.f32 %v324, %v327
      %v342 = vld [vmem:[%s285] sm:$0xff]
      %v343 = vld [vmem:[%s285 + $0x8] sm:$0xff]
      %v344 = vld [vmem:[%s285 + $0x10] sm:$0xff]
      %v345 = vld [vmem:[%s285 + $0x18] sm:$0xff]
      %v346 = vld [vmem:[%s285 + $0x20] sm:$0xff]
      %v347 = vld [vmem:[%s285 + $0x28] sm:$0xff]
      %v348 = vld [vmem:[%s285 + $0x30] sm:$0xff]
      %v349 = vld [vmem:[%s285 + $0x38] sm:$0xff]
      %v350 = vld [vmem:[%s285 + $0x40] sm:$0xff]
      %v351 = vld [vmem:[%s285 + $0x48] sm:$0xff]
      %v352 = vld [vmem:[%s285 + $0x50] sm:$0xff]
      %v353 = vld [vmem:[%s285 + $0x58] sm:$0xff]
      %v354 = vld [vmem:[%s285 + $0x60] sm:$0xf]
      %v355 = vadd.f32 %v329, %v342
      %v356 = vadd.f32 %v330, %v343
      %v357 = vadd.f32 %v331, %v344
      %v358 = vadd.f32 %v332, %v345
      %v359 = vadd.f32 %v333, %v346
      %v360 = vadd.f32 %v334, %v347
      %v361 = vadd.f32 %v335, %v348
      %v362 = vadd.f32 %v336, %v349
      %v363 = vadd.f32 %v337, %v350
      %v364 = vadd.f32 %v338, %v351
      %v365 = vadd.f32 %v339, %v352
      %v366 = vadd.f32 %v340, %v353
      %v367 = vadd.f32 %v341, %v354
      %v368 = vmax.f32 %v355, 0.0
      %v369 = vmax.f32 %v356, 0.0
      %v370 = vmax.f32 %v357, 0.0
      %v371 = vmax.f32 %v358, 0.0
      %v372 = vmax.f32 %v359, 0.0
      %v373 = vmax.f32 %v360, 0.0
      %v374 = vmax.f32 %v361, 0.0
      %v375 = vmax.f32 %v362, 0.0
      %v376 = vmax.f32 %v363, 0.0
      %v377 = vmax.f32 %v364, 0.0
      %v378 = vmax.f32 %v365, 0.0
      %v379 = vmax.f32 %v366, 0.0
      %v380 = vmax.f32 %v367, 0.0
      %v381 = vld [vmem:[%s3] sm:$0xff]
      %v382 = vld [vmem:[%s3 + $0x8] sm:$0xff]
      %v383 = vld [vmem:[%s3 + $0x10] sm:$0xff]
      %v384 = vld [vmem:[%s3 + $0x18] sm:$0xff]
      %v385 = vld [vmem:[%s3 + $0x20] sm:$0xff]
      %v386 = vld [vmem:[%s3 + $0x28] sm:$0xff]
      %v387 = vld [vmem:[%s3 + $0x30] sm:$0xff]
      %v388 = vld [vmem:[%s3 + $0x38] sm:$0xff]
      %v389 = vld [vmem:[%s3 + $0x40] sm:$0xff]
      %v390 = vld [vmem:[%s3 + $0x48] sm:$0xff]
      %v391 = vld [vmem:[%s3 + $0x50] sm:$0xff]
      %v392 = vld [vmem:[%s3 + $0x58] sm:$0xff]
      %v393 = vld [vmem:[%s3 + $0x60] sm:$0xf]
      %395 = vset.pattern.permute.xlu0 0
      %396 = vperm.xlu0 %395, %v381
      %v397 = vpop.permute.xlu0 %396
      %400 = vset.pattern.permute.xlu0 0
      %401 = vperm.xlu0 %400, %v382
      %v402 = vpop.permute.xlu0 %401
      %405 = vset.pattern.permute.xlu0 0
      %406 = vperm.xlu0 %405, %v383
      %v407 = vpop.permute.xlu0 %406
      %410 = vset.pattern.permute.xlu0 0
      %411 = vperm.xlu0 %410, %v384
      %v412 = vpop.permute.xlu0 %411
      %415 = vset.pattern.permute.xlu0 0
      %416 = vperm.xlu0 %415, %v385
      %v417 = vpop.permute.xlu0 %416
      %420 = vset.pattern.permute.xlu0 0
      %421 = vperm.xlu0 %420, %v386
      %v422 = vpop.permute.xlu0 %421
      %425 = vset.pattern.permute.xlu0 0
      %426 = vperm.xlu0 %425, %v387
      %v427 = vpop.permute.xlu0 %426
      %430 = vset.pattern.permute.xlu0 0
      %431 = vperm.xlu0 %430, %v388
      %v432 = vpop.permute.xlu0 %431
      %435 = vset.pattern.permute.xlu0 0
      %436 = vperm.xlu0 %435, %v389
      %v437 = vpop.permute.xlu0 %436
      %440 = vset.pattern.permute.xlu0 0
      %441 = vperm.xlu0 %440, %v390
      %v442 = vpop.permute.xlu0 %441
      %445 = vset.pattern.permute.xlu0 0
      %446 = vperm.xlu0 %445, %v391
      %v447 = vpop.permute.xlu0 %446
      %450 = vset.pattern.permute.xlu0 0
      %451 = vperm.xlu0 %450, %v392
      %v452 = vpop.permute.xlu0 %451
      %455 = vset.pattern.permute.xlu0 0
      %456 = vperm.xlu0 %455, %v393
      %v457 = vpop.permute.xlu0 %456
      %v459 = vmul.f32 %v368, %v397
      %v460 = vmul.f32 %v369, %v402
      %v461 = vmul.f32 %v370, %v407
      %v462 = vmul.f32 %v371, %v412
      %v463 = vmul.f32 %v372, %v417
      %v464 = vmul.f32 %v373, %v422
      %v465 = vmul.f32 %v374, %v427
      %v466 = vmul.f32 %v375, %v432
      %v467 = vmul.f32 %v376, %v437
      %v468 = vmul.f32 %v377, %v442
      %v469 = vmul.f32 %v378, %v447
      %v470 = vmul.f32 %v379, %v452
      %v471 = vmul.f32 %v380, %v457
      %472 = vst [vmem:[%s294] sm:$0xff] %v459
      %473 = vst [vmem:[%s294 + $0x8] sm:$0xff] %v460
      %474 = vst [vmem:[%s294 + $0x10] sm:$0xff] %v461
      %475 = vst [vmem:[%s294 + $0x18] sm:$0xff] %v462
      %476 = vst [vmem:[%s294 + $0x20] sm:$0xff] %v463
      %477 = vst [vmem:[%s294 + $0x28] sm:$0xff] %v464
      %478 = vst [vmem:[%s294 + $0x30] sm:$0xff] %v465
      %479 = vst [vmem:[%s294 + $0x38] sm:$0xff] %v466
      %480 = vst [vmem:[%s294 + $0x40] sm:$0xff] %v467
      %481 = vst [vmem:[%s294 + $0x48] sm:$0xff] %v468
      %482 = vst [vmem:[%s294 + $0x50] sm:$0xff] %v469
      %483 = vst [vmem:[%s294 + $0x58] sm:$0xff] %v470
      %484 = vst [vmem:[%s294 + $0x60] sm:$0xf] %v471
      %p485 = scmp.lt.s32.totalorder %s20, 1
      %s486 = scalar_select %p485, %s20, 1
      %p487 = scmp.lt.s32.totalorder %s21, 7
      %s488 = scalar_select %p487, %s21, 7
      %s489 = smul.addr %s488, 13
      %s490 = smul.addr %s486, 104
      %s491 = sadd.s32 %s489, %s490
      %s492 = smul.addr %s491, 8
      %s493 = scalar_lea.vmem %s5, %s492
      // Predicated region
      $region41: #{basic_block_forward.7} parent=39 // pred_check
        %p494 = pneg %p167
      $region42: #{basic_block_forward.7} parent=39 // pred_check_branch
        %496 = sbr.rel (%p494) target = $region44
      $region43: #{basic_block_forward.7} parent=39 // pred_region
        _
      $region44: #{basic_block_forward.7} parent=39 // pred_fallthru
        _
    $region40: #{basic_block_forward.7} parent=5 // pred_fallthru
      _
    %p497 = scmp.le.s32.totalorder 2, %s11
    // Predicated region
    $region45: #{basic_block_forward.7} parent=5 // pred_check
      %p498 = pneg %p497
    $region46: #{basic_block_forward.7} parent=5 // pred_check_branch
      %500 = sbr.rel (%p498) target = $region48
    $region47: #{basic_block_forward.7} parent=5 // pred_region
      %s501 = ssub.s32 %s11, 2
      // Predicated region
      $region49: #{basic_block_forward.7} parent=47 // pred_check
        %p502 = pneg %p173
      $region50: #{basic_block_forward.7} parent=47 // pred_check_branch
        %504 = sbr.rel (%p502) target = $region52
      $region51: #{basic_block_forward.7} parent=47 // pred_region
        %p505 = scmp.lt.s32.totalorder %s22, 1
        %s506 = scalar_select %p505, %s22, 1
        %p507 = scmp.lt.s32.totalorder %s23, 7
        %s508 = scalar_select %p507, %s23, 7
        %s509 = smul.addr %s508, 13
        %s510 = smul.addr %s506, 104
        %s511 = sadd.s32 %s509, %s510
        %s512 = smul.addr %s511, 8
        %s513 = scalar_lea.vmem %s5, %s512
      $region52: #{basic_block_forward.7} parent=47 // pred_fallthru
        _
    $region48: #{basic_block_forward.7} parent=5 // pred_fallthru
      _
  $region6: #{basic_block_forward.7} parent=0 // loop_footer
    %s15 = sadd.s32 1, %s11
  $region7: #{basic_block_forward.7} parent=0 // loop_footer_branch
    %10 = sbr.rel target = $region3
  $region8: #{basic_block_forward.7} parent=0 // loop_exit
    _

// kernel: basic_block_forward.4
$region0: #{basic_block_forward.4}
  #allocation0 [shape = 'u32[]', space=smem, size = 0x4, offset = 0x4, fixed_abs, tag = 'smem constant byte address 0x4 - core index']
  #allocation1 [shape = 'u32[72,128]{1,0:T(1,128)}', space=vmem, size = 0x9000, scoped, tag = 'internal scratch']
  %s0 = inlined_call_operand.vmem [shape: f32[2,10,122,128], index: 0, kind: input, shape index: {}, may-alias: {0,1,2}]
  %s1 = inlined_call_operand.vmem [shape: f32[2,10,122,128], index: 1, kind: input, shape index: {}, may-alias: {0,1,2}]
  %s2 = inlined_call_operand.vmem [shape: f32[2,10,122,128], index: 2, kind: input, shape index: {}, may-alias: {0,1,2}]
  %s3 = inlined_call_operand.vmem [shape: bf16[27,128,128], index: 3, kind: input, shape index: {}]
  %s4 = inlined_call_operand.vmem [shape: f32[100,1], index: 4, kind: input, shape index: {}]
  %s5 = inlined_call_operand.vmem [shape: f32[2,8,100,128], index: 5, kind: output, shape index: {0}]
  %s6 = inlined_call_operand.vmem [shape: f32[1,128], index: 6, kind: output, shape index: {1}]
  %s7 = inlined_call_operand.vmem [shape: f32[1,128], index: 7, kind: output, shape index: {2}]
  %8 = xla_tuple %s5, %s6, %s7
  %s9 = sld [smem:[#allocation0]]
  $region73: #{basic_block_forward.4} parent=0
    _
  %s11 = ssub.s32 1, %s9
  %s12 = scalar_select 0, %s11, %s9
  loop: start=0, step=1, limit=18
  $region2: #{basic_block_forward.4} parent=0 // loop_pre_header
    _
  $region3: #{basic_block_forward.4} parent=0 // loop_header
    %s14 = sphi 0, %s18
    %p15 = scmp.ge.s32.totalorder %s14, 18
    %s21 = sphi 0, %s33
    %s22 = sphi 0, %s29
    %s23 = sphi 0, %s21
    %s24 = sphi 0, %s22
    %s25 = sphi 0, %s23
    %s26 = sphi 0, %s24
    %s38 = sphi 0, %s40
    %s41 = sphi 0, %s38
    %s42 = sphi 0, %s41
    %s58 = sphi 0, %s42
    %s68 = sphi 0, %s70
    %s71 = sphi 0, %s68
    %s72 = sphi 0, %s71
    %s88 = sphi 0, %s72
    %s98 = sphi 0, %s100
    %s101 = sphi 0, %s98
    %s102 = sphi 0, %s101
    %s118 = sphi 0, %s102
    %s122 = sphi 0, %s122
    %s124 = sphi 0, %s122
    %s125 = sphi 0, %s124
    %s139 = sphi 0, %s125
    %s143 = sphi 0, %s143
    %s145 = sphi 0, %s143
    %s146 = sphi 0, %s145
    %s160 = sphi 0, %s146
    %s168 = sphi 0, %s170
    %s171 = sphi 0, %s168
    %s172 = sphi 0, %s171
    %s188 = sphi 0, %s172
    %s192 = sphi 0, %s192
    %s194 = sphi 0, %s192
    %s195 = sphi 0, %s194
    %s209 = sphi 0, %s195
    %s213 = sphi 0, %s213
    %s215 = sphi 0, %s213
    %s216 = sphi 0, %s215
    %s230 = sphi 0, %s216
  $region4: #{basic_block_forward.4} parent=0 // loop_header_branch
    %17 = sbr.rel (%p15) target = $region8
  $region5: #{basic_block_forward.4} parent=0 // loop_body
    %s19 = ssub.s32 %s14, 1
    %s20 = ssub.s32 %s14, 2
    %s27 = sadd.s32 1, %s22
    %p28 = scmp.ge.s32.totalorder %s27, 8
    %s29 = scalar_select %p28, 0, %s27
    %s30 = sadd.s32 1, %s21
    %s31 = scalar_select %p28, %s30, %s21
    %p32 = scmp.ge.s32.totalorder %s31, 2
    %s33 = scalar_select %p32, 0, %s31
    %s34 = ssub.s32 %s21, %s33
    %s35 = ssub.s32 %s22, %s29
    %s36 = sor.u32 %s34, %s35
    %p37 = scmp.eq.s32.totalorder %s36, 0
    %s39 = sadd.s32 %s38, 1
    %s40 = scalar_select %p37, %s38, %s39
    %p43 = pneg %p37
    %p44 = scmp.eq.s32.totalorder %s14, 15
    %p45 = por %p43, %p44
    %p46 = scmp.ne.s32.totalorder %s38, %s41
    %p47 = scmp.eq.s32.totalorder %s14, 0
    %p48 = por %p46, %p47
    %p49 = scmp.ne.s32.totalorder %s38, %s41
    %p50 = scmp.eq.s32.totalorder %s19, 15
    %p51 = por %p49, %p50
    %p52 = scmp.ne.s32.totalorder %s41, %s42
    %p53 = scmp.eq.s32.totalorder %s19, 0
    %p54 = por %p52, %p53
    %p55 = scmp.ne.s32.totalorder %s41, %s42
    %p56 = scmp.eq.s32.totalorder %s20, 15
    %p57 = por %p55, %p56
    %p59 = scmp.ne.s32.totalorder %s42, %s58
    %p60 = scmp.eq.s32.totalorder %s20, 0
    %p61 = por %p59, %p60
    %s62 = sadd.s32 %s22, 1
    %s63 = sadd.s32 %s29, 1
    %s64 = ssub.s32 %s21, %s33
    %s65 = ssub.s32 %s62, %s63
    %s66 = sor.u32 %s64, %s65
    %p67 = scmp.eq.s32.totalorder %s66, 0
    %s69 = sadd.s32 %s68, 1
    %s70 = scalar_select %p67, %s68, %s69
    %p73 = pneg %p67
    %p74 = scmp.eq.s32.totalorder %s14, 15
    %p75 = por %p73, %p74
    %p76 = scmp.ne.s32.totalorder %s68, %s71
    %p77 = scmp.eq.s32.totalorder %s14, 0
    %p78 = por %p76, %p77
    %p79 = scmp.ne.s32.totalorder %s68, %s71
    %p80 = scmp.eq.s32.totalorder %s19, 15
    %p81 = por %p79, %p80
    %p82 = scmp.ne.s32.totalorder %s71, %s72
    %p83 = scmp.eq.s32.totalorder %s19, 0
    %p84 = por %p82, %p83
    %p85 = scmp.ne.s32.totalorder %s71, %s72
    %p86 = scmp.eq.s32.totalorder %s20, 15
    %p87 = por %p85, %p86
    %p89 = scmp.ne.s32.totalorder %s72, %s88
    %p90 = scmp.eq.s32.totalorder %s20, 0
    %p91 = por %p89, %p90
    %s92 = sadd.s32 %s22, 2
    %s93 = sadd.s32 %s29, 2
    %s94 = ssub.s32 %s21, %s33
    %s95 = ssub.s32 %s92, %s93
    %s96 = sor.u32 %s94, %s95
    %p97 = scmp.eq.s32.totalorder %s96, 0
    %s99 = sadd.s32 %s98, 1
    %s100 = scalar_select %p97, %s98, %s99
    %p103 = pneg %p97
    %p104 = scmp.eq.s32.totalorder %s14, 15
    %p105 = por %p103, %p104
    %p106 = scmp.ne.s32.totalorder %s98, %s101
    %p107 = scmp.eq.s32.totalorder %s14, 0
    %p108 = por %p106, %p107
    %p109 = scmp.ne.s32.totalorder %s98, %s101
    %p110 = scmp.eq.s32.totalorder %s19, 15
    %p111 = por %p109, %p110
    %p112 = scmp.ne.s32.totalorder %s101, %s102
    %p113 = scmp.eq.s32.totalorder %s19, 0
    %p114 = por %p112, %p113
    %p115 = scmp.ne.s32.totalorder %s101, %s102
    %p116 = scmp.eq.s32.totalorder %s20, 15
    %p117 = por %p115, %p116
    %p119 = scmp.ne.s32.totalorder %s102, %s118
    %p120 = scmp.eq.s32.totalorder %s20, 0
    %p121 = por %p119, %p120
    %s123 = sadd.s32 %s122, 1
    %p126 = scmp.eq.s32.totalorder %s14, 15
    %p127 = scmp.ne.s32.totalorder %s122, %s124
    %p128 = scmp.eq.s32.totalorder %s14, 0
    %p129 = por %p127, %p128
    %p130 = scmp.ne.s32.totalorder %s122, %s124
    %p131 = scmp.eq.s32.totalorder %s19, 15
    %p132 = por %p130, %p131
    %p133 = scmp.ne.s32.totalorder %s124, %s125
    %p134 = scmp.eq.s32.totalorder %s19, 0
    %p135 = por %p133, %p134
    %p136 = scmp.ne.s32.totalorder %s124, %s125
    %p137 = scmp.eq.s32.totalorder %s20, 15
    %p138 = por %p136, %p137
    %p140 = scmp.ne.s32.totalorder %s125, %s139
    %p141 = scmp.eq.s32.totalorder %s20, 0
    %p142 = por %p140, %p141
    %s144 = sadd.s32 %s143, 1
    %p147 = scmp.eq.s32.totalorder %s14, 15
    %p148 = scmp.ne.s32.totalorder %s143, %s145
    %p149 = scmp.eq.s32.totalorder %s14, 0
    %p150 = por %p148, %p149
    %p151 = scmp.ne.s32.totalorder %s143, %s145
    %p152 = scmp.eq.s32.totalorder %s19, 15
    %p153 = por %p151, %p152
    %p154 = scmp.ne.s32.totalorder %s145, %s146
    %p155 = scmp.eq.s32.totalorder %s19, 0
    %p156 = por %p154, %p155
    %p157 = scmp.ne.s32.totalorder %s145, %s146
    %p158 = scmp.eq.s32.totalorder %s20, 15
    %p159 = por %p157, %p158
    %p161 = scmp.ne.s32.totalorder %s146, %s160
    %p162 = scmp.eq.s32.totalorder %s20, 0
    %p163 = por %p161, %p162
    %s164 = ssub.s32 %s21, %s33
    %s165 = ssub.s32 %s22, %s29
    %s166 = sor.u32 %s164, %s165
    %p167 = scmp.eq.s32.totalorder %s166, 0
    %s169 = sadd.s32 %s168, 1
    %s170 = scalar_select %p167, %s168, %s169
    %p173 = pneg %p167
    %p174 = scmp.eq.s32.totalorder %s14, 15
    %p175 = por %p173, %p174
    %p176 = scmp.ne.s32.totalorder %s168, %s171
    %p177 = scmp.eq.s32.totalorder %s14, 0
    %p178 = por %p176, %p177
    %p179 = scmp.ne.s32.totalorder %s168, %s171
    %p180 = scmp.eq.s32.totalorder %s19, 15
    %p181 = por %p179, %p180
    %p182 = scmp.ne.s32.totalorder %s171, %s172
    %p183 = scmp.eq.s32.totalorder %s19, 0
    %p184 = por %p182, %p183
    %p185 = scmp.ne.s32.totalorder %s171, %s172
    %p186 = scmp.eq.s32.totalorder %s20, 15
    %p187 = por %p185, %p186
    %p189 = scmp.ne.s32.totalorder %s172, %s188
    %p190 = scmp.eq.s32.totalorder %s20, 0
    %p191 = por %p189, %p190
    %s193 = sadd.s32 %s192, 1
    %p196 = scmp.eq.s32.totalorder %s14, 15
    %p197 = scmp.ne.s32.totalorder %s192, %s194
    %p198 = scmp.eq.s32.totalorder %s14, 0
    %p199 = por %p197, %p198
    %p200 = scmp.ne.s32.totalorder %s192, %s194
    %p201 = scmp.eq.s32.totalorder %s19, 15
    %p202 = por %p200, %p201
    %p203 = scmp.ne.s32.totalorder %s194, %s195
    %p204 = scmp.eq.s32.totalorder %s19, 0
    %p205 = por %p203, %p204
    %p206 = scmp.ne.s32.totalorder %s194, %s195
    %p207 = scmp.eq.s32.totalorder %s20, 15
    %p208 = por %p206, %p207
    %p210 = scmp.ne.s32.totalorder %s195, %s209
    %p211 = scmp.eq.s32.totalorder %s20, 0
    %p212 = por %p210, %p211
    %s214 = sadd.s32 %s213, 1
    %p217 = scmp.eq.s32.totalorder %s14, 15
    %p218 = scmp.ne.s32.totalorder %s213, %s215
    %p219 = scmp.eq.s32.totalorder %s14, 0
    %p220 = por %p218, %p219
    %p221 = scmp.ne.s32.totalorder %s213, %s215
    %p222 = scmp.eq.s32.totalorder %s19, 15
    %p223 = por %p221, %p222
    %p224 = scmp.ne.s32.totalorder %s215, %s216
    %p225 = scmp.eq.s32.totalorder %s19, 0
    %p226 = por %p224, %p225
    %p227 = scmp.ne.s32.totalorder %s215, %s216
    %p228 = scmp.eq.s32.totalorder %s20, 15
    %p229 = por %p227, %p228
    %p231 = scmp.ne.s32.totalorder %s216, %s230
    %p232 = scmp.eq.s32.totalorder %s20, 0
    %p233 = por %p231, %p232
    %p234 = scmp.le.s32.totalorder 1, %s14
    %p235 = scmp.lt.s32.totalorder %s14, 17
    %p236 = pnand %p234, %p235
    %p237 = pneg %p236
    // Predicated region
    $region9: #{basic_block_forward.4} parent=5 // pred_check
      _
    $region10: #{basic_block_forward.4} parent=5 // pred_check_branch
      %239 = sbr.rel (%p236) target = $region12
    $region11: #{basic_block_forward.4} parent=5 // pred_region
      %s240 = ssub.s32 %s14, 1
      // Predicated region
      $region13: #{basic_block_forward.4} parent=11 // pred_check
        %p241 = pneg %p135
      $region14: #{basic_block_forward.4} parent=11 // pred_check_branch
        %243 = sbr.rel (%p241) target = $region16
      $region15: #{basic_block_forward.4} parent=11 // pred_region
        _
      $region16: #{basic_block_forward.4} parent=11 // pred_fallthru
        _
      // Predicated region
      $region17: #{basic_block_forward.4} parent=11 // pred_check
        %p244 = pneg %p156
      $region18: #{basic_block_forward.4} parent=11 // pred_check_branch
        %246 = sbr.rel (%p244) target = $region20
      $region19: #{basic_block_forward.4} parent=11 // pred_region
        _
      $region20: #{basic_block_forward.4} parent=11 // pred_fallthru
        _
    $region12: #{basic_block_forward.4} parent=5 // pred_fallthru
      _
    %p247 = scmp.lt.s32.totalorder %s14, 16
    // Predicated region
    $region21: #{basic_block_forward.4} parent=5 // pred_check
      %p248 = pneg %p247
    $region22: #{basic_block_forward.4} parent=5 // pred_check_branch
      %250 = sbr.rel (%p248) target = $region24
    $region23: #{basic_block_forward.4} parent=5 // pred_region
      // Predicated region
      $region25: #{basic_block_forward.4} parent=23 // pred_check
        %p251 = pneg %p48
      $region26: #{basic_block_forward.4} parent=23 // pred_check_branch
        %253 = sbr.rel (%p251) target = $region28
      $region27: #{basic_block_forward.4} parent=23 // pred_region
        %p254 = scmp.lt.s32.totalorder %s21, 1
        %s255 = scalar_select %p254, %s21, 1
        %p256 = scmp.lt.s32.totalorder %s22, 9
        %s257 = scalar_select %p256, %s22, 9
        %s258 = smul.addr %s257, 16
        %s259 = smul.addr %s255, 160
        %s260 = sadd.s32 %s258, %s259
        %s261 = smul.addr %s260, 8
        %s262 = scalar_lea.vmem %s0, %s261
      $region28: #{basic_block_forward.4} parent=23 // pred_fallthru
        _
      // Predicated region
      $region29: #{basic_block_forward.4} parent=23 // pred_check
        %p263 = pneg %p78
      $region30: #{basic_block_forward.4} parent=23 // pred_check_branch
        %265 = sbr.rel (%p263) target = $region32
      $region31: #{basic_block_forward.4} parent=23 // pred_region
        %s266 = sadd.s32 %s22, 1
        %p267 = scmp.lt.s32.totalorder %s21, 1
        %s268 = scalar_select %p267, %s21, 1
        %p269 = scmp.lt.s32.totalorder %s266, 9
        %s270 = scalar_select %p269, %s266, 9
        %s271 = smul.addr %s270, 16
        %s272 = smul.addr %s268, 160
        %s273 = sadd.s32 %s271, %s272
        %s274 = smul.addr %s273, 8
        %s275 = scalar_lea.vmem %s1, %s274
        %s276 = sadd.s32 %s22, 1
      $region32: #{basic_block_forward.4} parent=23 // pred_fallthru
        _
      // Predicated region
      $region33: #{basic_block_forward.4} parent=23 // pred_check
        %p277 = pneg %p108
      $region34: #{basic_block_forward.4} parent=23 // pred_check_branch
        %279 = sbr.rel (%p277) target = $region36
      $region35: #{basic_block_forward.4} parent=23 // pred_region
        %s280 = sadd.s32 %s22, 2
        %p281 = scmp.lt.s32.totalorder %s21, 1
        %s282 = scalar_select %p281, %s21, 1
        %p283 = scmp.lt.s32.totalorder %s280, 9
        %s284 = scalar_select %p283, %s280, 9
        %s285 = smul.addr %s284, 16
        %s286 = smul.addr %s282, 160
        %s287 = sadd.s32 %s285, %s286
        %s288 = smul.addr %s287, 8
        %s289 = scalar_lea.vmem %s2, %s288
        %s290 = sadd.s32 %s22, 2
      $region36: #{basic_block_forward.4} parent=23 // pred_fallthru
        _
    $region24: #{basic_block_forward.4} parent=5 // pred_fallthru
      _
    %p291 = scmp.le.s32.totalorder 1, %s14
    %p292 = scmp.lt.s32.totalorder %s14, 17
    %p293 = pnand %p291, %p292
    %p294 = pneg %p293
    // Predicated region
    $region37: #{basic_block_forward.4} parent=5 // pred_check
      _
    $region38: #{basic_block_forward.4} parent=5 // pred_check_branch
      %296 = sbr.rel (%p293) target = $region40
    $region39: #{basic_block_forward.4} parent=5 // pred_region
      %s297 = ssub.s32 %s14, 1
      %p298 = scmp.lt.s32.totalorder %s23, 1
      %s299 = scalar_select %p298, %s23, 1
      %p300 = scmp.lt.s32.totalorder %s24, 9
      %s301 = scalar_select %p300, %s24, 9
      %s302 = smul.addr %s301, 16
      %s303 = smul.addr %s299, 160
      %s304 = sadd.s32 %s302, %s303
      %s305 = smul.addr %s304, 8
      %s306 = scalar_lea.vmem %s0, %s305
      %p307 = pneg %p54
      %p308 = pneg %p51
      %s309 = sadd.s32 %s24, 1
      %p310 = scmp.lt.s32.totalorder %s23, 1
      %s311 = scalar_select %p310, %s23, 1
      %p312 = scmp.lt.s32.totalorder %s309, 9
      %s313 = scalar_select %p312, %s309, 9
      %s314 = smul.addr %s313, 16
      %s315 = smul.addr %s311, 160
      %s316 = sadd.s32 %s314, %s315
      %s317 = smul.addr %s316, 8
      %s318 = scalar_lea.vmem %s1, %s317
      %p319 = pneg %p84
      %p320 = pneg %p81
      %s321 = sadd.s32 %s24, 2
      %p322 = scmp.lt.s32.totalorder %s23, 1
      %s323 = scalar_select %p322, %s23, 1
      %p324 = scmp.lt.s32.totalorder %s321, 9
      %s325 = scalar_select %p324, %s321, 9
      %s326 = smul.addr %s325, 16
      %s327 = smul.addr %s323, 160
      %s328 = sadd.s32 %s326, %s327
      %s329 = smul.addr %s328, 8
      %s330 = scalar_lea.vmem %s2, %s329
      %p331 = pneg %p114
      %p332 = pneg %p111
      %p333 = pneg %p135
      %p334 = pneg %p132
      %p335 = pneg %p156
      %p336 = pneg %p153
      %p337 = pneg %p184
      %p338 = pneg %p181
      %p339 = scmp.lt.s32.totalorder %s23, 1
      %s340 = scalar_select %p339, %s23, 1
      %p341 = scmp.lt.s32.totalorder %s24, 7
      %s342 = scalar_select %p341, %s24, 7
      %s343 = smul.addr %s342, 13
      %s344 = smul.addr %s340, 104
      %s345 = sadd.s32 %s343, %s344
      %s346 = smul.addr %s345, 8
      %s347 = scalar_lea.vmem %s5, %s346
      %p348 = pneg %p205
      %p349 = pneg %p202
      %p350 = pneg %p226
      %p351 = pneg %p223
      %p352 = scmp.lt.s32.totalorder %s23, 1
      %s353 = scalar_select %p352, %s23, 1
      %p354 = scmp.lt.s32.totalorder %s24, 9
      %s355 = scalar_select %p354, %s24, 9
      %s356 = smul.addr %s355, 16
      %s357 = smul.addr %s353, 160
      %s358 = sadd.s32 %s356, %s357
      %s359 = smul.addr %s358, 8
      %s360 = scalar_lea.vmem %s0, %s359
      %s361 = sadd.s32 %s24, 1
      %p362 = scmp.lt.s32.totalorder %s23, 1
      %s363 = scalar_select %p362, %s23, 1
      %p364 = scmp.lt.s32.totalorder %s361, 9
      %s365 = scalar_select %p364, %s361, 9
      %s366 = smul.addr %s365, 16
      %s367 = smul.addr %s363, 160
      %s368 = sadd.s32 %s366, %s367
      %s369 = smul.addr %s368, 8
      %s370 = scalar_lea.vmem %s1, %s369
      %s371 = sadd.s32 %s24, 1
      %s372 = sadd.s32 %s24, 2
      %p373 = scmp.lt.s32.totalorder %s23, 1
      %s374 = scalar_select %p373, %s23, 1
      %p375 = scmp.lt.s32.totalorder %s372, 9
      %s376 = scalar_select %p375, %s372, 9
      %s377 = smul.addr %s376, 16
      %s378 = smul.addr %s374, 160
      %s379 = sadd.s32 %s377, %s378
      %s380 = smul.addr %s379, 8
      %s381 = scalar_lea.vmem %s2, %s380
      %s382 = sadd.s32 %s24, 2
      %p383 = scmp.lt.s32.totalorder %s23, 1
      %s384 = scalar_select %p383, %s23, 1
      %p385 = scmp.lt.s32.totalorder %s24, 7
      %s386 = scalar_select %p385, %s24, 7
      %s387 = smul.addr %s386, 13
      %s388 = smul.addr %s384, 104
      %s389 = sadd.s32 %s387, %s388
      %s390 = smul.addr %s389, 8
      %s391 = scalar_lea.vmem %s5, %s390
      %p392 = scmp.eq.s32.totalorder %s23, 0
      %p393 = scmp.eq.s32.totalorder %s24, 0
      %p394 = pnand %p392, %p393
      %p395 = pneg %p394
      // Predicated region
      $region41: #{basic_block_forward.4} parent=39 // pred_check
        _
      $region42: #{basic_block_forward.4} parent=39 // pred_check_branch
        %397 = sbr.rel (%p394) target = $region44
      $region43: #{basic_block_forward.4} parent=39 // pred_region
        %398 = vst [vmem:[%s6] sm:$0x1] 0.0
        %399 = vst [vmem:[%s7] sm:$0x1] 0.0
      $region44: #{basic_block_forward.4} parent=39 // pred_fallthru
        _
      %v400 = vld [vmem:[%s360] sm:$0xff]
      %v401 = vld [vmem:[%s360 + $0x8] sm:$0xff]
      %v402 = vld [vmem:[%s360 + $0x10] sm:$0xff]
      %v403 = vld [vmem:[%s360 + $0x18] sm:$0xff]
      %v404 = vld [vmem:[%s360 + $0x20] sm:$0xff]
      %v405 = vld [vmem:[%s360 + $0x28] sm:$0xff]
      %v406 = vld [vmem:[%s360 + $0x30] sm:$0xff]
      %v407 = vld [vmem:[%s360 + $0x38] sm:$0xff]
      %v408 = vld [vmem:[%s360 + $0x40] sm:$0xff]
      %v409 = vld [vmem:[%s360 + $0x48] sm:$0xff]
      %v410 = vld [vmem:[%s360 + $0x50] sm:$0xff]
      %v411 = vld [vmem:[%s360 + $0x58] sm:$0xff]
      %v412 = vld [vmem:[%s360 + $0x60] sm:$0xf]
      %v413 = vpack.c.bf16 %v401, %v400
      %v414 = vpack.c.bf16 %v403, %v402
      %v415 = vpack.c.bf16 %v405, %v404
      %v416 = vpack.c.bf16 %v407, %v406
      %v417 = vpack.c.bf16 %v409, %v408
      %v418 = vpack.c.bf16 %v411, %v410
      %v419 = vpack.c.bf16 %v412, %v412
      %v420 = vld [vmem:[%s3] sm:$0xf]
      %v421 = vld [vmem:[%s3 + $0x4] sm:$0xf]
      %v422 = vld [vmem:[%s3 + $0x8] sm:$0xf]
      %v423 = vld [vmem:[%s3 + $0xc] sm:$0xf]
      %v424 = vld [vmem:[%s3 + $0x10] sm:$0xf]
      %v425 = vld [vmem:[%s3 + $0x14] sm:$0xf]
      %v426 = vld [vmem:[%s3 + $0x18] sm:$0xf]
      %v427 = vld [vmem:[%s3 + $0x1c] sm:$0xf]
      %v428 = vld [vmem:[%s3 + $0x20] sm:$0xf]
      %v429 = vld [vmem:[%s3 + $0x24] sm:$0xf]
      %v430 = vld [vmem:[%s3 + $0x28] sm:$0xf]
      %v431 = vld [vmem:[%s3 + $0x2c] sm:$0xf]
      %v432 = vld [vmem:[%s3 + $0x30] sm:$0xf]
      %v433 = vld [vmem:[%s3 + $0x34] sm:$0xf]
      %v434 = vld [vmem:[%s3 + $0x38] sm:$0xf]
      %v435 = vld [vmem:[%s3 + $0x3c] sm:$0xf]
      %v436 = vld [vmem:[%s360 + $0x1] sm:$0xff]
      %v437 = vld [vmem:[%s360 + $0x9] sm:$0xff]
      %v438 = vld [vmem:[%s360 + $0x11] sm:$0xff]
      %v439 = vld [vmem:[%s360 + $0x19] sm:$0xff]
      %v440 = vld [vmem:[%s360 + $0x21] sm:$0xff]
      %v441 = vld [vmem:[%s360 + $0x29] sm:$0xff]
      %v442 = vld [vmem:[%s360 + $0x31] sm:$0xff]
      %v443 = vld [vmem:[%s360 + $0x39] sm:$0xff]
      %v444 = vld [vmem:[%s360 + $0x41] sm:$0xff]
      %v445 = vld [vmem:[%s360 + $0x49] sm:$0xff]
      %v446 = vld [vmem:[%s360 + $0x51] sm:$0xff]
      %v447 = vld [vmem:[%s360 + $0x59] sm:$0xff]
      %v448 = vld [vmem:[%s360 + $0x61] sm:$0xf]
      %v449 = vpack.c.bf16 %v437, %v436
      %v450 = vpack.c.bf16 %v439, %v438
      %v451 = vpack.c.bf16 %v441, %v440
      %v452 = vpack.c.bf16 %v443, %v442
      %v453 = vpack.c.bf16 %v445, %v444
      %v454 = vpack.c.bf16 %v447, %v446
      %v455 = vpack.c.bf16 %v448, %v448
      %s456 = scalar_lea.vmem %s3, 64
      %v457 = vld [vmem:[%s456] sm:$0xf]
      %v458 = vld [vmem:[%s456 + $0x4] sm:$0xf]
      %v459 = vld [vmem:[%s456 + $0x8] sm:$0xf]
      %v460 = vld [vmem:[%s456 + $0xc] sm:$0xf]
      %v461 = vld [vmem:[%s456 + $0x10] sm:$0xf]
      %v462 = vld [vmem:[%s456 + $0x14] sm:$0xf]
      %v463 = vld [vmem:[%s456 + $0x18] sm:$0xf]
      %v464 = vld [vmem:[%s456 + $0x1c] sm:$0xf]
      %v465 = vld [vmem:[%s456 + $0x20] sm:$0xf]
      %v466 = vld [vmem:[%s456 + $0x24] sm:$0xf]
      %v467 = vld [vmem:[%s456 + $0x28] sm:$0xf]
      %v468 = vld [vmem:[%s456 + $0x2c] sm:$0xf]
      %v469 = vld [vmem:[%s456 + $0x30] sm:$0xf]
      %v470 = vld [vmem:[%s456 + $0x34] sm:$0xf]
      %v471 = vld [vmem:[%s456 + $0x38] sm:$0xf]
      %v472 = vld [vmem:[%s456 + $0x3c] sm:$0xf]
      %v489 = vunpack.c.l.b16 %v457
      %v490 = vunpack.c.l.b16 %v458
      %v491 = vunpack.c.l.b16 %v459
      %v492 = vunpack.c.l.b16 %v460
      %v493 = vunpack.c.l.b16 %v461
      %v494 = vunpack.c.l.b16 %v462
      %v495 = vunpack.c.l.b16 %v463
      %v496 = vunpack.c.l.b16 %v464
      %v497 = vunpack.c.l.b16 %v465
      %v498 = vunpack.c.l.b16 %v466
      %v499 = vunpack.c.l.b16 %v467
      %v500 = vunpack.c.l.b16 %v468
      %v501 = vunpack.c.l.b16 %v469
      %v502 = vunpack.c.l.b16 %v470
      %v503 = vunpack.c.l.b16 %v471
      %v504 = vunpack.c.l.b16 %v472
      %v505 = vpack.c.b16 %v490, %v489
      %v506 = vpack.c.b16 %v492, %v491
      %v507 = vpack.c.b16 %v494, %v493
      %v508 = vpack.c.b16 %v496, %v495
      %v509 = vpack.c.b16 %v498, %v497
      %v510 = vpack.c.b16 %v500, %v499
      %v511 = vpack.c.b16 %v502, %v501
      %v512 = vpack.c.b16 %v504, %v503
      %521 = vmatpush.bf16.msra.mxu0 %v512
      %522 = vmatpush.bf16.msra.mxu0 %v511
      %523 = vmatpush.bf16.msra.mxu0 %v510
      %524 = vmatpush.bf16.msra.mxu0 %v509
      %525 = vmatpush.bf16.msra.mxu0 %v508
      %526 = vmatpush.bf16.msra.mxu0 %v507
      %527 = vmatpush.bf16.msra.mxu0 %v506
      %528 = vmatpush.bf16.msra.mxu0 %v505
      %529 = vmatmul.bf16.gmra.mxu0 %v449
      %v530 = vpop.f32.mrf.mxu0
      %v531 = vadd.f32 0.0, %v530
      %v532 = vpop.f32.mrf.mxu0
      %v533 = vadd.f32 0.0, %v532
      %534 = vmatmul.bf16.gmra.mxu0 %v450
      %v535 = vpop.f32.mrf.mxu0
      %v536 = vadd.f32 0.0, %v535
      %v537 = vpop.f32.mrf.mxu0
      %v538 = vadd.f32 0.0, %v537
      %539 = vmatmul.bf16.gmra.mxu0 %v451
      %v540 = vpop.f32.mrf.mxu0
      %v541 = vadd.f32 0.0, %v540
      %v542 = vpop.f32.mrf.mxu0
      %v543 = vadd.f32 0.0, %v542
      %544 = vmatmul.bf16.gmra.mxu0 %v452
      %v545 = vpop.f32.mrf.mxu0
      %v546 = vadd.f32 0.0, %v545
      %v547 = vpop.f32.mrf.mxu0
      %v548 = vadd.f32 0.0, %v547
      %549 = vmatmul.bf16.gmra.mxu0 %v453
      %v550 = vpop.f32.mrf.mxu0
      %v551 = vadd.f32 0.0, %v550
      %v552 = vpop.f32.mrf.mxu0
      %v553 = vadd.f32 0.0, %v552
      %554 = vmatmul.bf16.gmra.mxu0 %v454
      %v555 = vpop.f32.mrf.mxu0
      %v556 = vadd.f32 0.0, %v555
      %v557 = vpop.f32.mrf.mxu0
      %v558 = vadd.f32 0.0, %v557
      %559 = vmatmul.bf16.gmra.mxu0 %v455
      %v560 = vpop.f32.mrf.mxu0
      %v561 = vadd.f32 0.0, %v560
      %v562 = vpop.f32.mrf.mxu0
      %563 = vdwg.mxu0
      %v580 = vunpack.c.l.b16 %v420
      %v581 = vunpack.c.l.b16 %v421
      %v582 = vunpack.c.l.b16 %v422
      %v583 = vunpack.c.l.b16 %v423
      %v584 = vunpack.c.l.b16 %v424
      %v585 = vunpack.c.l.b16 %v425
      %v586 = vunpack.c.l.b16 %v426
      %v587 = vunpack.c.l.b16 %v427
      %v588 = vunpack.c.l.b16 %v428
      %v589 = vunpack.c.l.b16 %v429
      %v590 = vunpack.c.l.b16 %v430
      %v591 = vunpack.c.l.b16 %v431
      %v592 = vunpack.c.l.b16 %v432
      %v593 = vunpack.c.l.b16 %v433
      %v594 = vunpack.c.l.b16 %v434
      %v595 = vunpack.c.l.b16 %v435
      %v596 = vpack.c.b16 %v581, %v580
      %v597 = vpack.c.b16 %v583, %v582
      %v598 = vpack.c.b16 %v585, %v584
      %v599 = vpack.c.b16 %v587, %v586
      %v600 = vpack.c.b16 %v589, %v588
      %v601 = vpack.c.b16 %v591, %v590
      %v602 = vpack.c.b16 %v593, %v592
      %v603 = vpack.c.b16 %v595, %v594
      %612 = vmatpush.bf16.msra.mxu0 %v603
      %613 = vmatpush.bf16.msra.mxu0 %v602
      %614 = vmatpush.bf16.msra.mxu0 %v601
      %615 = vmatpush.bf16.msra.mxu0 %v600
      %616 = vmatpush.bf16.msra.mxu0 %v599
      %617 = vmatpush.bf16.msra.mxu0 %v598
      %618 = vmatpush.bf16.msra.mxu0 %v597
      %619 = vmatpush.bf16.msra.mxu0 %v596
      %620 = vmatmul.bf16.gmra.mxu0 %v413
      %v621 = vpop.f32.mrf.mxu0
      %v622 = vadd.f32 %v531, %v621
      %v623 = vpop.f32.mrf.mxu0
      %v624 = vadd.f32 %v533, %v623
      %625 = vmatmul.bf16.gmra.mxu0 %v414
      %v626 = vpop.f32.mrf.mxu0
      %v627 = vadd.f32 %v536, %v626
      %v628 = vpop.f32.mrf.mxu0
      %v629 = vadd.f32 %v538, %v628
      %630 = vmatmul.bf16.gmra.mxu0 %v415
      %v631 = vpop.f32.mrf.mxu0
      %v632 = vadd.f32 %v541, %v631
      %v633 = vpop.f32.mrf.mxu0
      %v634 = vadd.f32 %v543, %v633
      %635 = vmatmul.bf16.gmra.mxu0 %v416
      %v636 = vpop.f32.mrf.mxu0
      %v637 = vadd.f32 %v546, %v636
      %v638 = vpop.f32.mrf.mxu0
      %v639 = vadd.f32 %v548, %v638
      %640 = vmatmul.bf16.gmra.mxu0 %v417
      %v641 = vpop.f32.mrf.mxu0
      %v642 = vadd.f32 %v551, %v641
      %v643 = vpop.f32.mrf.mxu0
      %v644 = vadd.f32 %v553, %v643
      %645 = vmatmul.bf16.gmra.mxu0 %v418
      %v646 = vpop.f32.mrf.mxu0
      %v647 = vadd.f32 %v556, %v646
      %v648 = vpop.f32.mrf.mxu0
      %v649 = vadd.f32 %v558, %v648
      %650 = vmatmul.bf16.gmra.mxu0 %v419
      %v651 = vpop.f32.mrf.mxu0
      %v652 = vadd.f32 %v561, %v651
      %v653 = vpop.f32.mrf.mxu0
      %654 = vdwg.mxu0
      %v655 = vld [vmem:[%s360 + $0x2] sm:$0xff]
      %v656 = vld [vmem:[%s360 + $0xa] sm:$0xff]
      %v657 = vld [vmem:[%s360 + $0x12] sm:$0xff]
      %v658 = vld [vmem:[%s360 + $0x1a] sm:$0xff]
      %v659 = vld [vmem:[%s360 + $0x22] sm:$0xff]
      %v660 = vld [vmem:[%s360 + $0x2a] sm:$0xff]
      %v661 = vld [vmem:[%s360 + $0x32] sm:$0xff]
      %v662 = vld [vmem:[%s360 + $0x3a] sm:$0xff]
      %v663 = vld [vmem:[%s360 + $0x42] sm:$0xff]
      %v664 = vld [vmem:[%s360 + $0x4a] sm:$0xff]
      %v665 = vld [vmem:[%s360 + $0x52] sm:$0xff]
      %v666 = vld [vmem:[%s360 + $0x5a] sm:$0xff]
      %v667 = vld [vmem:[%s360 + $0x62] sm:$0xf]
      %v668 = vpack.c.bf16 %v656, %v655
      %v669 = vpack.c.bf16 %v658, %v657
      %v670 = vpack.c.bf16 %v660, %v659
      %v671 = vpack.c.bf16 %v662, %v661
      %v672 = vpack.c.bf16 %v664, %v663
      %v673 = vpack.c.bf16 %v666, %v665
      %v674 = vpack.c.bf16 %v667, %v667
      %s675 = scalar_lea.vmem %s3, 128
      %v676 = vld [vmem:[%s675] sm:$0xf]
      %v677 = vld [vmem:[%s675 + $0x4] sm:$0xf]
      %v678 = vld [vmem:[%s675 + $0x8] sm:$0xf]
      %v679 = vld [vmem:[%s675 + $0xc] sm:$0xf]
      %v680 = vld [vmem:[%s675 + $0x10] sm:$0xf]
      %v681 = vld [vmem:[%s675 + $0x14] sm:$0xf]
      %v682 = vld [vmem:[%s675 + $0x18] sm:$0xf]
      %v683 = vld [vmem:[%s675 + $0x1c] sm:$0xf]
      %v684 = vld [vmem:[%s675 + $0x20] sm:$0xf]
      %v685 = vld [vmem:[%s675 + $0x24] sm:$0xf]
      %v686 = vld [vmem:[%s675 + $0x28] sm:$0xf]
      %v687 = vld [vmem:[%s675 + $0x2c] sm:$0xf]
      %v688 = vld [vmem:[%s675 + $0x30] sm:$0xf]
      %v689 = vld [vmem:[%s675 + $0x34] sm:$0xf]
      %v690 = vld [vmem:[%s675 + $0x38] sm:$0xf]
      %v691 = vld [vmem:[%s675 + $0x3c] sm:$0xf]
      %v708 = vunpack.c.l.b16 %v676
      %v709 = vunpack.c.l.b16 %v677
      %v710 = vunpack.c.l.b16 %v678
      %v711 = vunpack.c.l.b16 %v679
      %v712 = vunpack.c.l.b16 %v680
      %v713 = vunpack.c.l.b16 %v681
      %v714 = vunpack.c.l.b16 %v682
      %v715 = vunpack.c.l.b16 %v683
      %v716 = vunpack.c.l.b16 %v684
      %v717 = vunpack.c.l.b16 %v685
      %v718 = vunpack.c.l.b16 %v686
      %v719 = vunpack.c.l.b16 %v687
      %v720 = vunpack.c.l.b16 %v688
      %v721 = vunpack.c.l.b16 %v689
      %v722 = vunpack.c.l.b16 %v690
      %v723 = vunpack.c.l.b16 %v691
      %v724 = vpack.c.b16 %v709, %v708
      %v725 = vpack.c.b16 %v711, %v710
      %v726 = vpack.c.b16 %v713, %v712
      %v727 = vpack.c.b16 %v715, %v714
      %v728 = vpack.c.b16 %v717, %v716
      %v729 = vpack.c.b16 %v719, %v718
      %v730 = vpack.c.b16 %v721, %v720
      %v731 = vpack.c.b16 %v723, %v722
      %740 = vmatpush.bf16.msra.mxu0 %v731
      %741 = vmatpush.bf16.msra.mxu0 %v730
      %742 = vmatpush.bf16.msra.mxu0 %v729
      %743 = vmatpush.bf16.msra.mxu0 %v728
      %744 = vmatpush.bf16.msra.mxu0 %v727
      %745 = vmatpush.bf16.msra.mxu0 %v726
      %746 = vmatpush.bf16.msra.mxu0 %v725
      %747 = vmatpush.bf16.msra.mxu0 %v724
      %748 = vmatmul.bf16.gmra.mxu0 %v668
      %v749 = vpop.f32.mrf.mxu0
      %v750 = vadd.f32 0.0, %v749
      %v751 = vpop.f32.mrf.mxu0
      %v752 = vadd.f32 0.0, %v751
      %753 = vmatmul.bf16.gmra.mxu0 %v669
      %v754 = vpop.f32.mrf.mxu0
      %v755 = vadd.f32 0.0, %v754
      %v756 = vpop.f32.mrf.mxu0
      %v757 = vadd.f32 0.0, %v756
      %758 = vmatmul.bf16.gmra.mxu0 %v670
      %v759 = vpop.f32.mrf.mxu0
      %v760 = vadd.f32 0.0, %v759
      %v761 = vpop.f32.mrf.mxu0
      %v762 = vadd.f32 0.0, %v761
      %763 = vmatmul.bf16.gmra.mxu0 %v671
      %v764 = vpop.f32.mrf.mxu0
      %v765 = vadd.f32 0.0, %v764
      %v766 = vpop.f32.mrf.mxu0
      %v767 = vadd.f32 0.0, %v766
      %768 = vmatmul.bf16.gmra.mxu0 %v672
      %v769 = vpop.f32.mrf.mxu0
      %v770 = vadd.f32 0.0, %v769
      %v771 = vpop.f32.mrf.mxu0
      %v772 = vadd.f32 0.0, %v771
      %773 = vmatmul.bf16.gmra.mxu0 %v673
      %v774 = vpop.f32.mrf.mxu0
      %v775 = vadd.f32 0.0, %v774
      %v776 = vpop.f32.mrf.mxu0
      %v777 = vadd.f32 0.0, %v776
      %778 = vmatmul.bf16.gmra.mxu0 %v674
      %v779 = vpop.f32.mrf.mxu0
      %v780 = vadd.f32 0.0, %v779
      %v781 = vpop.f32.mrf.mxu0
      %782 = vdwg.mxu0
      %v783 = vadd.f32 %v622, %v750
      %v784 = vadd.f32 %v624, %v752
      %v785 = vadd.f32 %v627, %v755
      %v786 = vadd.f32 %v629, %v757
      %v787 = vadd.f32 %v632, %v760
      %v788 = vadd.f32 %v634, %v762
      %v789 = vadd.f32 %v637, %v765
      %v790 = vadd.f32 %v639, %v767
      %v791 = vadd.f32 %v642, %v770
      %v792 = vadd.f32 %v644, %v772
      %v793 = vadd.f32 %v647, %v775
      %v794 = vadd.f32 %v649, %v777
      %v795 = vadd.f32 %v652, %v780
      %v796 = vld [vmem:[%s360 + $0xa] sm:$0xff]
      %v797 = vld [vmem:[%s360 + $0x12] sm:$0xff]
      %v798 = vld [vmem:[%s360 + $0x1a] sm:$0xff]
      %v799 = vld [vmem:[%s360 + $0x22] sm:$0xff]
      %v800 = vld [vmem:[%s360 + $0x2a] sm:$0xff]
      %v801 = vld [vmem:[%s360 + $0x32] sm:$0xff]
      %v802 = vld [vmem:[%s360 + $0x3a] sm:$0xff]
      %v803 = vld [vmem:[%s360 + $0x42] sm:$0xff]
      %v804 = vld [vmem:[%s360 + $0x4a] sm:$0xff]
      %v805 = vld [vmem:[%s360 + $0x52] sm:$0xff]
      %v806 = vld [vmem:[%s360 + $0x5a] sm:$0xff]
      %v807 = vld [vmem:[%s360 + $0x62] sm:$0xff]
      %v808 = vld [vmem:[%s360 + $0x6a] sm:$0xf]
      %v809 = vpack.c.bf16 %v797, %v796
      %v810 = vpack.c.bf16 %v799, %v798
      %v811 = vpack.c.bf16 %v801, %v800
      %v812 = vpack.c.bf16 %v803, %v802
      %v813 = vpack.c.bf16 %v805, %v804
      %v814 = vpack.c.bf16 %v807, %v806
      %v815 = vpack.c.bf16 %v808, %v808
      %s816 = scalar_lea.vmem %s3, 192
      %v817 = vld [vmem:[%s816] sm:$0xf]
      %v818 = vld [vmem:[%s816 + $0x4] sm:$0xf]
      %v819 = vld [vmem:[%s816 + $0x8] sm:$0xf]
      %v820 = vld [vmem:[%s816 + $0xc] sm:$0xf]
      %v821 = vld [vmem:[%s816 + $0x10] sm:$0xf]
      %v822 = vld [vmem:[%s816 + $0x14] sm:$0xf]
      %v823 = vld [vmem:[%s816 + $0x18] sm:$0xf]
      %v824 = vld [vmem:[%s816 + $0x1c] sm:$0xf]
      %v825 = vld [vmem:[%s816 + $0x20] sm:$0xf]
      %v826 = vld [vmem:[%s816 + $0x24] sm:$0xf]
      %v827 = vld [vmem:[%s816 + $0x28] sm:$0xf]
      %v828 = vld [vmem:[%s816 + $0x2c] sm:$0xf]
      %v829 = vld [vmem:[%s816 + $0x30] sm:$0xf]
      %v830 = vld [vmem:[%s816 + $0x34] sm:$0xf]
      %v831 = vld [vmem:[%s816 + $0x38] sm:$0xf]
      %v832 = vld [vmem:[%s816 + $0x3c] sm:$0xf]
      %v849 = vunpack.c.l.b16 %v817
      %v850 = vunpack.c.l.b16 %v818
      %v851 = vunpack.c.l.b16 %v819
      %v852 = vunpack.c.l.b16 %v820
      %v853 = vunpack.c.l.b16 %v821
      %v854 = vunpack.c.l.b16 %v822
      %v855 = vunpack.c.l.b16 %v823
      %v856 = vunpack.c.l.b16 %v824
      %v857 = vunpack.c.l.b16 %v825
      %v858 = vunpack.c.l.b16 %v826
      %v859 = vunpack.c.l.b16 %v827
      %v860 = vunpack.c.l.b16 %v828
      %v861 = vunpack.c.l.b16 %v829
      %v862 = vunpack.c.l.b16 %v830
      %v863 = vunpack.c.l.b16 %v831
      %v864 = vunpack.c.l.b16 %v832
      %v865 = vpack.c.b16 %v850, %v849
      %v866 = vpack.c.b16 %v852, %v851
      %v867 = vpack.c.b16 %v854, %v853
      %v868 = vpack.c.b16 %v856, %v855
      %v869 = vpack.c.b16 %v858, %v857
      %v870 = vpack.c.b16 %v860, %v859
      %v871 = vpack.c.b16 %v862, %v861
      %v872 = vpack.c.b16 %v864, %v863
      %881 = vmatpush.bf16.msra.mxu0 %v872
      %882 = vmatpush.bf16.msra.mxu0 %v871
      %883 = vmatpush.bf16.msra.mxu0 %v870
      %884 = vmatpush.bf16.msra.mxu0 %v869
      %885 = vmatpush.bf16.msra.mxu0 %v868
      %886 = vmatpush.bf16.msra.mxu0 %v867
      %887 = vmatpush.bf16.msra.mxu0 %v866
      %888 = vmatpush.bf16.msra.mxu0 %v865
      %889 = vmatmul.bf16.gmra.mxu0 %v809
      %v890 = vpop.f32.mrf.mxu0
      %v891 = vadd.f32 0.0, %v890
      %v892 = vpop.f32.mrf.mxu0
      %v893 = vadd.f32 0.0, %v892
      %894 = vmatmul.bf16.gmra.mxu0 %v810
      %v895 = vpop.f32.mrf.mxu0
      %v896 = vadd.f32 0.0, %v895
      %v897 = vpop.f32.mrf.mxu0
      %v898 = vadd.f32 0.0, %v897
      %899 = vmatmul.bf16.gmra.mxu0 %v811
      %v900 = vpop.f32.mrf.mxu0
      %v901 = vadd.f32 0.0, %v900
      %v902 = vpop.f32.mrf.mxu0
      %v903 = vadd.f32 0.0, %v902
      %904 = vmatmul.bf16.gmra.mxu0 %v812
      %v905 = vpop.f32.mrf.mxu0
      %v906 = vadd.f32 0.0, %v905
      %v907 = vpop.f32.mrf.mxu0
      %v908 = vadd.f32 0.0, %v907
      %909 = vmatmul.bf16.gmra.mxu0 %v813
      %v910 = vpop.f32.mrf.mxu0
      %v911 = vadd.f32 0.0, %v910
      %v912 = vpop.f32.mrf.mxu0
      %v913 = vadd.f32 0.0, %v912
      %914 = vmatmul.bf16.gmra.mxu0 %v814
      %v915 = vpop.f32.mrf.mxu0
      %v916 = vadd.f32 0.0, %v915
      %v917 = vpop.f32.mrf.mxu0
      %v918 = vadd.f32 0.0, %v917
      %919 = vmatmul.bf16.gmra.mxu0 %v815
      %v920 = vpop.f32.mrf.mxu0
      %v921 = vadd.f32 0.0, %v920
      %v922 = vpop.f32.mrf.mxu0
      %923 = vdwg.mxu0
      %v924 = vadd.f32 %v783, %v891
      %v925 = vadd.f32 %v784, %v893
      %v926 = vadd.f32 %v785, %v896
      %v927 = vadd.f32 %v786, %v898
      %v928 = vadd.f32 %v787, %v901
      %v929 = vadd.f32 %v788, %v903
      %v930 = vadd.f32 %v789, %v906
      %v931 = vadd.f32 %v790, %v908
      %v932 = vadd.f32 %v791, %v911
      %v933 = vadd.f32 %v792, %v913
      %v934 = vadd.f32 %v793, %v916
      %v935 = vadd.f32 %v794, %v918
      %v936 = vadd.f32 %v795, %v921
      %v937 = vld [vmem:[%s360 + $0xb] sm:$0xff]
      %v938 = vld [vmem:[%s360 + $0x13] sm:$0xff]
      %v939 = vld [vmem:[%s360 + $0x1b] sm:$0xff]
      %v940 = vld [vmem:[%s360 + $0x23] sm:$0xff]
      %v941 = vld [vmem:[%s360 + $0x2b] sm:$0xff]
      %v942 = vld [vmem:[%s360 + $0x33] sm:$0xff]
      %v943 = vld [vmem:[%s360 + $0x3b] sm:$0xff]
      %v944 = vld [vmem:[%s360 + $0x43] sm:$0xff]
      %v945 = vld [vmem:[%s360 + $0x4b] sm:$0xff]
      %v946 = vld [vmem:[%s360 + $0x53] sm:$0xff]
      %v947 = vld [vmem:[%s360 + $0x5b] sm:$0xff]
      %v948 = vld [vmem:[%s360 + $0x63] sm:$0xff]
      %v949 = vld [vmem:[%s360 + $0x6b] sm:$0xf]
      %v950 = vpack.c.bf16 %v938, %v937
      %v951 = vpack.c.bf16 %v940, %v939
      %v952 = vpack.c.bf16 %v942, %v941
      %v953 = vpack.c.bf16 %v944, %v943
      %v954 = vpack.c.bf16 %v946, %v945
      %v955 = vpack.c.bf16 %v948, %v947
      %v956 = vpack.c.bf16 %v949, %v949
      %s957 = scalar_lea.vmem %s3, 256
      %v958 = vld [vmem:[%s957] sm:$0xf]
      %v959 = vld [vmem:[%s957 + $0x4] sm:$0xf]
      %v960 = vld [vmem:[%s957 + $0x8] sm:$0xf]
      %v961 = vld [vmem:[%s957 + $0xc] sm:$0xf]
      %v962 = vld [vmem:[%s957 + $0x10] sm:$0xf]
      %v963 = vld [vmem:[%s957 + $0x14] sm:$0xf]
      %v964 = vld [vmem:[%s957 + $0x18] sm:$0xf]
      %v965 = vld [vmem:[%s957 + $0x1c] sm:$0xf]
      %v966 = vld [vmem:[%s957 + $0x20] sm:$0xf]
      %v967 = vld [vmem:[%s957 + $0x24] sm:$0xf]
      %v968 = vld [vmem:[%s957 + $0x28] sm:$0xf]
      %v969 = vld [vmem:[%s957 + $0x2c] sm:$0xf]
      %v970 = vld [vmem:[%s957 + $0x30] sm:$0xf]
      %v971 = vld [vmem:[%s957 + $0x34] sm:$0xf]
      %v972 = vld [vmem:[%s957 + $0x38] sm:$0xf]
      %v973 = vld [vmem:[%s957 + $0x3c] sm:$0xf]
      %v990 = vunpack.c.l.b16 %v958
      %v991 = vunpack.c.l.b16 %v959
      %v992 = vunpack.c.l.b16 %v960
      %v993 = vunpack.c.l.b16 %v961
      %v994 = vunpack.c.l.b16 %v962
      %v995 = vunpack.c.l.b16 %v963
      %v996 = vunpack.c.l.b16 %v964
      %v997 = vunpack.c.l.b16 %v965
      %v998 = vunpack.c.l.b16 %v966
      %v999 = vunpack.c.l.b16 %v967
      %v1000 = vunpack.c.l.b16 %v968
      %v1001 = vunpack.c.l.b16 %v969
      %v1002 = vunpack.c.l.b16 %v970
      %v1003 = vunpack.c.l.b16 %v971
      %v1004 = vunpack.c.l.b16 %v972
      %v1005 = vunpack.c.l.b16 %v973
      %v1006 = vpack.c.b16 %v991, %v990
      %v1007 = vpack.c.b16 %v993, %v992
      %v1008 = vpack.c.b16 %v995, %v994
      %v1009 = vpack.c.b16 %v997, %v996
      %v1010 = vpack.c.b16 %v999, %v998
      %v1011 = vpack.c.b16 %v1001, %v1000
      %v1012 = vpack.c.b16 %v1003, %v1002
      %v1013 = vpack.c.b16 %v1005, %v1004
      %1022 = vmatpush.bf16.msra.mxu0 %v1013
      %1023 = vmatpush.bf16.msra.mxu0 %v1012
      %1024 = vmatpush.bf16.msra.mxu0 %v1011
      %1025 = vmatpush.bf16.msra.mxu0 %v1010
      %1026 = vmatpush.bf16.msra.mxu0 %v1009
      %1027 = vmatpush.bf16.msra.mxu0 %v1008
      %1028 = vmatpush.bf16.msra.mxu0 %v1007
      %1029 = vmatpush.bf16.msra.mxu0 %v1006
      %1030 = vmatmul.bf16.gmra.mxu0 %v950
      %v1031 = vpop.f32.mrf.mxu0
      %v1032 = vadd.f32 0.0, %v1031
      %v1033 = vpop.f32.mrf.mxu0
      %v1034 = vadd.f32 0.0, %v1033
      %1035 = vmatmul.bf16.gmra.mxu0 %v951
      %v1036 = vpop.f32.mrf.mxu0
      %v1037 = vadd.f32 0.0, %v1036
      %v1038 = vpop.f32.mrf.mxu0
      %v1039 = vadd.f32 0.0, %v1038
      %1040 = vmatmul.bf16.gmra.mxu0 %v952
      %v1041 = vpop.f32.mrf.mxu0
      %v1042 = vadd.f32 0.0, %v1041
      %v1043 = vpop.f32.mrf.mxu0
      %v1044 = vadd.f32 0.0, %v1043
      %1045 = vmatmul.bf16.gmra.mxu0 %v953
      %v1046 = vpop.f32.mrf.mxu0
      %v1047 = vadd.f32 0.0, %v1046
      %v1048 = vpop.f32.mrf.mxu0
      %v1049 = vadd.f32 0.0, %v1048
      %1050 = vmatmul.bf16.gmra.mxu0 %v954
      %v1051 = vpop.f32.mrf.mxu0
      %v1052 = vadd.f32 0.0, %v1051
      %v1053 = vpop.f32.mrf.mxu0
      %v1054 = vadd.f32 0.0, %v1053
      %1055 = vmatmul.bf16.gmra.mxu0 %v955
      %v1056 = vpop.f32.mrf.mxu0
      %v1057 = vadd.f32 0.0, %v1056
      %v1058 = vpop.f32.mrf.mxu0
      %v1059 = vadd.f32 0.0, %v1058
      %1060 = vmatmul.bf16.gmra.mxu0 %v956
      %v1061 = vpop.f32.mrf.mxu0
      %v1062 = vadd.f32 0.0, %v1061
      %v1063 = vpop.f32.mrf.mxu0
      %1064 = vdwg.mxu0
      %v1065 = vadd.f32 %v924, %v1032
      %v1066 = vadd.f32 %v925, %v1034
      %v1067 = vadd.f32 %v926, %v1037
      %v1068 = vadd.f32 %v927, %v1039
      %v1069 = vadd.f32 %v928, %v1042
      %v1070 = vadd.f32 %v929, %v1044
      %v1071 = vadd.f32 %v930, %v1047
      %v1072 = vadd.f32 %v931, %v1049
      %v1073 = vadd.f32 %v932, %v1052
      %v1074 = vadd.f32 %v933, %v1054
      %v1075 = vadd.f32 %v934, %v1057
      %v1076 = vadd.f32 %v935, %v1059
      %v1077 = vadd.f32 %v936, %v1062
      %v1078 = vld [vmem:[%s360 + $0xc] sm:$0xff]
      %v1079 = vld [vmem:[%s360 + $0x14] sm:$0xff]
      %v1080 = vld [vmem:[%s360 + $0x1c] sm:$0xff]
      %v1081 = vld [vmem:[%s360 + $0x24] sm:$0xff]
      %v1082 = vld [vmem:[%s360 + $0x2c] sm:$0xff]
      %v1083 = vld [vmem:[%s360 + $0x34] sm:$0xff]
      %v1084 = vld [vmem:[%s360 + $0x3c] sm:$0xff]
      %v1085 = vld [vmem:[%s360 + $0x44] sm:$0xff]
      %v1086 = vld [vmem:[%s360 + $0x4c] sm:$0xff]
      %v1087 = vld [vmem:[%s360 + $0x54] sm:$0xff]
      %v1088 = vld [vmem:[%s360 + $0x5c] sm:$0xff]
      %v1089 = vld [vmem:[%s360 + $0x64] sm:$0xff]
      %v1090 = vld [vmem:[%s360 + $0x6c] sm:$0xf]
      %v1091 = vpack.c.bf16 %v1079, %v1078
      %v1092 = vpack.c.bf16 %v1081, %v1080
      %v1093 = vpack.c.bf16 %v1083, %v1082
      %v1094 = vpack.c.bf16 %v1085, %v1084
      %v1095 = vpack.c.bf16 %v1087, %v1086
      %v1096 = vpack.c.bf16 %v1089, %v1088
      %v1097 = vpack.c.bf16 %v1090, %v1090
      %s1098 = scalar_lea.vmem %s3, 320
      %v1099 = vld [vmem:[%s1098] sm:$0xf]
      %v1100 = vld [vmem:[%s1098 + $0x4] sm:$0xf]
      %v1101 = vld [vmem:[%s1098 + $0x8] sm:$0xf]
      %v1102 = vld [vmem:[%s1098 + $0xc] sm:$0xf]
      %v1103 = vld [vmem:[%s1098 + $0x10] sm:$0xf]
      %v1104 = vld [vmem:[%s1098 + $0x14] sm:$0xf]
      %v1105 = vld [vmem:[%s1098 + $0x18] sm:$0xf]
      %v1106 = vld [vmem:[%s1098 + $0x1c] sm:$0xf]
      %v1107 = vld [vmem:[%s1098 + $0x20] sm:$0xf]
      %v1108 = vld [vmem:[%s1098 + $0x24] sm:$0xf]
      %v1109 = vld [vmem:[%s1098 + $0x28] sm:$0xf]
      %v1110 = vld [vmem:[%s1098 + $0x2c] sm:$0xf]
      %v1111 = vld [vmem:[%s1098 + $0x30] sm:$0xf]
      %v1112 = vld [vmem:[%s1098 + $0x34] sm:$0xf]
      %v1113 = vld [vmem:[%s1098 + $0x38] sm:$0xf]
      %v1114 = vld [vmem:[%s1098 + $0x3c] sm:$0xf]
      %v1131 = vunpack.c.l.b16 %v1099
      %v1132 = vunpack.c.l.b16 %v1100
      %v1133 = vunpack.c.l.b16 %v1101
      %v1134 = vunpack.c.l.b16 %v1102
      %v1135 = vunpack.c.l.b16 %v1103
      %v1136 = vunpack.c.l.b16 %v1104
      %v1137 = vunpack.c.l.b16 %v1105
      %v1138 = vunpack.c.l.b16 %v1106
      %v1139 = vunpack.c.l.b16 %v1107
      %v1140 = vunpack.c.l.b16 %v1108
      %v1141 = vunpack.c.l.b16 %v1109
      %v1142 = vunpack.c.l.b16 %v1110
      %v1143 = vunpack.c.l.b16 %v1111
      %v1144 = vunpack.c.l.b16 %v1112
      %v1145 = vunpack.c.l.b16 %v1113
      %v1146 = vunpack.c.l.b16 %v1114
      %v1147 = vpack.c.b16 %v1132, %v1131
      %v1148 = vpack.c.b16 %v1134, %v1133
      %v1149 = vpack.c.b16 %v1136, %v1135
      %v1150 = vpack.c.b16 %v1138, %v1137
      %v1151 = vpack.c.b16 %v1140, %v1139
      %v1152 = vpack.c.b16 %v1142, %v1141
      %v1153 = vpack.c.b16 %v1144, %v1143
      %v1154 = vpack.c.b16 %v1146, %v1145
      %1163 = vmatpush.bf16.msra.mxu0 %v1154
      %1164 = vmatpush.bf16.msra.mxu0 %v1153
      %1165 = vmatpush.bf16.msra.mxu0 %v1152
      %1166 = vmatpush.bf16.msra.mxu0 %v1151
      %1167 = vmatpush.bf16.msra.mxu0 %v1150
      %1168 = vmatpush.bf16.msra.mxu0 %v1149
      %1169 = vmatpush.bf16.msra.mxu0 %v1148
      %1170 = vmatpush.bf16.msra.mxu0 %v1147
      %1171 = vmatmul.bf16.gmra.mxu0 %v1091
      %v1172 = vpop.f32.mrf.mxu0
      %v1173 = vadd.f32 0.0, %v1172
      %v1174 = vpop.f32.mrf.mxu0
      %v1175 = vadd.f32 0.0, %v1174
      %1176 = vmatmul.bf16.gmra.mxu0 %v1092
      %v1177 = vpop.f32.mrf.mxu0
      %v1178 = vadd.f32 0.0, %v1177
      %v1179 = vpop.f32.mrf.mxu0
      %v1180 = vadd.f32 0.0, %v1179
      %1181 = vmatmul.bf16.gmra.mxu0 %v1093
      %v1182 = vpop.f32.mrf.mxu0
      %v1183 = vadd.f32 0.0, %v1182
      %v1184 = vpop.f32.mrf.mxu0
      %v1185 = vadd.f32 0.0, %v1184
      %1186 = vmatmul.bf16.gmra.mxu0 %v1094
      %v1187 = vpop.f32.mrf.mxu0
      %v1188 = vadd.f32 0.0, %v1187
      %v1189 = vpop.f32.mrf.mxu0
      %v1190 = vadd.f32 0.0, %v1189
      %1191 = vmatmul.bf16.gmra.mxu0 %v1095
      %v1192 = vpop.f32.mrf.mxu0
      %v1193 = vadd.f32 0.0, %v1192
      %v1194 = vpop.f32.mrf.mxu0
      %v1195 = vadd.f32 0.0, %v1194
      %1196 = vmatmul.bf16.gmra.mxu0 %v1096
      %v1197 = vpop.f32.mrf.mxu0
      %v1198 = vadd.f32 0.0, %v1197
      %v1199 = vpop.f32.mrf.mxu0
      %v1200 = vadd.f32 0.0, %v1199
      %1201 = vmatmul.bf16.gmra.mxu0 %v1097
      %v1202 = vpop.f32.mrf.mxu0
      %v1203 = vadd.f32 0.0, %v1202
      %v1204 = vpop.f32.mrf.mxu0
      %1205 = vdwg.mxu0
      %v1206 = vadd.f32 %v1065, %v1173
      %v1207 = vadd.f32 %v1066, %v1175
      %v1208 = vadd.f32 %v1067, %v1178
      %v1209 = vadd.f32 %v1068, %v1180
      %v1210 = vadd.f32 %v1069, %v1183
      %v1211 = vadd.f32 %v1070, %v1185
      %v1212 = vadd.f32 %v1071, %v1188
      %v1213 = vadd.f32 %v1072, %v1190
      %v1214 = vadd.f32 %v1073, %v1193
      %v1215 = vadd.f32 %v1074, %v1195
      %v1216 = vadd.f32 %v1075, %v1198
      %v1217 = vadd.f32 %v1076, %v1200
      %v1218 = vadd.f32 %v1077, %v1203
      %v1219 = vld [vmem:[%s360 + $0x14] sm:$0xff]
      %v1220 = vld [vmem:[%s360 + $0x1c] sm:$0xff]
      %v1221 = vld [vmem:[%s360 + $0x24] sm:$0xff]
      %v1222 = vld [vmem:[%s360 + $0x2c] sm:$0xff]
      %v1223 = vld [vmem:[%s360 + $0x34] sm:$0xff]
      %v1224 = vld [vmem:[%s360 + $0x3c] sm:$0xff]
      %v1225 = vld [vmem:[%s360 + $0x44] sm:$0xff]
      %v1226 = vld [vmem:[%s360 + $0x4c] sm:$0xff]
      %v1227 = vld [vmem:[%s360 + $0x54] sm:$0xff]
      %v1228 = vld [vmem:[%s360 + $0x5c] sm:$0xff]
      %v1229 = vld [vmem:[%s360 + $0x64] sm:$0xff]
      %v1230 = vld [vmem:[%s360 + $0x6c] sm:$0xff]
      %v1231 = vld [vmem:[%s360 + $0x74] sm:$0xf]
      %v1232 = vpack.c.bf16 %v1220, %v1219
      %v1233 = vpack.c.bf16 %v1222, %v1221
      %v1234 = vpack.c.bf16 %v1224, %v1223
      %v1235 = vpack.c.bf16 %v1226, %v1225
      %v1236 = vpack.c.bf16 %v1228, %v1227
      %v1237 = vpack.c.bf16 %v1230, %v1229
      %v1238 = vpack.c.bf16 %v1231, %v1231
      %s1239 = scalar_lea.vmem %s3, 384
      %v1240 = vld [vmem:[%s1239] sm:$0xf]
      %v1241 = vld [vmem:[%s1239 + $0x4] sm:$0xf]
      %v1242 = vld [vmem:[%s1239 + $0x8] sm:$0xf]
      %v1243 = vld [vmem:[%s1239 + $0xc] sm:$0xf]
      %v1244 = vld [vmem:[%s1239 + $0x10] sm:$0xf]
      %v1245 = vld [vmem:[%s1239 + $0x14] sm:$0xf]
      %v1246 = vld [vmem:[%s1239 + $0x18] sm:$0xf]
      %v1247 = vld [vmem:[%s1239 + $0x1c] sm:$0xf]
      %v1248 = vld [vmem:[%s1239 + $0x20] sm:$0xf]
      %v1249 = vld [vmem:[%s1239 + $0x24] sm:$0xf]
      %v1250 = vld [vmem:[%s1239 + $0x28] sm:$0xf]
      %v1251 = vld [vmem:[%s1239 + $0x2c] sm:$0xf]
      %v1252 = vld [vmem:[%s1239 + $0x30] sm:$0xf]
      %v1253 = vld [vmem:[%s1239 + $0x34] sm:$0xf]
      %v1254 = vld [vmem:[%s1239 + $0x38] sm:$0xf]
      %v1255 = vld [vmem:[%s1239 + $0x3c] sm:$0xf]
      %v1272 = vunpack.c.l.b16 %v1240
      %v1273 = vunpack.c.l.b16 %v1241
      %v1274 = vunpack.c.l.b16 %v1242
      %v1275 = vunpack.c.l.b16 %v1243
      %v1276 = vunpack.c.l.b16 %v1244
      %v1277 = vunpack.c.l.b16 %v1245
      %v1278 = vunpack.c.l.b16 %v1246
      %v1279 = vunpack.c.l.b16 %v1247
      %v1280 = vunpack.c.l.b16 %v1248
      %v1281 = vunpack.c.l.b16 %v1249
      %v1282 = vunpack.c.l.b16 %v1250
      %v1283 = vunpack.c.l.b16 %v1251
      %v1284 = vunpack.c.l.b16 %v1252
      %v1285 = vunpack.c.l.b16 %v1253
      %v1286 = vunpack.c.l.b16 %v1254
      %v1287 = vunpack.c.l.b16 %v1255
      %v1288 = vpack.c.b16 %v1273, %v1272
      %v1289 = vpack.c.b16 %v1275, %v1274
      %v1290 = vpack.c.b16 %v1277, %v1276
      %v1291 = vpack.c.b16 %v1279, %v1278
      %v1292 = vpack.c.b16 %v1281, %v1280
      %v1293 = vpack.c.b16 %v1283, %v1282
      %v1294 = vpack.c.b16 %v1285, %v1284
      %v1295 = vpack.c.b16 %v1287, %v1286
      %1304 = vmatpush.bf16.msra.mxu0 %v1295
      %1305 = vmatpush.bf16.msra.mxu0 %v1294
      %1306 = vmatpush.bf16.msra.mxu0 %v1293
      %1307 = vmatpush.bf16.msra.mxu0 %v1292
      %1308 = vmatpush.bf16.msra.mxu0 %v1291
      %1309 = vmatpush.bf16.msra.mxu0 %v1290
      %1310 = vmatpush.bf16.msra.mxu0 %v1289
      %1311 = vmatpush.bf16.msra.mxu0 %v1288
      %1312 = vmatmul.bf16.gmra.mxu0 %v1232
      %v1313 = vpop.f32.mrf.mxu0
      %v1314 = vadd.f32 0.0, %v1313
      %v1315 = vpop.f32.mrf.mxu0
      %v1316 = vadd.f32 0.0, %v1315
      %1317 = vmatmul.bf16.gmra.mxu0 %v1233
      %v1318 = vpop.f32.mrf.mxu0
      %v1319 = vadd.f32 0.0, %v1318
      %v1320 = vpop.f32.mrf.mxu0
      %v1321 = vadd.f32 0.0, %v1320
      %1322 = vmatmul.bf16.gmra.mxu0 %v1234
      %v1323 = vpop.f32.mrf.mxu0
      %v1324 = vadd.f32 0.0, %v1323
      %v1325 = vpop.f32.mrf.mxu0
      %v1326 = vadd.f32 0.0, %v1325
      %1327 = vmatmul.bf16.gmra.mxu0 %v1235
      %v1328 = vpop.f32.mrf.mxu0
      %v1329 = vadd.f32 0.0, %v1328
      %v1330 = vpop.f32.mrf.mxu0
      %v1331 = vadd.f32 0.0, %v1330
      %1332 = vmatmul.bf16.gmra.mxu0 %v1236
      %v1333 = vpop.f32.mrf.mxu0
      %v1334 = vadd.f32 0.0, %v1333
      %v1335 = vpop.f32.mrf.mxu0
      %v1336 = vadd.f32 0.0, %v1335
      %1337 = vmatmul.bf16.gmra.mxu0 %v1237
      %v1338 = vpop.f32.mrf.mxu0
      %v1339 = vadd.f32 0.0, %v1338
      %v1340 = vpop.f32.mrf.mxu0
      %v1341 = vadd.f32 0.0, %v1340
      %1342 = vmatmul.bf16.gmra.mxu0 %v1238
      %v1343 = vpop.f32.mrf.mxu0
      %v1344 = vadd.f32 0.0, %v1343
      %v1345 = vpop.f32.mrf.mxu0
      %1346 = vdwg.mxu0
      %v1347 = vadd.f32 %v1206, %v1314
      %v1348 = vadd.f32 %v1207, %v1316
      %v1349 = vadd.f32 %v1208, %v1319
      %v1350 = vadd.f32 %v1209, %v1321
      %v1351 = vadd.f32 %v1210, %v1324
      %v1352 = vadd.f32 %v1211, %v1326
      %v1353 = vadd.f32 %v1212, %v1329
      %v1354 = vadd.f32 %v1213, %v1331
      %v1355 = vadd.f32 %v1214, %v1334
      %v1356 = vadd.f32 %v1215, %v1336
      %v1357 = vadd.f32 %v1216, %v1339
      %v1358 = vadd.f32 %v1217, %v1341
      %v1359 = vadd.f32 %v1218, %v1344
      %v1360 = vld [vmem:[%s360 + $0x15] sm:$0xff]
      %v1361 = vld [vmem:[%s360 + $0x1d] sm:$0xff]
      %v1362 = vld [vmem:[%s360 + $0x25] sm:$0xff]
      %v1363 = vld [vmem:[%s360 + $0x2d] sm:$0xff]
      %v1364 = vld [vmem:[%s360 + $0x35] sm:$0xff]
      %v1365 = vld [vmem:[%s360 + $0x3d] sm:$0xff]
      %v1366 = vld [vmem:[%s360 + $0x45] sm:$0xff]
      %v1367 = vld [vmem:[%s360 + $0x4d] sm:$0xff]
      %v1368 = vld [vmem:[%s360 + $0x55] sm:$0xff]
      %v1369 = vld [vmem:[%s360 + $0x5d] sm:$0xff]
      %v1370 = vld [vmem:[%s360 + $0x65] sm:$0xff]
      %v1371 = vld [vmem:[%s360 + $0x6d] sm:$0xff]
      %v1372 = vld [vmem:[%s360 + $0x75] sm:$0xf]
      %v1373 = vpack.c.bf16 %v1361, %v1360
      %v1374 = vpack.c.bf16 %v1363, %v1362
      %v1375 = vpack.c.bf16 %v1365, %v1364
      %v1376 = vpack.c.bf16 %v1367, %v1366
      %v1377 = vpack.c.bf16 %v1369, %v1368
      %v1378 = vpack.c.bf16 %v1371, %v1370
      %v1379 = vpack.c.bf16 %v1372, %v1372
      %s1380 = scalar_lea.vmem %s3, 448
      %v1381 = vld [vmem:[%s1380] sm:$0xf]
      %v1382 = vld [vmem:[%s1380 + $0x4] sm:$0xf]
      %v1383 = vld [vmem:[%s1380 + $0x8] sm:$0xf]
      %v1384 = vld [vmem:[%s1380 + $0xc] sm:$0xf]
      %v1385 = vld [vmem:[%s1380 + $0x10] sm:$0xf]
      %v1386 = vld [vmem:[%s1380 + $0x14] sm:$0xf]
      %v1387 = vld [vmem:[%s1380 + $0x18] sm:$0xf]
      %v1388 = vld [vmem:[%s1380 + $0x1c] sm:$0xf]
      %v1389 = vld [vmem:[%s1380 + $0x20] sm:$0xf]
      %v1390 = vld [vmem:[%s1380 + $0x24] sm:$0xf]
      %v1391 = vld [vmem:[%s1380 + $0x28] sm:$0xf]
      %v1392 = vld [vmem:[%s1380 + $0x2c] sm:$0xf]
      %v1393 = vld [vmem:[%s1380 + $0x30] sm:$0xf]
      %v1394 = vld [vmem:[%s1380 + $0x34] sm:$0xf]
      %v1395 = vld [vmem:[%s1380 + $0x38] sm:$0xf]
      %v1396 = vld [vmem:[%s1380 + $0x3c] sm:$0xf]
      %v1413 = vunpack.c.l.b16 %v1381
      %v1414 = vunpack.c.l.b16 %v1382
      %v1415 = vunpack.c.l.b16 %v1383
      %v1416 = vunpack.c.l.b16 %v1384
      %v1417 = vunpack.c.l.b16 %v1385
      %v1418 = vunpack.c.l.b16 %v1386
      %v1419 = vunpack.c.l.b16 %v1387
      %v1420 = vunpack.c.l.b16 %v1388
      %v1421 = vunpack.c.l.b16 %v1389
      %v1422 = vunpack.c.l.b16 %v1390
      %v1423 = vunpack.c.l.b16 %v1391
      %v1424 = vunpack.c.l.b16 %v1392
      %v1425 = vunpack.c.l.b16 %v1393
      %v1426 = vunpack.c.l.b16 %v1394
      %v1427 = vunpack.c.l.b16 %v1395
      %v1428 = vunpack.c.l.b16 %v1396
      %v1429 = vpack.c.b16 %v1414, %v1413
      %v1430 = vpack.c.b16 %v1416, %v1415
      %v1431 = vpack.c.b16 %v1418, %v1417
      %v1432 = vpack.c.b16 %v1420, %v1419
      %v1433 = vpack.c.b16 %v1422, %v1421
      %v1434 = vpack.c.b16 %v1424, %v1423
      %v1435 = vpack.c.b16 %v1426, %v1425
      %v1436 = vpack.c.b16 %v1428, %v1427
      %1445 = vmatpush.bf16.msra.mxu0 %v1436
      %1446 = vmatpush.bf16.msra.mxu0 %v1435
      %1447 = vmatpush.bf16.msra.mxu0 %v1434
      %1448 = vmatpush.bf16.msra.mxu0 %v1433
      %1449 = vmatpush.bf16.msra.mxu0 %v1432
      %1450 = vmatpush.bf16.msra.mxu0 %v1431
      %1451 = vmatpush.bf16.msra.mxu0 %v1430
      %1452 = vmatpush.bf16.msra.mxu0 %v1429
      %1453 = vmatmul.bf16.gmra.mxu0 %v1373
      %v1454 = vpop.f32.mrf.mxu0
      %v1455 = vadd.f32 0.0, %v1454
      %v1456 = vpop.f32.mrf.mxu0
      %v1457 = vadd.f32 0.0, %v1456
      %1458 = vmatmul.bf16.gmra.mxu0 %v1374
      %v1459 = vpop.f32.mrf.mxu0
      %v1460 = vadd.f32 0.0, %v1459
      %v1461 = vpop.f32.mrf.mxu0
      %v1462 = vadd.f32 0.0, %v1461
      %1463 = vmatmul.bf16.gmra.mxu0 %v1375
      %v1464 = vpop.f32.mrf.mxu0
      %v1465 = vadd.f32 0.0, %v1464
      %v1466 = vpop.f32.mrf.mxu0
      %v1467 = vadd.f32 0.0, %v1466
      %1468 = vmatmul.bf16.gmra.mxu0 %v1376
      %v1469 = vpop.f32.mrf.mxu0
      %v1470 = vadd.f32 0.0, %v1469
      %v1471 = vpop.f32.mrf.mxu0
      %v1472 = vadd.f32 0.0, %v1471
      %1473 = vmatmul.bf16.gmra.mxu0 %v1377
      %v1474 = vpop.f32.mrf.mxu0
      %v1475 = vadd.f32 0.0, %v1474
      %v1476 = vpop.f32.mrf.mxu0
      %v1477 = vadd.f32 0.0, %v1476
      %1478 = vmatmul.bf16.gmra.mxu0 %v1378
      %v1479 = vpop.f32.mrf.mxu0
      %v1480 = vadd.f32 0.0, %v1479
      %v1481 = vpop.f32.mrf.mxu0
      %v1482 = vadd.f32 0.0, %v1481
      %1483 = vmatmul.bf16.gmra.mxu0 %v1379
      %v1484 = vpop.f32.mrf.mxu0
      %v1485 = vadd.f32 0.0, %v1484
      %v1486 = vpop.f32.mrf.mxu0
      %1487 = vdwg.mxu0
      %v1488 = vadd.f32 %v1347, %v1455
      %v1489 = vadd.f32 %v1348, %v1457
      %v1490 = vadd.f32 %v1349, %v1460
      %v1491 = vadd.f32 %v1350, %v1462
      %v1492 = vadd.f32 %v1351, %v1465
      %v1493 = vadd.f32 %v1352, %v1467
      %v1494 = vadd.f32 %v1353, %v1470
      %v1495 = vadd.f32 %v1354, %v1472
      %v1496 = vadd.f32 %v1355, %v1475
      %v1497 = vadd.f32 %v1356, %v1477
      %v1498 = vadd.f32 %v1357, %v1480
      %v1499 = vadd.f32 %v1358, %v1482
      %v1500 = vadd.f32 %v1359, %v1485
      %v1501 = vld [vmem:[%s360 + $0x16] sm:$0xff]
      %v1502 = vld [vmem:[%s360 + $0x1e] sm:$0xff]
      %v1503 = vld [vmem:[%s360 + $0x26] sm:$0xff]
      %v1504 = vld [vmem:[%s360 + $0x2e] sm:$0xff]
      %v1505 = vld [vmem:[%s360 + $0x36] sm:$0xff]
      %v1506 = vld [vmem:[%s360 + $0x3e] sm:$0xff]
      %v1507 = vld [vmem:[%s360 + $0x46] sm:$0xff]
      %v1508 = vld [vmem:[%s360 + $0x4e] sm:$0xff]
      %v1509 = vld [vmem:[%s360 + $0x56] sm:$0xff]
      %v1510 = vld [vmem:[%s360 + $0x5e] sm:$0xff]
      %v1511 = vld [vmem:[%s360 + $0x66] sm:$0xff]
      %v1512 = vld [vmem:[%s360 + $0x6e] sm:$0xff]
      %v1513 = vld [vmem:[%s360 + $0x76] sm:$0xf]
      %v1514 = vpack.c.bf16 %v1502, %v1501
      %v1515 = vpack.c.bf16 %v1504, %v1503
      %v1516 = vpack.c.bf16 %v1506, %v1505
      %v1517 = vpack.c.bf16 %v1508, %v1507
      %v1518 = vpack.c.bf16 %v1510, %v1509
      %v1519 = vpack.c.bf16 %v1512, %v1511
      %v1520 = vpack.c.bf16 %v1513, %v1513
      %s1521 = scalar_lea.vmem %s3, 512
      %v1522 = vld [vmem:[%s1521] sm:$0xf]
      %v1523 = vld [vmem:[%s1521 + $0x4] sm:$0xf]
      %v1524 = vld [vmem:[%s1521 + $0x8] sm:$0xf]
      %v1525 = vld [vmem:[%s1521 + $0xc] sm:$0xf]
      %v1526 = vld [vmem:[%s1521 + $0x10] sm:$0xf]
      %v1527 = vld [vmem:[%s1521 + $0x14] sm:$0xf]
      %v1528 = vld [vmem:[%s1521 + $0x18] sm:$0xf]
      %v1529 = vld [vmem:[%s1521 + $0x1c] sm:$0xf]
      %v1530 = vld [vmem:[%s1521 + $0x20] sm:$0xf]
      %v1531 = vld [vmem:[%s1521 + $0x24] sm:$0xf]
      %v1532 = vld [vmem:[%s1521 + $0x28] sm:$0xf]
      %v1533 = vld [vmem:[%s1521 + $0x2c] sm:$0xf]
      %v1534 = vld [vmem:[%s1521 + $0x30] sm:$0xf]
      %v1535 = vld [vmem:[%s1521 + $0x34] sm:$0xf]
      %v1536 = vld [vmem:[%s1521 + $0x38] sm:$0xf]
      %v1537 = vld [vmem:[%s1521 + $0x3c] sm:$0xf]
      %v1554 = vunpack.c.l.b16 %v1522
      %v1555 = vunpack.c.l.b16 %v1523
      %v1556 = vunpack.c.l.b16 %v1524
      %v1557 = vunpack.c.l.b16 %v1525
      %v1558 = vunpack.c.l.b16 %v1526
      %v1559 = vunpack.c.l.b16 %v1527
      %v1560 = vunpack.c.l.b16 %v1528
      %v1561 = vunpack.c.l.b16 %v1529
      %v1562 = vunpack.c.l.b16 %v1530
      %v1563 = vunpack.c.l.b16 %v1531
      %v1564 = vunpack.c.l.b16 %v1532
      %v1565 = vunpack.c.l.b16 %v1533
      %v1566 = vunpack.c.l.b16 %v1534
      %v1567 = vunpack.c.l.b16 %v1535
      %v1568 = vunpack.c.l.b16 %v1536
      %v1569 = vunpack.c.l.b16 %v1537
      %v1570 = vpack.c.b16 %v1555, %v1554
      %v1571 = vpack.c.b16 %v1557, %v1556
      %v1572 = vpack.c.b16 %v1559, %v1558
      %v1573 = vpack.c.b16 %v1561, %v1560
      %v1574 = vpack.c.b16 %v1563, %v1562
      %v1575 = vpack.c.b16 %v1565, %v1564
      %v1576 = vpack.c.b16 %v1567, %v1566
      %v1577 = vpack.c.b16 %v1569, %v1568
      %1586 = vmatpush.bf16.msra.mxu0 %v1577
      %1587 = vmatpush.bf16.msra.mxu0 %v1576
      %1588 = vmatpush.bf16.msra.mxu0 %v1575
      %1589 = vmatpush.bf16.msra.mxu0 %v1574
      %1590 = vmatpush.bf16.msra.mxu0 %v1573
      %1591 = vmatpush.bf16.msra.mxu0 %v1572
      %1592 = vmatpush.bf16.msra.mxu0 %v1571
      %1593 = vmatpush.bf16.msra.mxu0 %v1570
      %1594 = vmatmul.bf16.gmra.mxu0 %v1514
      %v1595 = vpop.f32.mrf.mxu0
      %v1596 = vadd.f32 0.0, %v1595
      %v1597 = vpop.f32.mrf.mxu0
      %v1598 = vadd.f32 0.0, %v1597
      %1599 = vmatmul.bf16.gmra.mxu0 %v1515
      %v1600 = vpop.f32.mrf.mxu0
      %v1601 = vadd.f32 0.0, %v1600
      %v1602 = vpop.f32.mrf.mxu0
      %v1603 = vadd.f32 0.0, %v1602
      %1604 = vmatmul.bf16.gmra.mxu0 %v1516
      %v1605 = vpop.f32.mrf.mxu0
      %v1606 = vadd.f32 0.0, %v1605
      %v1607 = vpop.f32.mrf.mxu0
      %v1608 = vadd.f32 0.0, %v1607
      %1609 = vmatmul.bf16.gmra.mxu0 %v1517
      %v1610 = vpop.f32.mrf.mxu0
      %v1611 = vadd.f32 0.0, %v1610
      %v1612 = vpop.f32.mrf.mxu0
      %v1613 = vadd.f32 0.0, %v1612
      %1614 = vmatmul.bf16.gmra.mxu0 %v1518
      %v1615 = vpop.f32.mrf.mxu0
      %v1616 = vadd.f32 0.0, %v1615
      %v1617 = vpop.f32.mrf.mxu0
      %v1618 = vadd.f32 0.0, %v1617
      %1619 = vmatmul.bf16.gmra.mxu0 %v1519
      %v1620 = vpop.f32.mrf.mxu0
      %v1621 = vadd.f32 0.0, %v1620
      %v1622 = vpop.f32.mrf.mxu0
      %v1623 = vadd.f32 0.0, %v1622
      %1624 = vmatmul.bf16.gmra.mxu0 %v1520
      %v1625 = vpop.f32.mrf.mxu0
      %v1626 = vadd.f32 0.0, %v1625
      %v1627 = vpop.f32.mrf.mxu0
      %1628 = vdwg.mxu0
      %v1629 = vadd.f32 %v1488, %v1596
      %v1630 = vadd.f32 %v1489, %v1598
      %v1631 = vadd.f32 %v1490, %v1601
      %v1632 = vadd.f32 %v1491, %v1603
      %v1633 = vadd.f32 %v1492, %v1606
      %v1634 = vadd.f32 %v1493, %v1608
      %v1635 = vadd.f32 %v1494, %v1611
      %v1636 = vadd.f32 %v1495, %v1613
      %v1637 = vadd.f32 %v1496, %v1616
      %v1638 = vadd.f32 %v1497, %v1618
      %v1639 = vadd.f32 %v1498, %v1621
      %v1640 = vadd.f32 %v1499, %v1623
      %v1641 = vadd.f32 %v1500, %v1626
      %v1642 = vld [vmem:[%s370] sm:$0xff]
      %v1643 = vld [vmem:[%s370 + $0x8] sm:$0xff]
      %v1644 = vld [vmem:[%s370 + $0x10] sm:$0xff]
      %v1645 = vld [vmem:[%s370 + $0x18] sm:$0xff]
      %v1646 = vld [vmem:[%s370 + $0x20] sm:$0xff]
      %v1647 = vld [vmem:[%s370 + $0x28] sm:$0xff]
      %v1648 = vld [vmem:[%s370 + $0x30] sm:$0xff]
      %v1649 = vld [vmem:[%s370 + $0x38] sm:$0xff]
      %v1650 = vld [vmem:[%s370 + $0x40] sm:$0xff]
      %v1651 = vld [vmem:[%s370 + $0x48] sm:$0xff]
      %v1652 = vld [vmem:[%s370 + $0x50] sm:$0xff]
      %v1653 = vld [vmem:[%s370 + $0x58] sm:$0xff]
      %v1654 = vld [vmem:[%s370 + $0x60] sm:$0xf]
      %v1655 = vpack.c.bf16 %v1643, %v1642
      %v1656 = vpack.c.bf16 %v1645, %v1644
      %v1657 = vpack.c.bf16 %v1647, %v1646
      %v1658 = vpack.c.bf16 %v1649, %v1648
      %v1659 = vpack.c.bf16 %v1651, %v1650
      %v1660 = vpack.c.bf16 %v1653, %v1652
      %v1661 = vpack.c.bf16 %v1654, %v1654
      %s1662 = scalar_lea.vmem %s3, 576
      %v1663 = vld [vmem:[%s1662] sm:$0xf]
      %v1664 = vld [vmem:[%s1662 + $0x4] sm:$0xf]
      %v1665 = vld [vmem:[%s1662 + $0x8] sm:$0xf]
      %v1666 = vld [vmem:[%s1662 + $0xc] sm:$0xf]
      %v1667 = vld [vmem:[%s1662 + $0x10] sm:$0xf]
      %v1668 = vld [vmem:[%s1662 + $0x14] sm:$0xf]
      %v1669 = vld [vmem:[%s1662 + $0x18] sm:$0xf]
      %v1670 = vld [vmem:[%s1662 + $0x1c] sm:$0xf]
      %v1671 = vld [vmem:[%s1662 + $0x20] sm:$0xf]
      %v1672 = vld [vmem:[%s1662 + $0x24] sm:$0xf]
      %v1673 = vld [vmem:[%s1662 + $0x28] sm:$0xf]
      %v1674 = vld [vmem:[%s1662 + $0x2c] sm:$0xf]
      %v1675 = vld [vmem:[%s1662 + $0x30] sm:$0xf]
      %v1676 = vld [vmem:[%s1662 + $0x34] sm:$0xf]
      %v1677 = vld [vmem:[%s1662 + $0x38] sm:$0xf]
      %v1678 = vld [vmem:[%s1662 + $0x3c] sm:$0xf]
      %v1695 = vunpack.c.l.b16 %v1663
      %v1696 = vunpack.c.l.b16 %v1664
      %v1697 = vunpack.c.l.b16 %v1665
      %v1698 = vunpack.c.l.b16 %v1666
      %v1699 = vunpack.c.l.b16 %v1667
      %v1700 = vunpack.c.l.b16 %v1668
      %v1701 = vunpack.c.l.b16 %v1669
      %v1702 = vunpack.c.l.b16 %v1670
      %v1703 = vunpack.c.l.b16 %v1671
      %v1704 = vunpack.c.l.b16 %v1672
      %v1705 = vunpack.c.l.b16 %v1673
      %v1706 = vunpack.c.l.b16 %v1674
      %v1707 = vunpack.c.l.b16 %v1675
      %v1708 = vunpack.c.l.b16 %v1676
      %v1709 = vunpack.c.l.b16 %v1677
      %v1710 = vunpack.c.l.b16 %v1678
      %v1711 = vpack.c.b16 %v1696, %v1695
      %v1712 = vpack.c.b16 %v1698, %v1697
      %v1713 = vpack.c.b16 %v1700, %v1699
      %v1714 = vpack.c.b16 %v1702, %v1701
      %v1715 = vpack.c.b16 %v1704, %v1703
      %v1716 = vpack.c.b16 %v1706, %v1705
      %v1717 = vpack.c.b16 %v1708, %v1707
      %v1718 = vpack.c.b16 %v1710, %v1709
      %1727 = vmatpush.bf16.msra.mxu0 %v1718
      %1728 = vmatpush.bf16.msra.mxu0 %v1717
      %1729 = vmatpush.bf16.msra.mxu0 %v1716
      %1730 = vmatpush.bf16.msra.mxu0 %v1715
      %1731 = vmatpush.bf16.msra.mxu0 %v1714
      %1732 = vmatpush.bf16.msra.mxu0 %v1713
      %1733 = vmatpush.bf16.msra.mxu0 %v1712
      %1734 = vmatpush.bf16.msra.mxu0 %v1711
      %1735 = vmatmul.bf16.gmra.mxu0 %v1655
      %v1736 = vpop.f32.mrf.mxu0
      %v1737 = vadd.f32 0.0, %v1736
      %v1738 = vpop.f32.mrf.mxu0
      %v1739 = vadd.f32 0.0, %v1738
      %1740 = vmatmul.bf16.gmra.mxu0 %v1656
      %v1741 = vpop.f32.mrf.mxu0
      %v1742 = vadd.f32 0.0, %v1741
      %v1743 = vpop.f32.mrf.mxu0
      %v1744 = vadd.f32 0.0, %v1743
      %1745 = vmatmul.bf16.gmra.mxu0 %v1657
      %v1746 = vpop.f32.mrf.mxu0
      %v1747 = vadd.f32 0.0, %v1746
      %v1748 = vpop.f32.mrf.mxu0
      %v1749 = vadd.f32 0.0, %v1748
      %1750 = vmatmul.bf16.gmra.mxu0 %v1658
      %v1751 = vpop.f32.mrf.mxu0
      %v1752 = vadd.f32 0.0, %v1751
      %v1753 = vpop.f32.mrf.mxu0
      %v1754 = vadd.f32 0.0, %v1753
      %1755 = vmatmul.bf16.gmra.mxu0 %v1659
      %v1756 = vpop.f32.mrf.mxu0
      %v1757 = vadd.f32 0.0, %v1756
      %v1758 = vpop.f32.mrf.mxu0
      %v1759 = vadd.f32 0.0, %v1758
      %1760 = vmatmul.bf16.gmra.mxu0 %v1660
      %v1761 = vpop.f32.mrf.mxu0
      %v1762 = vadd.f32 0.0, %v1761
      %v1763 = vpop.f32.mrf.mxu0
      %v1764 = vadd.f32 0.0, %v1763
      %1765 = vmatmul.bf16.gmra.mxu0 %v1661
      %v1766 = vpop.f32.mrf.mxu0
      %v1767 = vadd.f32 0.0, %v1766
      %v1768 = vpop.f32.mrf.mxu0
      %1769 = vdwg.mxu0
      %v1770 = vadd.f32 %v1629, %v1737
      %v1771 = vadd.f32 %v1630, %v1739
      %v1772 = vadd.f32 %v1631, %v1742
      %v1773 = vadd.f32 %v1632, %v1744
      %v1774 = vadd.f32 %v1633, %v1747
      %v1775 = vadd.f32 %v1634, %v1749
      %v1776 = vadd.f32 %v1635, %v1752
      %v1777 = vadd.f32 %v1636, %v1754
      %v1778 = vadd.f32 %v1637, %v1757
      %v1779 = vadd.f32 %v1638, %v1759
      %v1780 = vadd.f32 %v1639, %v1762
      %v1781 = vadd.f32 %v1640, %v1764
      %v1782 = vadd.f32 %v1641, %v1767
      %v1783 = vld [vmem:[%s370 + $0x1] sm:$0xff]
      %v1784 = vld [vmem:[%s370 + $0x9] sm:$0xff]
      %v1785 = vld [vmem:[%s370 + $0x11] sm:$0xff]
      %v1786 = vld [vmem:[%s370 + $0x19] sm:$0xff]
      %v1787 = vld [vmem:[%s370 + $0x21] sm:$0xff]
      %v1788 = vld [vmem:[%s370 + $0x29] sm:$0xff]
      %v1789 = vld [vmem:[%s370 + $0x31] sm:$0xff]
      %v1790 = vld [vmem:[%s370 + $0x39] sm:$0xff]
      %v1791 = vld [vmem:[%s370 + $0x41] sm:$0xff]
      %v1792 = vld [vmem:[%s370 + $0x49] sm:$0xff]
      %v1793 = vld [vmem:[%s370 + $0x51] sm:$0xff]
      %v1794 = vld [vmem:[%s370 + $0x59] sm:$0xff]
      %v1795 = vld [vmem:[%s370 + $0x61] sm:$0xf]
      %v1796 = vpack.c.bf16 %v1784, %v1783
      %v1797 = vpack.c.bf16 %v1786, %v1785
      %v1798 = vpack.c.bf16 %v1788, %v1787
      %v1799 = vpack.c.bf16 %v1790, %v1789
      %v1800 = vpack.c.bf16 %v1792, %v1791
      %v1801 = vpack.c.bf16 %v1794, %v1793
      %v1802 = vpack.c.bf16 %v1795, %v1795
      %s1803 = scalar_lea.vmem %s3, 640
      %v1804 = vld [vmem:[%s1803] sm:$0xf]
      %v1805 = vld [vmem:[%s1803 + $0x4] sm:$0xf]
      %v1806 = vld [vmem:[%s1803 + $0x8] sm:$0xf]
      %v1807 = vld [vmem:[%s1803 + $0xc] sm:$0xf]
      %v1808 = vld [vmem:[%s1803 + $0x10] sm:$0xf]
      %v1809 = vld [vmem:[%s1803 + $0x14] sm:$0xf]
      %v1810 = vld [vmem:[%s1803 + $0x18] sm:$0xf]
      %v1811 = vld [vmem:[%s1803 + $0x1c] sm:$0xf]
      %v1812 = vld [vmem:[%s1803 + $0x20] sm:$0xf]
      %v1813 = vld [vmem:[%s1803 + $0x24] sm:$0xf]
      %v1814 = vld [vmem:[%s1803 + $0x28] sm:$0xf]
      %v1815 = vld [vmem:[%s1803 + $0x2c] sm:$0xf]
      %v1816 = vld [vmem:[%s1803 + $0x30] sm:$0xf]
      %v1817 = vld [vmem:[%s1803 + $0x34] sm:$0xf]
      %v1818 = vld [vmem:[%s1803 + $0x38] sm:$0xf]
      %v1819 = vld [vmem:[%s1803 + $0x3c] sm:$0xf]
      %v1836 = vunpack.c.l.b16 %v1804
      %v1837 = vunpack.c.l.b16 %v1805
      %v1838 = vunpack.c.l.b16 %v1806
      %v1839 = vunpack.c.l.b16 %v1807
      %v1840 = vunpack.c.l.b16 %v1808
      %v1841 = vunpack.c.l.b16 %v1809
      %v1842 = vunpack.c.l.b16 %v1810
      %v1843 = vunpack.c.l.b16 %v1811
      %v1844 = vunpack.c.l.b16 %v1812
      %v1845 = vunpack.c.l.b16 %v1813
      %v1846 = vunpack.c.l.b16 %v1814
      %v1847 = vunpack.c.l.b16 %v1815
      %v1848 = vunpack.c.l.b16 %v1816
      %v1849 = vunpack.c.l.b16 %v1817
      %v1850 = vunpack.c.l.b16 %v1818
      %v1851 = vunpack.c.l.b16 %v1819
      %v1852 = vpack.c.b16 %v1837, %v1836
      %v1853 = vpack.c.b16 %v1839, %v1838
      %v1854 = vpack.c.b16 %v1841, %v1840
      %v1855 = vpack.c.b16 %v1843, %v1842
      %v1856 = vpack.c.b16 %v1845, %v1844
      %v1857 = vpack.c.b16 %v1847, %v1846
      %v1858 = vpack.c.b16 %v1849, %v1848
      %v1859 = vpack.c.b16 %v1851, %v1850
      %1868 = vmatpush.bf16.msra.mxu0 %v1859
      %1869 = vmatpush.bf16.msra.mxu0 %v1858
      %1870 = vmatpush.bf16.msra.mxu0 %v1857
      %1871 = vmatpush.bf16.msra.mxu0 %v1856
      %1872 = vmatpush.bf16.msra.mxu0 %v1855
      %1873 = vmatpush.bf16.msra.mxu0 %v1854
      %1874 = vmatpush.bf16.msra.mxu0 %v1853
      %1875 = vmatpush.bf16.msra.mxu0 %v1852
      %1876 = vmatmul.bf16.gmra.mxu0 %v1796
      %v1877 = vpop.f32.mrf.mxu0
      %v1878 = vadd.f32 0.0, %v1877
      %v1879 = vpop.f32.mrf.mxu0
      %v1880 = vadd.f32 0.0, %v1879
      %1881 = vmatmul.bf16.gmra.mxu0 %v1797
      %v1882 = vpop.f32.mrf.mxu0
      %v1883 = vadd.f32 0.0, %v1882
      %v1884 = vpop.f32.mrf.mxu0
      %v1885 = vadd.f32 0.0, %v1884
      %1886 = vmatmul.bf16.gmra.mxu0 %v1798
      %v1887 = vpop.f32.mrf.mxu0
      %v1888 = vadd.f32 0.0, %v1887
      %v1889 = vpop.f32.mrf.mxu0
      %v1890 = vadd.f32 0.0, %v1889
      %1891 = vmatmul.bf16.gmra.mxu0 %v1799
      %v1892 = vpop.f32.mrf.mxu0
      %v1893 = vadd.f32 0.0, %v1892
      %v1894 = vpop.f32.mrf.mxu0
      %v1895 = vadd.f32 0.0, %v1894
      %1896 = vmatmul.bf16.gmra.mxu0 %v1800
      %v1897 = vpop.f32.mrf.mxu0
      %v1898 = vadd.f32 0.0, %v1897
      %v1899 = vpop.f32.mrf.mxu0
      %v1900 = vadd.f32 0.0, %v1899
      %1901 = vmatmul.bf16.gmra.mxu0 %v1801
      %v1902 = vpop.f32.mrf.mxu0
      %v1903 = vadd.f32 0.0, %v1902
      %v1904 = vpop.f32.mrf.mxu0
      %v1905 = vadd.f32 0.0, %v1904
      %1906 = vmatmul.bf16.gmra.mxu0 %v1802
      %v1907 = vpop.f32.mrf.mxu0
      %v1908 = vadd.f32 0.0, %v1907
      %v1909 = vpop.f32.mrf.mxu0
      %1910 = vdwg.mxu0
      %v1911 = vadd.f32 %v1770, %v1878
      %v1912 = vadd.f32 %v1771, %v1880
      %v1913 = vadd.f32 %v1772, %v1883
      %v1914 = vadd.f32 %v1773, %v1885
      %v1915 = vadd.f32 %v1774, %v1888
      %v1916 = vadd.f32 %v1775, %v1890
      %v1917 = vadd.f32 %v1776, %v1893
      %v1918 = vadd.f32 %v1777, %v1895
      %v1919 = vadd.f32 %v1778, %v1898
      %v1920 = vadd.f32 %v1779, %v1900
      %v1921 = vadd.f32 %v1780, %v1903
      %v1922 = vadd.f32 %v1781, %v1905
      %v1923 = vadd.f32 %v1782, %v1908
      %v1924 = vld [vmem:[%s370 + $0x2] sm:$0xff]
      %v1925 = vld [vmem:[%s370 + $0xa] sm:$0xff]
      %v1926 = vld [vmem:[%s370 + $0x12] sm:$0xff]
      %v1927 = vld [vmem:[%s370 + $0x1a] sm:$0xff]
      %v1928 = vld [vmem:[%s370 + $0x22] sm:$0xff]
      %v1929 = vld [vmem:[%s370 + $0x2a] sm:$0xff]
      %v1930 = vld [vmem:[%s370 + $0x32] sm:$0xff]
      %v1931 = vld [vmem:[%s370 + $0x3a] sm:$0xff]
      %v1932 = vld [vmem:[%s370 + $0x42] sm:$0xff]
      %v1933 = vld [vmem:[%s370 + $0x4a] sm:$0xff]
      %v1934 = vld [vmem:[%s370 + $0x52] sm:$0xff]
      %v1935 = vld [vmem:[%s370 + $0x5a] sm:$0xff]
      %v1936 = vld [vmem:[%s370 + $0x62] sm:$0xf]
      %v1937 = vpack.c.bf16 %v1925, %v1924
      %v1938 = vpack.c.bf16 %v1927, %v1926
      %v1939 = vpack.c.bf16 %v1929, %v1928
      %v1940 = vpack.c.bf16 %v1931, %v1930
      %v1941 = vpack.c.bf16 %v1933, %v1932
      %v1942 = vpack.c.bf16 %v1935, %v1934
      %v1943 = vpack.c.bf16 %v1936, %v1936
      %s1944 = scalar_lea.vmem %s3, 704
      %v1945 = vld [vmem:[%s1944] sm:$0xf]
      %v1946 = vld [vmem:[%s1944 + $0x4] sm:$0xf]
      %v1947 = vld [vmem:[%s1944 + $0x8] sm:$0xf]
      %v1948 = vld [vmem:[%s1944 + $0xc] sm:$0xf]
      %v1949 = vld [vmem:[%s1944 + $0x10] sm:$0xf]
      %v1950 = vld [vmem:[%s1944 + $0x14] sm:$0xf]
      %v1951 = vld [vmem:[%s1944 + $0x18] sm:$0xf]
      %v1952 = vld [vmem:[%s1944 + $0x1c] sm:$0xf]
      %v1953 = vld [vmem:[%s1944 + $0x20] sm:$0xf]
      %v1954 = vld [vmem:[%s1944 + $0x24] sm:$0xf]
      %v1955 = vld [vmem:[%s1944 + $0x28] sm:$0xf]
      %v1956 = vld [vmem:[%s1944 + $0x2c] sm:$0xf]
      %v1957 = vld [vmem:[%s1944 + $0x30] sm:$0xf]
      %v1958 = vld [vmem:[%s1944 + $0x34] sm:$0xf]
      %v1959 = vld [vmem:[%s1944 + $0x38] sm:$0xf]
      %v1960 = vld [vmem:[%s1944 + $0x3c] sm:$0xf]
      %v1977 = vunpack.c.l.b16 %v1945
      %v1978 = vunpack.c.l.b16 %v1946
      %v1979 = vunpack.c.l.b16 %v1947
      %v1980 = vunpack.c.l.b16 %v1948
      %v1981 = vunpack.c.l.b16 %v1949
      %v1982 = vunpack.c.l.b16 %v1950
      %v1983 = vunpack.c.l.b16 %v1951
      %v1984 = vunpack.c.l.b16 %v1952
      %v1985 = vunpack.c.l.b16 %v1953
      %v1986 = vunpack.c.l.b16 %v1954
      %v1987 = vunpack.c.l.b16 %v1955
      %v1988 = vunpack.c.l.b16 %v1956
      %v1989 = vunpack.c.l.b16 %v1957
      %v1990 = vunpack.c.l.b16 %v1958
      %v1991 = vunpack.c.l.b16 %v1959
      %v1992 = vunpack.c.l.b16 %v1960
      %v1993 = vpack.c.b16 %v1978, %v1977
      %v1994 = vpack.c.b16 %v1980, %v1979
      %v1995 = vpack.c.b16 %v1982, %v1981
      %v1996 = vpack.c.b16 %v1984, %v1983
      %v1997 = vpack.c.b16 %v1986, %v1985
      %v1998 = vpack.c.b16 %v1988, %v1987
      %v1999 = vpack.c.b16 %v1990, %v1989
      %v2000 = vpack.c.b16 %v1992, %v1991
      %2009 = vmatpush.bf16.msra.mxu0 %v2000
      %2010 = vmatpush.bf16.msra.mxu0 %v1999
      %2011 = vmatpush.bf16.msra.mxu0 %v1998
      %2012 = vmatpush.bf16.msra.mxu0 %v1997
      %2013 = vmatpush.bf16.msra.mxu0 %v1996
      %2014 = vmatpush.bf16.msra.mxu0 %v1995
      %2015 = vmatpush.bf16.msra.mxu0 %v1994
      %2016 = vmatpush.bf16.msra.mxu0 %v1993
      %2017 = vmatmul.bf16.gmra.mxu0 %v1937
      %v2018 = vpop.f32.mrf.mxu0
      %v2019 = vadd.f32 0.0, %v2018
      %v2020 = vpop.f32.mrf.mxu0
      %v2021 = vadd.f32 0.0, %v2020
      %2022 = vmatmul.bf16.gmra.mxu0 %v1938
      %v2023 = vpop.f32.mrf.mxu0
      %v2024 = vadd.f32 0.0, %v2023
      %v2025 = vpop.f32.mrf.mxu0
      %v2026 = vadd.f32 0.0, %v2025
      %2027 = vmatmul.bf16.gmra.mxu0 %v1939
      %v2028 = vpop.f32.mrf.mxu0
      %v2029 = vadd.f32 0.0, %v2028
      %v2030 = vpop.f32.mrf.mxu0
      %v2031 = vadd.f32 0.0, %v2030
      %2032 = vmatmul.bf16.gmra.mxu0 %v1940
      %v2033 = vpop.f32.mrf.mxu0
      %v2034 = vadd.f32 0.0, %v2033
      %v2035 = vpop.f32.mrf.mxu0
      %v2036 = vadd.f32 0.0, %v2035
      %2037 = vmatmul.bf16.gmra.mxu0 %v1941
      %v2038 = vpop.f32.mrf.mxu0
      %v2039 = vadd.f32 0.0, %v2038
      %v2040 = vpop.f32.mrf.mxu0
      %v2041 = vadd.f32 0.0, %v2040
      %2042 = vmatmul.bf16.gmra.mxu0 %v1942
      %v2043 = vpop.f32.mrf.mxu0
      %v2044 = vadd.f32 0.0, %v2043
      %v2045 = vpop.f32.mrf.mxu0
      %v2046 = vadd.f32 0.0, %v2045
      %2047 = vmatmul.bf16.gmra.mxu0 %v1943
      %v2048 = vpop.f32.mrf.mxu0
      %v2049 = vadd.f32 0.0, %v2048
      %v2050 = vpop.f32.mrf.mxu0
      %2051 = vdwg.mxu0
      %v2052 = vadd.f32 %v1911, %v2019
      %v2053 = vadd.f32 %v1912, %v2021
      %v2054 = vadd.f32 %v1913, %v2024
      %v2055 = vadd.f32 %v1914, %v2026
      %v2056 = vadd.f32 %v1915, %v2029
      %v2057 = vadd.f32 %v1916, %v2031
      %v2058 = vadd.f32 %v1917, %v2034
      %v2059 = vadd.f32 %v1918, %v2036
      %v2060 = vadd.f32 %v1919, %v2039
      %v2061 = vadd.f32 %v1920, %v2041
      %v2062 = vadd.f32 %v1921, %v2044
      %v2063 = vadd.f32 %v1922, %v2046
      %v2064 = vadd.f32 %v1923, %v2049
      %v2065 = vld [vmem:[%s370 + $0xa] sm:$0xff]
      %v2066 = vld [vmem:[%s370 + $0x12] sm:$0xff]
      %v2067 = vld [vmem:[%s370 + $0x1a] sm:$0xff]
      %v2068 = vld [vmem:[%s370 + $0x22] sm:$0xff]
      %v2069 = vld [vmem:[%s370 + $0x2a] sm:$0xff]
      %v2070 = vld [vmem:[%s370 + $0x32] sm:$0xff]
      %v2071 = vld [vmem:[%s370 + $0x3a] sm:$0xff]
      %v2072 = vld [vmem:[%s370 + $0x42] sm:$0xff]
      %v2073 = vld [vmem:[%s370 + $0x4a] sm:$0xff]
      %v2074 = vld [vmem:[%s370 + $0x52] sm:$0xff]
      %v2075 = vld [vmem:[%s370 + $0x5a] sm:$0xff]
      %v2076 = vld [vmem:[%s370 + $0x62] sm:$0xff]
      %v2077 = vld [vmem:[%s370 + $0x6a] sm:$0xf]
      %v2078 = vpack.c.bf16 %v2066, %v2065
      %v2079 = vpack.c.bf16 %v2068, %v2067
      %v2080 = vpack.c.bf16 %v2070, %v2069
      %v2081 = vpack.c.bf16 %v2072, %v2071
      %v2082 = vpack.c.bf16 %v2074, %v2073
      %v2083 = vpack.c.bf16 %v2076, %v2075
      %v2084 = vpack.c.bf16 %v2077, %v2077
      %s2085 = scalar_lea.vmem %s3, 768
      %v2086 = vld [vmem:[%s2085] sm:$0xf]
      %v2087 = vld [vmem:[%s2085 + $0x4] sm:$0xf]
      %v2088 = vld [vmem:[%s2085 + $0x8] sm:$0xf]
      %v2089 = vld [vmem:[%s2085 + $0xc] sm:$0xf]
      %v2090 = vld [vmem:[%s2085 + $0x10] sm:$0xf]
      %v2091 = vld [vmem:[%s2085 + $0x14] sm:$0xf]
      %v2092 = vld [vmem:[%s2085 + $0x18] sm:$0xf]
      %v2093 = vld [vmem:[%s2085 + $0x1c] sm:$0xf]
      %v2094 = vld [vmem:[%s2085 + $0x20] sm:$0xf]
      %v2095 = vld [vmem:[%s2085 + $0x24] sm:$0xf]
      %v2096 = vld [vmem:[%s2085 + $0x28] sm:$0xf]
      %v2097 = vld [vmem:[%s2085 + $0x2c] sm:$0xf]
      %v2098 = vld [vmem:[%s2085 + $0x30] sm:$0xf]
      %v2099 = vld [vmem:[%s2085 + $0x34] sm:$0xf]
      %v2100 = vld [vmem:[%s2085 + $0x38] sm:$0xf]
      %v2101 = vld [vmem:[%s2085 + $0x3c] sm:$0xf]
      %v2118 = vunpack.c.l.b16 %v2086
      %v2119 = vunpack.c.l.b16 %v2087
      %v2120 = vunpack.c.l.b16 %v2088
      %v2121 = vunpack.c.l.b16 %v2089
      %v2122 = vunpack.c.l.b16 %v2090
      %v2123 = vunpack.c.l.b16 %v2091
      %v2124 = vunpack.c.l.b16 %v2092
      %v2125 = vunpack.c.l.b16 %v2093
      %v2126 = vunpack.c.l.b16 %v2094
      %v2127 = vunpack.c.l.b16 %v2095
      %v2128 = vunpack.c.l.b16 %v2096
      %v2129 = vunpack.c.l.b16 %v2097
      %v2130 = vunpack.c.l.b16 %v2098
      %v2131 = vunpack.c.l.b16 %v2099
      %v2132 = vunpack.c.l.b16 %v2100
      %v2133 = vunpack.c.l.b16 %v2101
      %v2134 = vpack.c.b16 %v2119, %v2118
      %v2135 = vpack.c.b16 %v2121, %v2120
      %v2136 = vpack.c.b16 %v2123, %v2122
      %v2137 = vpack.c.b16 %v2125, %v2124
      %v2138 = vpack.c.b16 %v2127, %v2126
      %v2139 = vpack.c.b16 %v2129, %v2128
      %v2140 = vpack.c.b16 %v2131, %v2130
      %v2141 = vpack.c.b16 %v2133, %v2132
      %2150 = vmatpush.bf16.msra.mxu0 %v2141
      %2151 = vmatpush.bf16.msra.mxu0 %v2140
      %2152 = vmatpush.bf16.msra.mxu0 %v2139
      %2153 = vmatpush.bf16.msra.mxu0 %v2138
      %2154 = vmatpush.bf16.msra.mxu0 %v2137
      %2155 = vmatpush.bf16.msra.mxu0 %v2136
      %2156 = vmatpush.bf16.msra.mxu0 %v2135
      %2157 = vmatpush.bf16.msra.mxu0 %v2134
      %2158 = vmatmul.bf16.gmra.mxu0 %v2078
      %v2159 = vpop.f32.mrf.mxu0
      %v2160 = vadd.f32 0.0, %v2159
      %v2161 = vpop.f32.mrf.mxu0
      %v2162 = vadd.f32 0.0, %v2161
      %2163 = vmatmul.bf16.gmra.mxu0 %v2079
      %v2164 = vpop.f32.mrf.mxu0
      %v2165 = vadd.f32 0.0, %v2164
      %v2166 = vpop.f32.mrf.mxu0
      %v2167 = vadd.f32 0.0, %v2166
      %2168 = vmatmul.bf16.gmra.mxu0 %v2080
      %v2169 = vpop.f32.mrf.mxu0
      %v2170 = vadd.f32 0.0, %v2169
      %v2171 = vpop.f32.mrf.mxu0
      %v2172 = vadd.f32 0.0, %v2171
      %2173 = vmatmul.bf16.gmra.mxu0 %v2081
      %v2174 = vpop.f32.mrf.mxu0
      %v2175 = vadd.f32 0.0, %v2174
      %v2176 = vpop.f32.mrf.mxu0
      %v2177 = vadd.f32 0.0, %v2176
      %2178 = vmatmul.bf16.gmra.mxu0 %v2082
      %v2179 = vpop.f32.mrf.mxu0
      %v2180 = vadd.f32 0.0, %v2179
      %v2181 = vpop.f32.mrf.mxu0
      %v2182 = vadd.f32 0.0, %v2181
      %2183 = vmatmul.bf16.gmra.mxu0 %v2083
      %v2184 = vpop.f32.mrf.mxu0
      %v2185 = vadd.f32 0.0, %v2184
      %v2186 = vpop.f32.mrf.mxu0
      %v2187 = vadd.f32 0.0, %v2186
      %2188 = vmatmul.bf16.gmra.mxu0 %v2084
      %v2189 = vpop.f32.mrf.mxu0
      %v2190 = vadd.f32 0.0, %v2189
      %v2191 = vpop.f32.mrf.mxu0
      %2192 = vdwg.mxu0
      %v2193 = vadd.f32 %v2052, %v2160
      %v2194 = vadd.f32 %v2053, %v2162
      %v2195 = vadd.f32 %v2054, %v2165
      %v2196 = vadd.f32 %v2055, %v2167
      %v2197 = vadd.f32 %v2056, %v2170
      %v2198 = vadd.f32 %v2057, %v2172
      %v2199 = vadd.f32 %v2058, %v2175
      %v2200 = vadd.f32 %v2059, %v2177
      %v2201 = vadd.f32 %v2060, %v2180
      %v2202 = vadd.f32 %v2061, %v2182
      %v2203 = vadd.f32 %v2062, %v2185
      %v2204 = vadd.f32 %v2063, %v2187
      %v2205 = vadd.f32 %v2064, %v2190
      %v2206 = vld [vmem:[%s370 + $0xb] sm:$0xff]
      %v2207 = vld [vmem:[%s370 + $0x13] sm:$0xff]
      %v2208 = vld [vmem:[%s370 + $0x1b] sm:$0xff]
      %v2209 = vld [vmem:[%s370 + $0x23] sm:$0xff]
      %v2210 = vld [vmem:[%s370 + $0x2b] sm:$0xff]
      %v2211 = vld [vmem:[%s370 + $0x33] sm:$0xff]
      %v2212 = vld [vmem:[%s370 + $0x3b] sm:$0xff]
      %v2213 = vld [vmem:[%s370 + $0x43] sm:$0xff]
      %v2214 = vld [vmem:[%s370 + $0x4b] sm:$0xff]
      %v2215 = vld [vmem:[%s370 + $0x53] sm:$0xff]
      %v2216 = vld [vmem:[%s370 + $0x5b] sm:$0xff]
      %v2217 = vld [vmem:[%s370 + $0x63] sm:$0xff]
      %v2218 = vld [vmem:[%s370 + $0x6b] sm:$0xf]
      %v2219 = vpack.c.bf16 %v2207, %v2206
      %v2220 = vpack.c.bf16 %v2209, %v2208
      %v2221 = vpack.c.bf16 %v2211, %v2210
      %v2222 = vpack.c.bf16 %v2213, %v2212
      %v2223 = vpack.c.bf16 %v2215, %v2214
      %v2224 = vpack.c.bf16 %v2217, %v2216
      %v2225 = vpack.c.bf16 %v2218, %v2218
      %s2226 = scalar_lea.vmem %s3, 832
      %v2227 = vld [vmem:[%s2226] sm:$0xf]
      %v2228 = vld [vmem:[%s2226 + $0x4] sm:$0xf]
      %v2229 = vld [vmem:[%s2226 + $0x8] sm:$0xf]
      %v2230 = vld [vmem:[%s2226 + $0xc] sm:$0xf]
      %v2231 = vld [vmem:[%s2226 + $0x10] sm:$0xf]
      %v2232 = vld [vmem:[%s2226 + $0x14] sm:$0xf]
      %v2233 = vld [vmem:[%s2226 + $0x18] sm:$0xf]
      %v2234 = vld [vmem:[%s2226 + $0x1c] sm:$0xf]
      %v2235 = vld [vmem:[%s2226 + $0x20] sm:$0xf]
      %v2236 = vld [vmem:[%s2226 + $0x24] sm:$0xf]
      %v2237 = vld [vmem:[%s2226 + $0x28] sm:$0xf]
      %v2238 = vld [vmem:[%s2226 + $0x2c] sm:$0xf]
      %v2239 = vld [vmem:[%s2226 + $0x30] sm:$0xf]
      %v2240 = vld [vmem:[%s2226 + $0x34] sm:$0xf]
      %v2241 = vld [vmem:[%s2226 + $0x38] sm:$0xf]
      %v2242 = vld [vmem:[%s2226 + $0x3c] sm:$0xf]
      %v2259 = vunpack.c.l.b16 %v2227
      %v2260 = vunpack.c.l.b16 %v2228
      %v2261 = vunpack.c.l.b16 %v2229
      %v2262 = vunpack.c.l.b16 %v2230
      %v2263 = vunpack.c.l.b16 %v2231
      %v2264 = vunpack.c.l.b16 %v2232
      %v2265 = vunpack.c.l.b16 %v2233
      %v2266 = vunpack.c.l.b16 %v2234
      %v2267 = vunpack.c.l.b16 %v2235
      %v2268 = vunpack.c.l.b16 %v2236
      %v2269 = vunpack.c.l.b16 %v2237
      %v2270 = vunpack.c.l.b16 %v2238
      %v2271 = vunpack.c.l.b16 %v2239
      %v2272 = vunpack.c.l.b16 %v2240
      %v2273 = vunpack.c.l.b16 %v2241
      %v2274 = vunpack.c.l.b16 %v2242
      %v2275 = vpack.c.b16 %v2260, %v2259
      %v2276 = vpack.c.b16 %v2262, %v2261
      %v2277 = vpack.c.b16 %v2264, %v2263
      %v2278 = vpack.c.b16 %v2266, %v2265
      %v2279 = vpack.c.b16 %v2268, %v2267
      %v2280 = vpack.c.b16 %v2270, %v2269
      %v2281 = vpack.c.b16 %v2272, %v2271
      %v2282 = vpack.c.b16 %v2274, %v2273
      %2291 = vmatpush.bf16.msra.mxu0 %v2282
      %2292 = vmatpush.bf16.msra.mxu0 %v2281
      %2293 = vmatpush.bf16.msra.mxu0 %v2280
      %2294 = vmatpush.bf16.msra.mxu0 %v2279
      %2295 = vmatpush.bf16.msra.mxu0 %v2278
      %2296 = vmatpush.bf16.msra.mxu0 %v2277
      %2297 = vmatpush.bf16.msra.mxu0 %v2276
      %2298 = vmatpush.bf16.msra.mxu0 %v2275
      %2299 = vmatmul.bf16.gmra.mxu0 %v2219
      %v2300 = vpop.f32.mrf.mxu0
      %v2301 = vadd.f32 0.0, %v2300
      %v2302 = vpop.f32.mrf.mxu0
      %v2303 = vadd.f32 0.0, %v2302
      %2304 = vmatmul.bf16.gmra.mxu0 %v2220
      %v2305 = vpop.f32.mrf.mxu0
      %v2306 = vadd.f32 0.0, %v2305
      %v2307 = vpop.f32.mrf.mxu0
      %v2308 = vadd.f32 0.0, %v2307
      %2309 = vmatmul.bf16.gmra.mxu0 %v2221
      %v2310 = vpop.f32.mrf.mxu0
      %v2311 = vadd.f32 0.0, %v2310
      %v2312 = vpop.f32.mrf.mxu0
      %v2313 = vadd.f32 0.0, %v2312
      %2314 = vmatmul.bf16.gmra.mxu0 %v2222
      %v2315 = vpop.f32.mrf.mxu0
      %v2316 = vadd.f32 0.0, %v2315
      %v2317 = vpop.f32.mrf.mxu0
      %v2318 = vadd.f32 0.0, %v2317
      %2319 = vmatmul.bf16.gmra.mxu0 %v2223
      %v2320 = vpop.f32.mrf.mxu0
      %v2321 = vadd.f32 0.0, %v2320
      %v2322 = vpop.f32.mrf.mxu0
      %v2323 = vadd.f32 0.0, %v2322
      %2324 = vmatmul.bf16.gmra.mxu0 %v2224
      %v2325 = vpop.f32.mrf.mxu0
      %v2326 = vadd.f32 0.0, %v2325
      %v2327 = vpop.f32.mrf.mxu0
      %v2328 = vadd.f32 0.0, %v2327
      %2329 = vmatmul.bf16.gmra.mxu0 %v2225
      %v2330 = vpop.f32.mrf.mxu0
      %v2331 = vadd.f32 0.0, %v2330
      %v2332 = vpop.f32.mrf.mxu0
      %2333 = vdwg.mxu0
      %v2334 = vadd.f32 %v2193, %v2301
      %v2335 = vadd.f32 %v2194, %v2303
      %v2336 = vadd.f32 %v2195, %v2306
      %v2337 = vadd.f32 %v2196, %v2308
      %v2338 = vadd.f32 %v2197, %v2311
      %v2339 = vadd.f32 %v2198, %v2313
      %v2340 = vadd.f32 %v2199, %v2316
      %v2341 = vadd.f32 %v2200, %v2318
      %v2342 = vadd.f32 %v2201, %v2321
      %v2343 = vadd.f32 %v2202, %v2323
      %v2344 = vadd.f32 %v2203, %v2326
      %v2345 = vadd.f32 %v2204, %v2328
      %v2346 = vadd.f32 %v2205, %v2331
      %v2347 = vld [vmem:[%s370 + $0xc] sm:$0xff]
      %v2348 = vld [vmem:[%s370 + $0x14] sm:$0xff]
      %v2349 = vld [vmem:[%s370 + $0x1c] sm:$0xff]
      %v2350 = vld [vmem:[%s370 + $0x24] sm:$0xff]
      %v2351 = vld [vmem:[%s370 + $0x2c] sm:$0xff]
      %v2352 = vld [vmem:[%s370 + $0x34] sm:$0xff]
      %v2353 = vld [vmem:[%s370 + $0x3c] sm:$0xff]
      %v2354 = vld [vmem:[%s370 + $0x44] sm:$0xff]
      %v2355 = vld [vmem:[%s370 + $0x4c] sm:$0xff]
      %v2356 = vld [vmem:[%s370 + $0x54] sm:$0xff]
      %v2357 = vld [vmem:[%s370 + $0x5c] sm:$0xff]
      %v2358 = vld [vmem:[%s370 + $0x64] sm:$0xff]
      %v2359 = vld [vmem:[%s370 + $0x6c] sm:$0xf]
      %v2360 = vpack.c.bf16 %v2348, %v2347
      %v2361 = vpack.c.bf16 %v2350, %v2349
      %v2362 = vpack.c.bf16 %v2352, %v2351
      %v2363 = vpack.c.bf16 %v2354, %v2353
      %v2364 = vpack.c.bf16 %v2356, %v2355
      %v2365 = vpack.c.bf16 %v2358, %v2357
      %v2366 = vpack.c.bf16 %v2359, %v2359
      %s2367 = scalar_lea.vmem %s3, 896
      %v2368 = vld [vmem:[%s2367] sm:$0xf]
      %v2369 = vld [vmem:[%s2367 + $0x4] sm:$0xf]
      %v2370 = vld [vmem:[%s2367 + $0x8] sm:$0xf]
      %v2371 = vld [vmem:[%s2367 + $0xc] sm:$0xf]
      %v2372 = vld [vmem:[%s2367 + $0x10] sm:$0xf]
      %v2373 = vld [vmem:[%s2367 + $0x14] sm:$0xf]
      %v2374 = vld [vmem:[%s2367 + $0x18] sm:$0xf]
      %v2375 = vld [vmem:[%s2367 + $0x1c] sm:$0xf]
      %v2376 = vld [vmem:[%s2367 + $0x20] sm:$0xf]
      %v2377 = vld [vmem:[%s2367 + $0x24] sm:$0xf]
      %v2378 = vld [vmem:[%s2367 + $0x28] sm:$0xf]
      %v2379 = vld [vmem:[%s2367 + $0x2c] sm:$0xf]
      %v2380 = vld [vmem:[%s2367 + $0x30] sm:$0xf]
      %v2381 = vld [vmem:[%s2367 + $0x34] sm:$0xf]
      %v2382 = vld [vmem:[%s2367 + $0x38] sm:$0xf]
      %v2383 = vld [vmem:[%s2367 + $0x3c] sm:$0xf]
      %v2400 = vunpack.c.l.b16 %v2368
      %v2401 = vunpack.c.l.b16 %v2369
      %v2402 = vunpack.c.l.b16 %v2370
      %v2403 = vunpack.c.l.b16 %v2371
      %v2404 = vunpack.c.l.b16 %v2372
      %v2405 = vunpack.c.l.b16 %v2373
      %v2406 = vunpack.c.l.b16 %v2374
      %v2407 = vunpack.c.l.b16 %v2375
      %v2408 = vunpack.c.l.b16 %v2376
      %v2409 = vunpack.c.l.b16 %v2377
      %v2410 = vunpack.c.l.b16 %v2378
      %v2411 = vunpack.c.l.b16 %v2379
      %v2412 = vunpack.c.l.b16 %v2380
      %v2413 = vunpack.c.l.b16 %v2381
      %v2414 = vunpack.c.l.b16 %v2382
      %v2415 = vunpack.c.l.b16 %v2383
      %v2416 = vpack.c.b16 %v2401, %v2400
      %v2417 = vpack.c.b16 %v2403, %v2402
      %v2418 = vpack.c.b16 %v2405, %v2404
      %v2419 = vpack.c.b16 %v2407, %v2406
      %v2420 = vpack.c.b16 %v2409, %v2408
      %v2421 = vpack.c.b16 %v2411, %v2410
      %v2422 = vpack.c.b16 %v2413, %v2412
      %v2423 = vpack.c.b16 %v2415, %v2414
      %2432 = vmatpush.bf16.msra.mxu0 %v2423
      %2433 = vmatpush.bf16.msra.mxu0 %v2422
      %2434 = vmatpush.bf16.msra.mxu0 %v2421
      %2435 = vmatpush.bf16.msra.mxu0 %v2420
      %2436 = vmatpush.bf16.msra.mxu0 %v2419
      %2437 = vmatpush.bf16.msra.mxu0 %v2418
      %2438 = vmatpush.bf16.msra.mxu0 %v2417
      %2439 = vmatpush.bf16.msra.mxu0 %v2416
      %2440 = vmatmul.bf16.gmra.mxu0 %v2360
      %v2441 = vpop.f32.mrf.mxu0
      %v2442 = vadd.f32 0.0, %v2441
      %v2443 = vpop.f32.mrf.mxu0
      %v2444 = vadd.f32 0.0, %v2443
      %2445 = vmatmul.bf16.gmra.mxu0 %v2361
      %v2446 = vpop.f32.mrf.mxu0
      %v2447 = vadd.f32 0.0, %v2446
      %v2448 = vpop.f32.mrf.mxu0
      %v2449 = vadd.f32 0.0, %v2448
      %2450 = vmatmul.bf16.gmra.mxu0 %v2362
      %v2451 = vpop.f32.mrf.mxu0
      %v2452 = vadd.f32 0.0, %v2451
      %v2453 = vpop.f32.mrf.mxu0
      %v2454 = vadd.f32 0.0, %v2453
      %2455 = vmatmul.bf16.gmra.mxu0 %v2363
      %v2456 = vpop.f32.mrf.mxu0
      %v2457 = vadd.f32 0.0, %v2456
      %v2458 = vpop.f32.mrf.mxu0
      %v2459 = vadd.f32 0.0, %v2458
      %2460 = vmatmul.bf16.gmra.mxu0 %v2364
      %v2461 = vpop.f32.mrf.mxu0
      %v2462 = vadd.f32 0.0, %v2461
      %v2463 = vpop.f32.mrf.mxu0
      %v2464 = vadd.f32 0.0, %v2463
      %2465 = vmatmul.bf16.gmra.mxu0 %v2365
      %v2466 = vpop.f32.mrf.mxu0
      %v2467 = vadd.f32 0.0, %v2466
      %v2468 = vpop.f32.mrf.mxu0
      %v2469 = vadd.f32 0.0, %v2468
      %2470 = vmatmul.bf16.gmra.mxu0 %v2366
      %v2471 = vpop.f32.mrf.mxu0
      %v2472 = vadd.f32 0.0, %v2471
      %v2473 = vpop.f32.mrf.mxu0
      %2474 = vdwg.mxu0
      %v2475 = vadd.f32 %v2334, %v2442
      %v2476 = vadd.f32 %v2335, %v2444
      %v2477 = vadd.f32 %v2336, %v2447
      %v2478 = vadd.f32 %v2337, %v2449
      %v2479 = vadd.f32 %v2338, %v2452
      %v2480 = vadd.f32 %v2339, %v2454
      %v2481 = vadd.f32 %v2340, %v2457
      %v2482 = vadd.f32 %v2341, %v2459
      %v2483 = vadd.f32 %v2342, %v2462
      %v2484 = vadd.f32 %v2343, %v2464
      %v2485 = vadd.f32 %v2344, %v2467
      %v2486 = vadd.f32 %v2345, %v2469
      %v2487 = vadd.f32 %v2346, %v2472
      %v2488 = vld [vmem:[%s370 + $0x14] sm:$0xff]
      %v2489 = vld [vmem:[%s370 + $0x1c] sm:$0xff]
      %v2490 = vld [vmem:[%s370 + $0x24] sm:$0xff]
      %v2491 = vld [vmem:[%s370 + $0x2c] sm:$0xff]
      %v2492 = vld [vmem:[%s370 + $0x34] sm:$0xff]
      %v2493 = vld [vmem:[%s370 + $0x3c] sm:$0xff]
      %v2494 = vld [vmem:[%s370 + $0x44] sm:$0xff]
      %v2495 = vld [vmem:[%s370 + $0x4c] sm:$0xff]
      %v2496 = vld [vmem:[%s370 + $0x54] sm:$0xff]
      %v2497 = vld [vmem:[%s370 + $0x5c] sm:$0xff]
      %v2498 = vld [vmem:[%s370 + $0x64] sm:$0xff]
      %v2499 = vld [vmem:[%s370 + $0x6c] sm:$0xff]
      %v2500 = vld [vmem:[%s370 + $0x74] sm:$0xf]
      %v2501 = vpack.c.bf16 %v2489, %v2488
      %v2502 = vpack.c.bf16 %v2491, %v2490
      %v2503 = vpack.c.bf16 %v2493, %v2492
      %v2504 = vpack.c.bf16 %v2495, %v2494
      %v2505 = vpack.c.bf16 %v2497, %v2496
      %v2506 = vpack.c.bf16 %v2499, %v2498
      %v2507 = vpack.c.bf16 %v2500, %v2500
      %s2508 = scalar_lea.vmem %s3, 960
      %v2509 = vld [vmem:[%s2508] sm:$0xf]
      %v2510 = vld [vmem:[%s2508 + $0x4] sm:$0xf]
      %v2511 = vld [vmem:[%s2508 + $0x8] sm:$0xf]
      %v2512 = vld [vmem:[%s2508 + $0xc] sm:$0xf]
      %v2513 = vld [vmem:[%s2508 + $0x10] sm:$0xf]
      %v2514 = vld [vmem:[%s2508 + $0x14] sm:$0xf]
      %v2515 = vld [vmem:[%s2508 + $0x18] sm:$0xf]
      %v2516 = vld [vmem:[%s2508 + $0x1c] sm:$0xf]
      %v2517 = vld [vmem:[%s2508 + $0x20] sm:$0xf]
      %v2518 = vld [vmem:[%s2508 + $0x24] sm:$0xf]
      %v2519 = vld [vmem:[%s2508 + $0x28] sm:$0xf]
      %v2520 = vld [vmem:[%s2508 + $0x2c] sm:$0xf]
      %v2521 = vld [vmem:[%s2508 + $0x30] sm:$0xf]
      %v2522 = vld [vmem:[%s2508 + $0x34] sm:$0xf]
      %v2523 = vld [vmem:[%s2508 + $0x38] sm:$0xf]
      %v2524 = vld [vmem:[%s2508 + $0x3c] sm:$0xf]
      %v2541 = vunpack.c.l.b16 %v2509
      %v2542 = vunpack.c.l.b16 %v2510
      %v2543 = vunpack.c.l.b16 %v2511
      %v2544 = vunpack.c.l.b16 %v2512
      %v2545 = vunpack.c.l.b16 %v2513
      %v2546 = vunpack.c.l.b16 %v2514
      %v2547 = vunpack.c.l.b16 %v2515
      %v2548 = vunpack.c.l.b16 %v2516
      %v2549 = vunpack.c.l.b16 %v2517
      %v2550 = vunpack.c.l.b16 %v2518
      %v2551 = vunpack.c.l.b16 %v2519
      %v2552 = vunpack.c.l.b16 %v2520
      %v2553 = vunpack.c.l.b16 %v2521
      %v2554 = vunpack.c.l.b16 %v2522
      %v2555 = vunpack.c.l.b16 %v2523
      %v2556 = vunpack.c.l.b16 %v2524
      %v2557 = vpack.c.b16 %v2542, %v2541
      %v2558 = vpack.c.b16 %v2544, %v2543
      %v2559 = vpack.c.b16 %v2546, %v2545
      %v2560 = vpack.c.b16 %v2548, %v2547
      %v2561 = vpack.c.b16 %v2550, %v2549
      %v2562 = vpack.c.b16 %v2552, %v2551
      %v2563 = vpack.c.b16 %v2554, %v2553
      %v2564 = vpack.c.b16 %v2556, %v2555
      %2573 = vmatpush.bf16.msra.mxu0 %v2564
      %2574 = vmatpush.bf16.msra.mxu0 %v2563
      %2575 = vmatpush.bf16.msra.mxu0 %v2562
      %2576 = vmatpush.bf16.msra.mxu0 %v2561
      %2577 = vmatpush.bf16.msra.mxu0 %v2560
      %2578 = vmatpush.bf16.msra.mxu0 %v2559
      %2579 = vmatpush.bf16.msra.mxu0 %v2558
      %2580 = vmatpush.bf16.msra.mxu0 %v2557
      %2581 = vmatmul.bf16.gmra.mxu0 %v2501
      %v2582 = vpop.f32.mrf.mxu0
      %v2583 = vadd.f32 0.0, %v2582
      %v2584 = vpop.f32.mrf.mxu0
      %v2585 = vadd.f32 0.0, %v2584
      %2586 = vmatmul.bf16.gmra.mxu0 %v2502
      %v2587 = vpop.f32.mrf.mxu0
      %v2588 = vadd.f32 0.0, %v2587
      %v2589 = vpop.f32.mrf.mxu0
      %v2590 = vadd.f32 0.0, %v2589
      %2591 = vmatmul.bf16.gmra.mxu0 %v2503
      %v2592 = vpop.f32.mrf.mxu0
      %v2593 = vadd.f32 0.0, %v2592
      %v2594 = vpop.f32.mrf.mxu0
      %v2595 = vadd.f32 0.0, %v2594
      %2596 = vmatmul.bf16.gmra.mxu0 %v2504
      %v2597 = vpop.f32.mrf.mxu0
      %v2598 = vadd.f32 0.0, %v2597
      %v2599 = vpop.f32.mrf.mxu0
      %v2600 = vadd.f32 0.0, %v2599
      %2601 = vmatmul.bf16.gmra.mxu0 %v2505
      %v2602 = vpop.f32.mrf.mxu0
      %v2603 = vadd.f32 0.0, %v2602
      %v2604 = vpop.f32.mrf.mxu0
      %v2605 = vadd.f32 0.0, %v2604
      %2606 = vmatmul.bf16.gmra.mxu0 %v2506
      %v2607 = vpop.f32.mrf.mxu0
      %v2608 = vadd.f32 0.0, %v2607
      %v2609 = vpop.f32.mrf.mxu0
      %v2610 = vadd.f32 0.0, %v2609
      %2611 = vmatmul.bf16.gmra.mxu0 %v2507
      %v2612 = vpop.f32.mrf.mxu0
      %v2613 = vadd.f32 0.0, %v2612
      %v2614 = vpop.f32.mrf.mxu0
      %2615 = vdwg.mxu0
      %v2616 = vadd.f32 %v2475, %v2583
      %v2617 = vadd.f32 %v2476, %v2585
      %v2618 = vadd.f32 %v2477, %v2588
      %v2619 = vadd.f32 %v2478, %v2590
      %v2620 = vadd.f32 %v2479, %v2593
      %v2621 = vadd.f32 %v2480, %v2595
      %v2622 = vadd.f32 %v2481, %v2598
      %v2623 = vadd.f32 %v2482, %v2600
      %v2624 = vadd.f32 %v2483, %v2603
      %v2625 = vadd.f32 %v2484, %v2605
      %v2626 = vadd.f32 %v2485, %v2608
      %v2627 = vadd.f32 %v2486, %v2610
      %v2628 = vadd.f32 %v2487, %v2613
      %v2629 = vld [vmem:[%s370 + $0x15] sm:$0xff]
      %v2630 = vld [vmem:[%s370 + $0x1d] sm:$0xff]
      %v2631 = vld [vmem:[%s370 + $0x25] sm:$0xff]
      %v2632 = vld [vmem:[%s370 + $0x2d] sm:$0xff]
      %v2633 = vld [vmem:[%s370 + $0x35] sm:$0xff]
      %v2634 = vld [vmem:[%s370 + $0x3d] sm:$0xff]
      %v2635 = vld [vmem:[%s370 + $0x45] sm:$0xff]
      %v2636 = vld [vmem:[%s370 + $0x4d] sm:$0xff]
      %v2637 = vld [vmem:[%s370 + $0x55] sm:$0xff]
      %v2638 = vld [vmem:[%s370 + $0x5d] sm:$0xff]
      %v2639 = vld [vmem:[%s370 + $0x65] sm:$0xff]
      %v2640 = vld [vmem:[%s370 + $0x6d] sm:$0xff]
      %v2641 = vld [vmem:[%s370 + $0x75] sm:$0xf]
      %v2642 = vpack.c.bf16 %v2630, %v2629
      %v2643 = vpack.c.bf16 %v2632, %v2631
      %v2644 = vpack.c.bf16 %v2634, %v2633
      %v2645 = vpack.c.bf16 %v2636, %v2635
      %v2646 = vpack.c.bf16 %v2638, %v2637
      %v2647 = vpack.c.bf16 %v2640, %v2639
      %v2648 = vpack.c.bf16 %v2641, %v2641
      %s2649 = scalar_lea.vmem %s3, 1024
      %v2650 = vld [vmem:[%s2649] sm:$0xf]
      %v2651 = vld [vmem:[%s2649 + $0x4] sm:$0xf]
      %v2652 = vld [vmem:[%s2649 + $0x8] sm:$0xf]
      %v2653 = vld [vmem:[%s2649 + $0xc] sm:$0xf]
      %v2654 = vld [vmem:[%s2649 + $0x10] sm:$0xf]
      %v2655 = vld [vmem:[%s2649 + $0x14] sm:$0xf]
      %v2656 = vld [vmem:[%s2649 + $0x18] sm:$0xf]
      %v2657 = vld [vmem:[%s2649 + $0x1c] sm:$0xf]
      %v2658 = vld [vmem:[%s2649 + $0x20] sm:$0xf]
      %v2659 = vld [vmem:[%s2649 + $0x24] sm:$0xf]
      %v2660 = vld [vmem:[%s2649 + $0x28] sm:$0xf]
      %v2661 = vld [vmem:[%s2649 + $0x2c] sm:$0xf]
      %v2662 = vld [vmem:[%s2649 + $0x30] sm:$0xf]
      %v2663 = vld [vmem:[%s2649 + $0x34] sm:$0xf]
      %v2664 = vld [vmem:[%s2649 + $0x38] sm:$0xf]
      %v2665 = vld [vmem:[%s2649 + $0x3c] sm:$0xf]
      %v2682 = vunpack.c.l.b16 %v2650
      %v2683 = vunpack.c.l.b16 %v2651
      %v2684 = vunpack.c.l.b16 %v2652
      %v2685 = vunpack.c.l.b16 %v2653
      %v2686 = vunpack.c.l.b16 %v2654
      %v2687 = vunpack.c.l.b16 %v2655
      %v2688 = vunpack.c.l.b16 %v2656
      %v2689 = vunpack.c.l.b16 %v2657
      %v2690 = vunpack.c.l.b16 %v2658
      %v2691 = vunpack.c.l.b16 %v2659
      %v2692 = vunpack.c.l.b16 %v2660
      %v2693 = vunpack.c.l.b16 %v2661
      %v2694 = vunpack.c.l.b16 %v2662
      %v2695 = vunpack.c.l.b16 %v2663
      %v2696 = vunpack.c.l.b16 %v2664
      %v2697 = vunpack.c.l.b16 %v2665
      %v2698 = vpack.c.b16 %v2683, %v2682
      %v2699 = vpack.c.b16 %v2685, %v2684
      %v2700 = vpack.c.b16 %v2687, %v2686
      %v2701 = vpack.c.b16 %v2689, %v2688
      %v2702 = vpack.c.b16 %v2691, %v2690
      %v2703 = vpack.c.b16 %v2693, %v2692
      %v2704 = vpack.c.b16 %v2695, %v2694
      %v2705 = vpack.c.b16 %v2697, %v2696
      %2714 = vmatpush.bf16.msra.mxu0 %v2705
      %2715 = vmatpush.bf16.msra.mxu0 %v2704
      %2716 = vmatpush.bf16.msra.mxu0 %v2703
      %2717 = vmatpush.bf16.msra.mxu0 %v2702
      %2718 = vmatpush.bf16.msra.mxu0 %v2701
      %2719 = vmatpush.bf16.msra.mxu0 %v2700
      %2720 = vmatpush.bf16.msra.mxu0 %v2699
      %2721 = vmatpush.bf16.msra.mxu0 %v2698
      %2722 = vmatmul.bf16.gmra.mxu0 %v2642
      %v2723 = vpop.f32.mrf.mxu0
      %v2724 = vadd.f32 0.0, %v2723
      %v2725 = vpop.f32.mrf.mxu0
      %v2726 = vadd.f32 0.0, %v2725
      %2727 = vmatmul.bf16.gmra.mxu0 %v2643
      %v2728 = vpop.f32.mrf.mxu0
      %v2729 = vadd.f32 0.0, %v2728
      %v2730 = vpop.f32.mrf.mxu0
      %v2731 = vadd.f32 0.0, %v2730
      %2732 = vmatmul.bf16.gmra.mxu0 %v2644
      %v2733 = vpop.f32.mrf.mxu0
      %v2734 = vadd.f32 0.0, %v2733
      %v2735 = vpop.f32.mrf.mxu0
      %v2736 = vadd.f32 0.0, %v2735
      %2737 = vmatmul.bf16.gmra.mxu0 %v2645
      %v2738 = vpop.f32.mrf.mxu0
      %v2739 = vadd.f32 0.0, %v2738
      %v2740 = vpop.f32.mrf.mxu0
      %v2741 = vadd.f32 0.0, %v2740
      %2742 = vmatmul.bf16.gmra.mxu0 %v2646
      %v2743 = vpop.f32.mrf.mxu0
      %v2744 = vadd.f32 0.0, %v2743
      %v2745 = vpop.f32.mrf.mxu0
      %v2746 = vadd.f32 0.0, %v2745
      %2747 = vmatmul.bf16.gmra.mxu0 %v2647
      %v2748 = vpop.f32.mrf.mxu0
      %v2749 = vadd.f32 0.0, %v2748
      %v2750 = vpop.f32.mrf.mxu0
      %v2751 = vadd.f32 0.0, %v2750
      %2752 = vmatmul.bf16.gmra.mxu0 %v2648
      %v2753 = vpop.f32.mrf.mxu0
      %v2754 = vadd.f32 0.0, %v2753
      %v2755 = vpop.f32.mrf.mxu0
      %2756 = vdwg.mxu0
      %v2757 = vadd.f32 %v2616, %v2724
      %v2758 = vadd.f32 %v2617, %v2726
      %v2759 = vadd.f32 %v2618, %v2729
      %v2760 = vadd.f32 %v2619, %v2731
      %v2761 = vadd.f32 %v2620, %v2734
      %v2762 = vadd.f32 %v2621, %v2736
      %v2763 = vadd.f32 %v2622, %v2739
      %v2764 = vadd.f32 %v2623, %v2741
      %v2765 = vadd.f32 %v2624, %v2744
      %v2766 = vadd.f32 %v2625, %v2746
      %v2767 = vadd.f32 %v2626, %v2749
      %v2768 = vadd.f32 %v2627, %v2751
      %v2769 = vadd.f32 %v2628, %v2754
      %v2770 = vld [vmem:[%s370 + $0x16] sm:$0xff]
      %v2771 = vld [vmem:[%s370 + $0x1e] sm:$0xff]
      %v2772 = vld [vmem:[%s370 + $0x26] sm:$0xff]
      %v2773 = vld [vmem:[%s370 + $0x2e] sm:$0xff]
      %v2774 = vld [vmem:[%s370 + $0x36] sm:$0xff]
      %v2775 = vld [vmem:[%s370 + $0x3e] sm:$0xff]
      %v2776 = vld [vmem:[%s370 + $0x46] sm:$0xff]
      %v2777 = vld [vmem:[%s370 + $0x4e] sm:$0xff]
      %v2778 = vld [vmem:[%s370 + $0x56] sm:$0xff]
      %v2779 = vld [vmem:[%s370 + $0x5e] sm:$0xff]
      %v2780 = vld [vmem:[%s370 + $0x66] sm:$0xff]
      %v2781 = vld [vmem:[%s370 + $0x6e] sm:$0xff]
      %v2782 = vld [vmem:[%s370 + $0x76] sm:$0xf]
      %v2783 = vpack.c.bf16 %v2771, %v2770
      %v2784 = vpack.c.bf16 %v2773, %v2772
      %v2785 = vpack.c.bf16 %v2775, %v2774
      %v2786 = vpack.c.bf16 %v2777, %v2776
      %v2787 = vpack.c.bf16 %v2779, %v2778
      %v2788 = vpack.c.bf16 %v2781, %v2780
      %v2789 = vpack.c.bf16 %v2782, %v2782
      %s2790 = scalar_lea.vmem %s3, 1088
      %v2791 = vld [vmem:[%s2790] sm:$0xf]
      %v2792 = vld [vmem:[%s2790 + $0x4] sm:$0xf]
      %v2793 = vld [vmem:[%s2790 + $0x8] sm:$0xf]
      %v2794 = vld [vmem:[%s2790 + $0xc] sm:$0xf]
      %v2795 = vld [vmem:[%s2790 + $0x10] sm:$0xf]
      %v2796 = vld [vmem:[%s2790 + $0x14] sm:$0xf]
      %v2797 = vld [vmem:[%s2790 + $0x18] sm:$0xf]
      %v2798 = vld [vmem:[%s2790 + $0x1c] sm:$0xf]
      %v2799 = vld [vmem:[%s2790 + $0x20] sm:$0xf]
      %v2800 = vld [vmem:[%s2790 + $0x24] sm:$0xf]
      %v2801 = vld [vmem:[%s2790 + $0x28] sm:$0xf]
      %v2802 = vld [vmem:[%s2790 + $0x2c] sm:$0xf]
      %v2803 = vld [vmem:[%s2790 + $0x30] sm:$0xf]
      %v2804 = vld [vmem:[%s2790 + $0x34] sm:$0xf]
      %v2805 = vld [vmem:[%s2790 + $0x38] sm:$0xf]
      %v2806 = vld [vmem:[%s2790 + $0x3c] sm:$0xf]
      %v2823 = vunpack.c.l.b16 %v2791
      %v2824 = vunpack.c.l.b16 %v2792
      %v2825 = vunpack.c.l.b16 %v2793
      %v2826 = vunpack.c.l.b16 %v2794
      %v2827 = vunpack.c.l.b16 %v2795
      %v2828 = vunpack.c.l.b16 %v2796
      %v2829 = vunpack.c.l.b16 %v2797
      %v2830 = vunpack.c.l.b16 %v2798
      %v2831 = vunpack.c.l.b16 %v2799
      %v2832 = vunpack.c.l.b16 %v2800
      %v2833 = vunpack.c.l.b16 %v2801
      %v2834 = vunpack.c.l.b16 %v2802
      %v2835 = vunpack.c.l.b16 %v2803
      %v2836 = vunpack.c.l.b16 %v2804
      %v2837 = vunpack.c.l.b16 %v2805
      %v2838 = vunpack.c.l.b16 %v2806
      %v2839 = vpack.c.b16 %v2824, %v2823
      %v2840 = vpack.c.b16 %v2826, %v2825
      %v2841 = vpack.c.b16 %v2828, %v2827
      %v2842 = vpack.c.b16 %v2830, %v2829
      %v2843 = vpack.c.b16 %v2832, %v2831
      %v2844 = vpack.c.b16 %v2834, %v2833
      %v2845 = vpack.c.b16 %v2836, %v2835
      %v2846 = vpack.c.b16 %v2838, %v2837
      %2855 = vmatpush.bf16.msra.mxu0 %v2846
      %2856 = vmatpush.bf16.msra.mxu0 %v2845
      %2857 = vmatpush.bf16.msra.mxu0 %v2844
      %2858 = vmatpush.bf16.msra.mxu0 %v2843
      %2859 = vmatpush.bf16.msra.mxu0 %v2842
      %2860 = vmatpush.bf16.msra.mxu0 %v2841
      %2861 = vmatpush.bf16.msra.mxu0 %v2840
      %2862 = vmatpush.bf16.msra.mxu0 %v2839
      %2863 = vmatmul.bf16.gmra.mxu0 %v2783
      %v2864 = vpop.f32.mrf.mxu0
      %v2865 = vadd.f32 0.0, %v2864
      %v2866 = vpop.f32.mrf.mxu0
      %v2867 = vadd.f32 0.0, %v2866
      %2868 = vmatmul.bf16.gmra.mxu0 %v2784
      %v2869 = vpop.f32.mrf.mxu0
      %v2870 = vadd.f32 0.0, %v2869
      %v2871 = vpop.f32.mrf.mxu0
      %v2872 = vadd.f32 0.0, %v2871
      %2873 = vmatmul.bf16.gmra.mxu0 %v2785
      %v2874 = vpop.f32.mrf.mxu0
      %v2875 = vadd.f32 0.0, %v2874
      %v2876 = vpop.f32.mrf.mxu0
      %v2877 = vadd.f32 0.0, %v2876
      %2878 = vmatmul.bf16.gmra.mxu0 %v2786
      %v2879 = vpop.f32.mrf.mxu0
      %v2880 = vadd.f32 0.0, %v2879
      %v2881 = vpop.f32.mrf.mxu0
      %v2882 = vadd.f32 0.0, %v2881
      %2883 = vmatmul.bf16.gmra.mxu0 %v2787
      %v2884 = vpop.f32.mrf.mxu0
      %v2885 = vadd.f32 0.0, %v2884
      %v2886 = vpop.f32.mrf.mxu0
      %v2887 = vadd.f32 0.0, %v2886
      %2888 = vmatmul.bf16.gmra.mxu0 %v2788
      %v2889 = vpop.f32.mrf.mxu0
      %v2890 = vadd.f32 0.0, %v2889
      %v2891 = vpop.f32.mrf.mxu0
      %v2892 = vadd.f32 0.0, %v2891
      %2893 = vmatmul.bf16.gmra.mxu0 %v2789
      %v2894 = vpop.f32.mrf.mxu0
      %v2895 = vadd.f32 0.0, %v2894
      %v2896 = vpop.f32.mrf.mxu0
      %2897 = vdwg.mxu0
      %v2898 = vadd.f32 %v2757, %v2865
      %v2899 = vadd.f32 %v2758, %v2867
      %v2900 = vadd.f32 %v2759, %v2870
      %v2901 = vadd.f32 %v2760, %v2872
      %v2902 = vadd.f32 %v2761, %v2875
      %v2903 = vadd.f32 %v2762, %v2877
      %v2904 = vadd.f32 %v2763, %v2880
      %v2905 = vadd.f32 %v2764, %v2882
      %v2906 = vadd.f32 %v2765, %v2885
      %v2907 = vadd.f32 %v2766, %v2887
      %v2908 = vadd.f32 %v2767, %v2890
      %v2909 = vadd.f32 %v2768, %v2892
      %v2910 = vadd.f32 %v2769, %v2895
      %v2911 = vld [vmem:[%s381] sm:$0xff]
      %v2912 = vld [vmem:[%s381 + $0x8] sm:$0xff]
      %v2913 = vld [vmem:[%s381 + $0x10] sm:$0xff]
      %v2914 = vld [vmem:[%s381 + $0x18] sm:$0xff]
      %v2915 = vld [vmem:[%s381 + $0x20] sm:$0xff]
      %v2916 = vld [vmem:[%s381 + $0x28] sm:$0xff]
      %v2917 = vld [vmem:[%s381 + $0x30] sm:$0xff]
      %v2918 = vld [vmem:[%s381 + $0x38] sm:$0xff]
      %v2919 = vld [vmem:[%s381 + $0x40] sm:$0xff]
      %v2920 = vld [vmem:[%s381 + $0x48] sm:$0xff]
      %v2921 = vld [vmem:[%s381 + $0x50] sm:$0xff]
      %v2922 = vld [vmem:[%s381 + $0x58] sm:$0xff]
      %v2923 = vld [vmem:[%s381 + $0x60] sm:$0xf]
      %v2924 = vpack.c.bf16 %v2912, %v2911
      %v2925 = vpack.c.bf16 %v2914, %v2913
      %v2926 = vpack.c.bf16 %v2916, %v2915
      %v2927 = vpack.c.bf16 %v2918, %v2917
      %v2928 = vpack.c.bf16 %v2920, %v2919
      %v2929 = vpack.c.bf16 %v2922, %v2921
      %v2930 = vpack.c.bf16 %v2923, %v2923
      %s2931 = scalar_lea.vmem %s3, 1152
      %v2932 = vld [vmem:[%s2931] sm:$0xf]
      %v2933 = vld [vmem:[%s2931 + $0x4] sm:$0xf]
      %v2934 = vld [vmem:[%s2931 + $0x8] sm:$0xf]
      %v2935 = vld [vmem:[%s2931 + $0xc] sm:$0xf]
      %v2936 = vld [vmem:[%s2931 + $0x10] sm:$0xf]
      %v2937 = vld [vmem:[%s2931 + $0x14] sm:$0xf]
      %v2938 = vld [vmem:[%s2931 + $0x18] sm:$0xf]
      %v2939 = vld [vmem:[%s2931 + $0x1c] sm:$0xf]
      %v2940 = vld [vmem:[%s2931 + $0x20] sm:$0xf]
      %v2941 = vld [vmem:[%s2931 + $0x24] sm:$0xf]
      %v2942 = vld [vmem:[%s2931 + $0x28] sm:$0xf]
      %v2943 = vld [vmem:[%s2931 + $0x2c] sm:$0xf]
      %v2944 = vld [vmem:[%s2931 + $0x30] sm:$0xf]
      %v2945 = vld [vmem:[%s2931 + $0x34] sm:$0xf]
      %v2946 = vld [vmem:[%s2931 + $0x38] sm:$0xf]
      %v2947 = vld [vmem:[%s2931 + $0x3c] sm:$0xf]
      %v2964 = vunpack.c.l.b16 %v2932
      %v2965 = vunpack.c.l.b16 %v2933
      %v2966 = vunpack.c.l.b16 %v2934
      %v2967 = vunpack.c.l.b16 %v2935
      %v2968 = vunpack.c.l.b16 %v2936
      %v2969 = vunpack.c.l.b16 %v2937
      %v2970 = vunpack.c.l.b16 %v2938
      %v2971 = vunpack.c.l.b16 %v2939
      %v2972 = vunpack.c.l.b16 %v2940
      %v2973 = vunpack.c.l.b16 %v2941
      %v2974 = vunpack.c.l.b16 %v2942
      %v2975 = vunpack.c.l.b16 %v2943
      %v2976 = vunpack.c.l.b16 %v2944
      %v2977 = vunpack.c.l.b16 %v2945
      %v2978 = vunpack.c.l.b16 %v2946
      %v2979 = vunpack.c.l.b16 %v2947
      %v2980 = vpack.c.b16 %v2965, %v2964
      %v2981 = vpack.c.b16 %v2967, %v2966
      %v2982 = vpack.c.b16 %v2969, %v2968
      %v2983 = vpack.c.b16 %v2971, %v2970
      %v2984 = vpack.c.b16 %v2973, %v2972
      %v2985 = vpack.c.b16 %v2975, %v2974
      %v2986 = vpack.c.b16 %v2977, %v2976
      %v2987 = vpack.c.b16 %v2979, %v2978
      %2996 = vmatpush.bf16.msra.mxu0 %v2987
      %2997 = vmatpush.bf16.msra.mxu0 %v2986
      %2998 = vmatpush.bf16.msra.mxu0 %v2985
      %2999 = vmatpush.bf16.msra.mxu0 %v2984
      %3000 = vmatpush.bf16.msra.mxu0 %v2983
      %3001 = vmatpush.bf16.msra.mxu0 %v2982
      %3002 = vmatpush.bf16.msra.mxu0 %v2981
      %3003 = vmatpush.bf16.msra.mxu0 %v2980
      %3004 = vmatmul.bf16.gmra.mxu0 %v2924
      %v3005 = vpop.f32.mrf.mxu0
      %v3006 = vadd.f32 0.0, %v3005
      %v3007 = vpop.f32.mrf.mxu0
      %v3008 = vadd.f32 0.0, %v3007
      %3009 = vmatmul.bf16.gmra.mxu0 %v2925
      %v3010 = vpop.f32.mrf.mxu0
      %v3011 = vadd.f32 0.0, %v3010
      %v3012 = vpop.f32.mrf.mxu0
      %v3013 = vadd.f32 0.0, %v3012
      %3014 = vmatmul.bf16.gmra.mxu0 %v2926
      %v3015 = vpop.f32.mrf.mxu0
      %v3016 = vadd.f32 0.0, %v3015
      %v3017 = vpop.f32.mrf.mxu0
      %v3018 = vadd.f32 0.0, %v3017
      %3019 = vmatmul.bf16.gmra.mxu0 %v2927
      %v3020 = vpop.f32.mrf.mxu0
      %v3021 = vadd.f32 0.0, %v3020
      %v3022 = vpop.f32.mrf.mxu0
      %v3023 = vadd.f32 0.0, %v3022
      %3024 = vmatmul.bf16.gmra.mxu0 %v2928
      %v3025 = vpop.f32.mrf.mxu0
      %v3026 = vadd.f32 0.0, %v3025
      %v3027 = vpop.f32.mrf.mxu0
      %v3028 = vadd.f32 0.0, %v3027
      %3029 = vmatmul.bf16.gmra.mxu0 %v2929
      %v3030 = vpop.f32.mrf.mxu0
      %v3031 = vadd.f32 0.0, %v3030
      %v3032 = vpop.f32.mrf.mxu0
      %v3033 = vadd.f32 0.0, %v3032
      %3034 = vmatmul.bf16.gmra.mxu0 %v2930
      %v3035 = vpop.f32.mrf.mxu0
      %v3036 = vadd.f32 0.0, %v3035
      %v3037 = vpop.f32.mrf.mxu0
      %3038 = vdwg.mxu0
      %v3039 = vadd.f32 %v2898, %v3006
      %v3040 = vadd.f32 %v2899, %v3008
      %v3041 = vadd.f32 %v2900, %v3011
      %v3042 = vadd.f32 %v2901, %v3013
      %v3043 = vadd.f32 %v2902, %v3016
      %v3044 = vadd.f32 %v2903, %v3018
      %v3045 = vadd.f32 %v2904, %v3021
      %v3046 = vadd.f32 %v2905, %v3023
      %v3047 = vadd.f32 %v2906, %v3026
      %v3048 = vadd.f32 %v2907, %v3028
      %v3049 = vadd.f32 %v2908, %v3031
      %v3050 = vadd.f32 %v2909, %v3033
      %v3051 = vadd.f32 %v2910, %v3036
      %v3052 = vld [vmem:[%s381 + $0x1] sm:$0xff]
      %v3053 = vld [vmem:[%s381 + $0x9] sm:$0xff]
      %v3054 = vld [vmem:[%s381 + $0x11] sm:$0xff]
      %v3055 = vld [vmem:[%s381 + $0x19] sm:$0xff]
      %v3056 = vld [vmem:[%s381 + $0x21] sm:$0xff]
      %v3057 = vld [vmem:[%s381 + $0x29] sm:$0xff]
      %v3058 = vld [vmem:[%s381 + $0x31] sm:$0xff]
      %v3059 = vld [vmem:[%s381 + $0x39] sm:$0xff]
      %v3060 = vld [vmem:[%s381 + $0x41] sm:$0xff]
      %v3061 = vld [vmem:[%s381 + $0x49] sm:$0xff]
      %v3062 = vld [vmem:[%s381 + $0x51] sm:$0xff]
      %v3063 = vld [vmem:[%s381 + $0x59] sm:$0xff]
      %v3064 = vld [vmem:[%s381 + $0x61] sm:$0xf]
      %v3065 = vpack.c.bf16 %v3053, %v3052
      %v3066 = vpack.c.bf16 %v3055, %v3054
      %v3067 = vpack.c.bf16 %v3057, %v3056
      %v3068 = vpack.c.bf16 %v3059, %v3058
      %v3069 = vpack.c.bf16 %v3061, %v3060
      %v3070 = vpack.c.bf16 %v3063, %v3062
      %v3071 = vpack.c.bf16 %v3064, %v3064
      %s3072 = scalar_lea.vmem %s3, 1216
      %v3073 = vld [vmem:[%s3072] sm:$0xf]
      %v3074 = vld [vmem:[%s3072 + $0x4] sm:$0xf]
      %v3075 = vld [vmem:[%s3072 + $0x8] sm:$0xf]
      %v3076 = vld [vmem:[%s3072 + $0xc] sm:$0xf]
      %v3077 = vld [vmem:[%s3072 + $0x10] sm:$0xf]
      %v3078 = vld [vmem:[%s3072 + $0x14] sm:$0xf]
      %v3079 = vld [vmem:[%s3072 + $0x18] sm:$0xf]
      %v3080 = vld [vmem:[%s3072 + $0x1c] sm:$0xf]
      %v3081 = vld [vmem:[%s3072 + $0x20] sm:$0xf]
      %v3082 = vld [vmem:[%s3072 + $0x24] sm:$0xf]
      %v3083 = vld [vmem:[%s3072 + $0x28] sm:$0xf]
      %v3084 = vld [vmem:[%s3072 + $0x2c] sm:$0xf]
      %v3085 = vld [vmem:[%s3072 + $0x30] sm:$0xf]
      %v3086 = vld [vmem:[%s3072 + $0x34] sm:$0xf]
      %v3087 = vld [vmem:[%s3072 + $0x38] sm:$0xf]
      %v3088 = vld [vmem:[%s3072 + $0x3c] sm:$0xf]
      %v3105 = vunpack.c.l.b16 %v3073
      %v3106 = vunpack.c.l.b16 %v3074
      %v3107 = vunpack.c.l.b16 %v3075
      %v3108 = vunpack.c.l.b16 %v3076
      %v3109 = vunpack.c.l.b16 %v3077
      %v3110 = vunpack.c.l.b16 %v3078
      %v3111 = vunpack.c.l.b16 %v3079
      %v3112 = vunpack.c.l.b16 %v3080
      %v3113 = vunpack.c.l.b16 %v3081
      %v3114 = vunpack.c.l.b16 %v3082
      %v3115 = vunpack.c.l.b16 %v3083
      %v3116 = vunpack.c.l.b16 %v3084
      %v3117 = vunpack.c.l.b16 %v3085
      %v3118 = vunpack.c.l.b16 %v3086
      %v3119 = vunpack.c.l.b16 %v3087
      %v3120 = vunpack.c.l.b16 %v3088
      %v3121 = vpack.c.b16 %v3106, %v3105
      %v3122 = vpack.c.b16 %v3108, %v3107
      %v3123 = vpack.c.b16 %v3110, %v3109
      %v3124 = vpack.c.b16 %v3112, %v3111
      %v3125 = vpack.c.b16 %v3114, %v3113
      %v3126 = vpack.c.b16 %v3116, %v3115
      %v3127 = vpack.c.b16 %v3118, %v3117
      %v3128 = vpack.c.b16 %v3120, %v3119
      %3137 = vmatpush.bf16.msra.mxu0 %v3128
      %3138 = vmatpush.bf16.msra.mxu0 %v3127
      %3139 = vmatpush.bf16.msra.mxu0 %v3126
      %3140 = vmatpush.bf16.msra.mxu0 %v3125
      %3141 = vmatpush.bf16.msra.mxu0 %v3124
      %3142 = vmatpush.bf16.msra.mxu0 %v3123
      %3143 = vmatpush.bf16.msra.mxu0 %v3122
      %3144 = vmatpush.bf16.msra.mxu0 %v3121
      %3145 = vmatmul.bf16.gmra.mxu0 %v3065
      %v3146 = vpop.f32.mrf.mxu0
      %v3147 = vadd.f32 0.0, %v3146
      %v3148 = vpop.f32.mrf.mxu0
      %v3149 = vadd.f32 0.0, %v3148
      %3150 = vmatmul.bf16.gmra.mxu0 %v3066
      %v3151 = vpop.f32.mrf.mxu0
      %v3152 = vadd.f32 0.0, %v3151
      %v3153 = vpop.f32.mrf.mxu0
      %v3154 = vadd.f32 0.0, %v3153
      %3155 = vmatmul.bf16.gmra.mxu0 %v3067
      %v3156 = vpop.f32.mrf.mxu0
      %v3157 = vadd.f32 0.0, %v3156
      %v3158 = vpop.f32.mrf.mxu0
      %v3159 = vadd.f32 0.0, %v3158
      %3160 = vmatmul.bf16.gmra.mxu0 %v3068
      %v3161 = vpop.f32.mrf.mxu0
      %v3162 = vadd.f32 0.0, %v3161
      %v3163 = vpop.f32.mrf.mxu0
      %v3164 = vadd.f32 0.0, %v3163
      %3165 = vmatmul.bf16.gmra.mxu0 %v3069
      %v3166 = vpop.f32.mrf.mxu0
      %v3167 = vadd.f32 0.0, %v3166
      %v3168 = vpop.f32.mrf.mxu0
      %v3169 = vadd.f32 0.0, %v3168
      %3170 = vmatmul.bf16.gmra.mxu0 %v3070
      %v3171 = vpop.f32.mrf.mxu0
      %v3172 = vadd.f32 0.0, %v3171
      %v3173 = vpop.f32.mrf.mxu0
      %v3174 = vadd.f32 0.0, %v3173
      %3175 = vmatmul.bf16.gmra.mxu0 %v3071
      %v3176 = vpop.f32.mrf.mxu0
      %v3177 = vadd.f32 0.0, %v3176
      %v3178 = vpop.f32.mrf.mxu0
      %3179 = vdwg.mxu0
      %v3180 = vadd.f32 %v3039, %v3147
      %v3181 = vadd.f32 %v3040, %v3149
      %v3182 = vadd.f32 %v3041, %v3152
      %v3183 = vadd.f32 %v3042, %v3154
      %v3184 = vadd.f32 %v3043, %v3157
      %v3185 = vadd.f32 %v3044, %v3159
      %v3186 = vadd.f32 %v3045, %v3162
      %v3187 = vadd.f32 %v3046, %v3164
      %v3188 = vadd.f32 %v3047, %v3167
      %v3189 = vadd.f32 %v3048, %v3169
      %v3190 = vadd.f32 %v3049, %v3172
      %v3191 = vadd.f32 %v3050, %v3174
      %v3192 = vadd.f32 %v3051, %v3177
      %v3193 = vld [vmem:[%s381 + $0x2] sm:$0xff]
      %v3194 = vld [vmem:[%s381 + $0xa] sm:$0xff]
      %v3195 = vld [vmem:[%s381 + $0x12] sm:$0xff]
      %v3196 = vld [vmem:[%s381 + $0x1a] sm:$0xff]
      %v3197 = vld [vmem:[%s381 + $0x22] sm:$0xff]
      %v3198 = vld [vmem:[%s381 + $0x2a] sm:$0xff]
      %v3199 = vld [vmem:[%s381 + $0x32] sm:$0xff]
      %v3200 = vld [vmem:[%s381 + $0x3a] sm:$0xff]
      %v3201 = vld [vmem:[%s381 + $0x42] sm:$0xff]
      %v3202 = vld [vmem:[%s381 + $0x4a] sm:$0xff]
      %v3203 = vld [vmem:[%s381 + $0x52] sm:$0xff]
      %v3204 = vld [vmem:[%s381 + $0x5a] sm:$0xff]
      %v3205 = vld [vmem:[%s381 + $0x62] sm:$0xf]
      %v3206 = vpack.c.bf16 %v3194, %v3193
      %v3207 = vpack.c.bf16 %v3196, %v3195
      %v3208 = vpack.c.bf16 %v3198, %v3197
      %v3209 = vpack.c.bf16 %v3200, %v3199
      %v3210 = vpack.c.bf16 %v3202, %v3201
      %v3211 = vpack.c.bf16 %v3204, %v3203
      %v3212 = vpack.c.bf16 %v3205, %v3205
      %s3213 = scalar_lea.vmem %s3, 1280
      %v3214 = vld [vmem:[%s3213] sm:$0xf]
      %v3215 = vld [vmem:[%s3213 + $0x4] sm:$0xf]
      %v3216 = vld [vmem:[%s3213 + $0x8] sm:$0xf]
      %v3217 = vld [vmem:[%s3213 + $0xc] sm:$0xf]
      %v3218 = vld [vmem:[%s3213 + $0x10] sm:$0xf]
      %v3219 = vld [vmem:[%s3213 + $0x14] sm:$0xf]
      %v3220 = vld [vmem:[%s3213 + $0x18] sm:$0xf]
      %v3221 = vld [vmem:[%s3213 + $0x1c] sm:$0xf]
      %v3222 = vld [vmem:[%s3213 + $0x20] sm:$0xf]
      %v3223 = vld [vmem:[%s3213 + $0x24] sm:$0xf]
      %v3224 = vld [vmem:[%s3213 + $0x28] sm:$0xf]
      %v3225 = vld [vmem:[%s3213 + $0x2c] sm:$0xf]
      %v3226 = vld [vmem:[%s3213 + $0x30] sm:$0xf]
      %v3227 = vld [vmem:[%s3213 + $0x34] sm:$0xf]
      %v3228 = vld [vmem:[%s3213 + $0x38] sm:$0xf]
      %v3229 = vld [vmem:[%s3213 + $0x3c] sm:$0xf]
      %v3246 = vunpack.c.l.b16 %v3214
      %v3247 = vunpack.c.l.b16 %v3215
      %v3248 = vunpack.c.l.b16 %v3216
      %v3249 = vunpack.c.l.b16 %v3217
      %v3250 = vunpack.c.l.b16 %v3218
      %v3251 = vunpack.c.l.b16 %v3219
      %v3252 = vunpack.c.l.b16 %v3220
      %v3253 = vunpack.c.l.b16 %v3221
      %v3254 = vunpack.c.l.b16 %v3222
      %v3255 = vunpack.c.l.b16 %v3223
      %v3256 = vunpack.c.l.b16 %v3224
      %v3257 = vunpack.c.l.b16 %v3225
      %v3258 = vunpack.c.l.b16 %v3226
      %v3259 = vunpack.c.l.b16 %v3227
      %v3260 = vunpack.c.l.b16 %v3228
      %v3261 = vunpack.c.l.b16 %v3229
      %v3262 = vpack.c.b16 %v3247, %v3246
      %v3263 = vpack.c.b16 %v3249, %v3248
      %v3264 = vpack.c.b16 %v3251, %v3250
      %v3265 = vpack.c.b16 %v3253, %v3252
      %v3266 = vpack.c.b16 %v3255, %v3254
      %v3267 = vpack.c.b16 %v3257, %v3256
      %v3268 = vpack.c.b16 %v3259, %v3258
      %v3269 = vpack.c.b16 %v3261, %v3260
      %3278 = vmatpush.bf16.msra.mxu0 %v3269
      %3279 = vmatpush.bf16.msra.mxu0 %v3268
      %3280 = vmatpush.bf16.msra.mxu0 %v3267
      %3281 = vmatpush.bf16.msra.mxu0 %v3266
      %3282 = vmatpush.bf16.msra.mxu0 %v3265
      %3283 = vmatpush.bf16.msra.mxu0 %v3264
      %3284 = vmatpush.bf16.msra.mxu0 %v3263
      %3285 = vmatpush.bf16.msra.mxu0 %v3262
      %3286 = vmatmul.bf16.gmra.mxu0 %v3206
      %v3287 = vpop.f32.mrf.mxu0
      %v3288 = vadd.f32 0.0, %v3287
      %v3289 = vpop.f32.mrf.mxu0
      %v3290 = vadd.f32 0.0, %v3289
      %3291 = vmatmul.bf16.gmra.mxu0 %v3207
      %v3292 = vpop.f32.mrf.mxu0
      %v3293 = vadd.f32 0.0, %v3292
      %v3294 = vpop.f32.mrf.mxu0
      %v3295 = vadd.f32 0.0, %v3294
      %3296 = vmatmul.bf16.gmra.mxu0 %v3208
      %v3297 = vpop.f32.mrf.mxu0
      %v3298 = vadd.f32 0.0, %v3297
      %v3299 = vpop.f32.mrf.mxu0
      %v3300 = vadd.f32 0.0, %v3299
      %3301 = vmatmul.bf16.gmra.mxu0 %v3209
      %v3302 = vpop.f32.mrf.mxu0
      %v3303 = vadd.f32 0.0, %v3302
      %v3304 = vpop.f32.mrf.mxu0
      %v3305 = vadd.f32 0.0, %v3304
      %3306 = vmatmul.bf16.gmra.mxu0 %v3210
      %v3307 = vpop.f32.mrf.mxu0
      %v3308 = vadd.f32 0.0, %v3307
      %v3309 = vpop.f32.mrf.mxu0
      %v3310 = vadd.f32 0.0, %v3309
      %3311 = vmatmul.bf16.gmra.mxu0 %v3211
      %v3312 = vpop.f32.mrf.mxu0
      %v3313 = vadd.f32 0.0, %v3312
      %v3314 = vpop.f32.mrf.mxu0
      %v3315 = vadd.f32 0.0, %v3314
      %3316 = vmatmul.bf16.gmra.mxu0 %v3212
      %v3317 = vpop.f32.mrf.mxu0
      %v3318 = vadd.f32 0.0, %v3317
      %v3319 = vpop.f32.mrf.mxu0
      %3320 = vdwg.mxu0
      %v3321 = vadd.f32 %v3180, %v3288
      %v3322 = vadd.f32 %v3181, %v3290
      %v3323 = vadd.f32 %v3182, %v3293
      %v3324 = vadd.f32 %v3183, %v3295
      %v3325 = vadd.f32 %v3184, %v3298
      %v3326 = vadd.f32 %v3185, %v3300
      %v3327 = vadd.f32 %v3186, %v3303
      %v3328 = vadd.f32 %v3187, %v3305
      %v3329 = vadd.f32 %v3188, %v3308
      %v3330 = vadd.f32 %v3189, %v3310
      %v3331 = vadd.f32 %v3190, %v3313
      %v3332 = vadd.f32 %v3191, %v3315
      %v3333 = vadd.f32 %v3192, %v3318
      %v3334 = vld [vmem:[%s381 + $0xa] sm:$0xff]
      %v3335 = vld [vmem:[%s381 + $0x12] sm:$0xff]
      %v3336 = vld [vmem:[%s381 + $0x1a] sm:$0xff]
      %v3337 = vld [vmem:[%s381 + $0x22] sm:$0xff]
      %v3338 = vld [vmem:[%s381 + $0x2a] sm:$0xff]
      %v3339 = vld [vmem:[%s381 + $0x32] sm:$0xff]
      %v3340 = vld [vmem:[%s381 + $0x3a] sm:$0xff]
      %v3341 = vld [vmem:[%s381 + $0x42] sm:$0xff]
      %v3342 = vld [vmem:[%s381 + $0x4a] sm:$0xff]
      %v3343 = vld [vmem:[%s381 + $0x52] sm:$0xff]
      %v3344 = vld [vmem:[%s381 + $0x5a] sm:$0xff]
      %v3345 = vld [vmem:[%s381 + $0x62] sm:$0xff]
      %v3346 = vld [vmem:[%s381 + $0x6a] sm:$0xf]
      %v3347 = vpack.c.bf16 %v3335, %v3334
      %v3348 = vpack.c.bf16 %v3337, %v3336
      %v3349 = vpack.c.bf16 %v3339, %v3338
      %v3350 = vpack.c.bf16 %v3341, %v3340
      %v3351 = vpack.c.bf16 %v3343, %v3342
      %v3352 = vpack.c.bf16 %v3345, %v3344
      %v3353 = vpack.c.bf16 %v3346, %v3346
      %s3354 = scalar_lea.vmem %s3, 1344
      %v3355 = vld [vmem:[%s3354] sm:$0xf]
      %v3356 = vld [vmem:[%s3354 + $0x4] sm:$0xf]
      %v3357 = vld [vmem:[%s3354 + $0x8] sm:$0xf]
      %v3358 = vld [vmem:[%s3354 + $0xc] sm:$0xf]
      %v3359 = vld [vmem:[%s3354 + $0x10] sm:$0xf]
      %v3360 = vld [vmem:[%s3354 + $0x14] sm:$0xf]
      %v3361 = vld [vmem:[%s3354 + $0x18] sm:$0xf]
      %v3362 = vld [vmem:[%s3354 + $0x1c] sm:$0xf]
      %v3363 = vld [vmem:[%s3354 + $0x20] sm:$0xf]
      %v3364 = vld [vmem:[%s3354 + $0x24] sm:$0xf]
      %v3365 = vld [vmem:[%s3354 + $0x28] sm:$0xf]
      %v3366 = vld [vmem:[%s3354 + $0x2c] sm:$0xf]
      %v3367 = vld [vmem:[%s3354 + $0x30] sm:$0xf]
      %v3368 = vld [vmem:[%s3354 + $0x34] sm:$0xf]
      %v3369 = vld [vmem:[%s3354 + $0x38] sm:$0xf]
      %v3370 = vld [vmem:[%s3354 + $0x3c] sm:$0xf]
      %v3387 = vunpack.c.l.b16 %v3355
      %v3388 = vunpack.c.l.b16 %v3356
      %v3389 = vunpack.c.l.b16 %v3357
      %v3390 = vunpack.c.l.b16 %v3358
      %v3391 = vunpack.c.l.b16 %v3359
      %v3392 = vunpack.c.l.b16 %v3360
      %v3393 = vunpack.c.l.b16 %v3361
      %v3394 = vunpack.c.l.b16 %v3362
      %v3395 = vunpack.c.l.b16 %v3363
      %v3396 = vunpack.c.l.b16 %v3364
      %v3397 = vunpack.c.l.b16 %v3365
      %v3398 = vunpack.c.l.b16 %v3366
      %v3399 = vunpack.c.l.b16 %v3367
      %v3400 = vunpack.c.l.b16 %v3368
      %v3401 = vunpack.c.l.b16 %v3369
      %v3402 = vunpack.c.l.b16 %v3370
      %v3403 = vpack.c.b16 %v3388, %v3387
      %v3404 = vpack.c.b16 %v3390, %v3389
      %v3405 = vpack.c.b16 %v3392, %v3391
      %v3406 = vpack.c.b16 %v3394, %v3393
      %v3407 = vpack.c.b16 %v3396, %v3395
      %v3408 = vpack.c.b16 %v3398, %v3397
      %v3409 = vpack.c.b16 %v3400, %v3399
      %v3410 = vpack.c.b16 %v3402, %v3401
      %3419 = vmatpush.bf16.msra.mxu0 %v3410
      %3420 = vmatpush.bf16.msra.mxu0 %v3409
      %3421 = vmatpush.bf16.msra.mxu0 %v3408
      %3422 = vmatpush.bf16.msra.mxu0 %v3407
      %3423 = vmatpush.bf16.msra.mxu0 %v3406
      %3424 = vmatpush.bf16.msra.mxu0 %v3405
      %3425 = vmatpush.bf16.msra.mxu0 %v3404
      %3426 = vmatpush.bf16.msra.mxu0 %v3403
      %3427 = vmatmul.bf16.gmra.mxu0 %v3347
      %v3428 = vpop.f32.mrf.mxu0
      %v3429 = vadd.f32 0.0, %v3428
      %v3430 = vpop.f32.mrf.mxu0
      %v3431 = vadd.f32 0.0, %v3430
      %3432 = vmatmul.bf16.gmra.mxu0 %v3348
      %v3433 = vpop.f32.mrf.mxu0
      %v3434 = vadd.f32 0.0, %v3433
      %v3435 = vpop.f32.mrf.mxu0
      %v3436 = vadd.f32 0.0, %v3435
      %3437 = vmatmul.bf16.gmra.mxu0 %v3349
      %v3438 = vpop.f32.mrf.mxu0
      %v3439 = vadd.f32 0.0, %v3438
      %v3440 = vpop.f32.mrf.mxu0
      %v3441 = vadd.f32 0.0, %v3440
      %3442 = vmatmul.bf16.gmra.mxu0 %v3350
      %v3443 = vpop.f32.mrf.mxu0
      %v3444 = vadd.f32 0.0, %v3443
      %v3445 = vpop.f32.mrf.mxu0
      %v3446 = vadd.f32 0.0, %v3445
      %3447 = vmatmul.bf16.gmra.mxu0 %v3351
      %v3448 = vpop.f32.mrf.mxu0
      %v3449 = vadd.f32 0.0, %v3448
      %v3450 = vpop.f32.mrf.mxu0
      %v3451 = vadd.f32 0.0, %v3450
      %3452 = vmatmul.bf16.gmra.mxu0 %v3352
      %v3453 = vpop.f32.mrf.mxu0
      %v3454 = vadd.f32 0.0, %v3453
      %v3455 = vpop.f32.mrf.mxu0
      %v3456 = vadd.f32 0.0, %v3455
      %3457 = vmatmul.bf16.gmra.mxu0 %v3353
      %v3458 = vpop.f32.mrf.mxu0
      %v3459 = vadd.f32 0.0, %v3458
      %v3460 = vpop.f32.mrf.mxu0
      %3461 = vdwg.mxu0
      %v3462 = vadd.f32 %v3321, %v3429
      %v3463 = vadd.f32 %v3322, %v3431
      %v3464 = vadd.f32 %v3323, %v3434
      %v3465 = vadd.f32 %v3324, %v3436
      %v3466 = vadd.f32 %v3325, %v3439
      %v3467 = vadd.f32 %v3326, %v3441
      %v3468 = vadd.f32 %v3327, %v3444
      %v3469 = vadd.f32 %v3328, %v3446
      %v3470 = vadd.f32 %v3329, %v3449
      %v3471 = vadd.f32 %v3330, %v3451
      %v3472 = vadd.f32 %v3331, %v3454
      %v3473 = vadd.f32 %v3332, %v3456
      %v3474 = vadd.f32 %v3333, %v3459
      %v3475 = vld [vmem:[%s381 + $0xb] sm:$0xff]
      %v3476 = vld [vmem:[%s381 + $0x13] sm:$0xff]
      %v3477 = vld [vmem:[%s381 + $0x1b] sm:$0xff]
      %v3478 = vld [vmem:[%s381 + $0x23] sm:$0xff]
      %v3479 = vld [vmem:[%s381 + $0x2b] sm:$0xff]
      %v3480 = vld [vmem:[%s381 + $0x33] sm:$0xff]
      %v3481 = vld [vmem:[%s381 + $0x3b] sm:$0xff]
      %v3482 = vld [vmem:[%s381 + $0x43] sm:$0xff]
      %v3483 = vld [vmem:[%s381 + $0x4b] sm:$0xff]
      %v3484 = vld [vmem:[%s381 + $0x53] sm:$0xff]
      %v3485 = vld [vmem:[%s381 + $0x5b] sm:$0xff]
      %v3486 = vld [vmem:[%s381 + $0x63] sm:$0xff]
      %v3487 = vld [vmem:[%s381 + $0x6b] sm:$0xf]
      %v3488 = vpack.c.bf16 %v3476, %v3475
      %v3489 = vpack.c.bf16 %v3478, %v3477
      %v3490 = vpack.c.bf16 %v3480, %v3479
      %v3491 = vpack.c.bf16 %v3482, %v3481
      %v3492 = vpack.c.bf16 %v3484, %v3483
      %v3493 = vpack.c.bf16 %v3486, %v3485
      %v3494 = vpack.c.bf16 %v3487, %v3487
      %s3495 = scalar_lea.vmem %s3, 1408
      %v3496 = vld [vmem:[%s3495] sm:$0xf]
      %v3497 = vld [vmem:[%s3495 + $0x4] sm:$0xf]
      %v3498 = vld [vmem:[%s3495 + $0x8] sm:$0xf]
      %v3499 = vld [vmem:[%s3495 + $0xc] sm:$0xf]
      %v3500 = vld [vmem:[%s3495 + $0x10] sm:$0xf]
      %v3501 = vld [vmem:[%s3495 + $0x14] sm:$0xf]
      %v3502 = vld [vmem:[%s3495 + $0x18] sm:$0xf]
      %v3503 = vld [vmem:[%s3495 + $0x1c] sm:$0xf]
      %v3504 = vld [vmem:[%s3495 + $0x20] sm:$0xf]
      %v3505 = vld [vmem:[%s3495 + $0x24] sm:$0xf]
      %v3506 = vld [vmem:[%s3495 + $0x28] sm:$0xf]
      %v3507 = vld [vmem:[%s3495 + $0x2c] sm:$0xf]
      %v3508 = vld [vmem:[%s3495 + $0x30] sm:$0xf]
      %v3509 = vld [vmem:[%s3495 + $0x34] sm:$0xf]
      %v3510 = vld [vmem:[%s3495 + $0x38] sm:$0xf]
      %v3511 = vld [vmem:[%s3495 + $0x3c] sm:$0xf]
      %v3528 = vunpack.c.l.b16 %v3496
      %v3529 = vunpack.c.l.b16 %v3497
      %v3530 = vunpack.c.l.b16 %v3498
      %v3531 = vunpack.c.l.b16 %v3499
      %v3532 = vunpack.c.l.b16 %v3500
      %v3533 = vunpack.c.l.b16 %v3501
      %v3534 = vunpack.c.l.b16 %v3502
      %v3535 = vunpack.c.l.b16 %v3503
      %v3536 = vunpack.c.l.b16 %v3504
      %v3537 = vunpack.c.l.b16 %v3505
      %v3538 = vunpack.c.l.b16 %v3506
      %v3539 = vunpack.c.l.b16 %v3507
      %v3540 = vunpack.c.l.b16 %v3508
      %v3541 = vunpack.c.l.b16 %v3509
      %v3542 = vunpack.c.l.b16 %v3510
      %v3543 = vunpack.c.l.b16 %v3511
      %v3544 = vpack.c.b16 %v3529, %v3528
      %v3545 = vpack.c.b16 %v3531, %v3530
      %v3546 = vpack.c.b16 %v3533, %v3532
      %v3547 = vpack.c.b16 %v3535, %v3534
      %v3548 = vpack.c.b16 %v3537, %v3536
      %v3549 = vpack.c.b16 %v3539, %v3538
      %v3550 = vpack.c.b16 %v3541, %v3540
      %v3551 = vpack.c.b16 %v3543, %v3542
      %3560 = vmatpush.bf16.msra.mxu0 %v3551
      %3561 = vmatpush.bf16.msra.mxu0 %v3550
      %3562 = vmatpush.bf16.msra.mxu0 %v3549
      %3563 = vmatpush.bf16.msra.mxu0 %v3548
      %3564 = vmatpush.bf16.msra.mxu0 %v3547
      %3565 = vmatpush.bf16.msra.mxu0 %v3546
      %3566 = vmatpush.bf16.msra.mxu0 %v3545
      %3567 = vmatpush.bf16.msra.mxu0 %v3544
      %3568 = vmatmul.bf16.gmra.mxu0 %v3488
      %v3569 = vpop.f32.mrf.mxu0
      %v3570 = vadd.f32 0.0, %v3569
      %v3571 = vpop.f32.mrf.mxu0
      %v3572 = vadd.f32 0.0, %v3571
      %3573 = vmatmul.bf16.gmra.mxu0 %v3489
      %v3574 = vpop.f32.mrf.mxu0
      %v3575 = vadd.f32 0.0, %v3574
      %v3576 = vpop.f32.mrf.mxu0
      %v3577 = vadd.f32 0.0, %v3576
      %3578 = vmatmul.bf16.gmra.mxu0 %v3490
      %v3579 = vpop.f32.mrf.mxu0
      %v3580 = vadd.f32 0.0, %v3579
      %v3581 = vpop.f32.mrf.mxu0
      %v3582 = vadd.f32 0.0, %v3581
      %3583 = vmatmul.bf16.gmra.mxu0 %v3491
      %v3584 = vpop.f32.mrf.mxu0
      %v3585 = vadd.f32 0.0, %v3584
      %v3586 = vpop.f32.mrf.mxu0
      %v3587 = vadd.f32 0.0, %v3586
      %3588 = vmatmul.bf16.gmra.mxu0 %v3492
      %v3589 = vpop.f32.mrf.mxu0
      %v3590 = vadd.f32 0.0, %v3589
      %v3591 = vpop.f32.mrf.mxu0
      %v3592 = vadd.f32 0.0, %v3591
      %3593 = vmatmul.bf16.gmra.mxu0 %v3493
      %v3594 = vpop.f32.mrf.mxu0
      %v3595 = vadd.f32 0.0, %v3594
      %v3596 = vpop.f32.mrf.mxu0
      %v3597 = vadd.f32 0.0, %v3596
      %3598 = vmatmul.bf16.gmra.mxu0 %v3494
      %v3599 = vpop.f32.mrf.mxu0
      %v3600 = vadd.f32 0.0, %v3599
      %v3601 = vpop.f32.mrf.mxu0
      %3602 = vdwg.mxu0
      %v3603 = vadd.f32 %v3462, %v3570
      %v3604 = vadd.f32 %v3463, %v3572
      %v3605 = vadd.f32 %v3464, %v3575
      %v3606 = vadd.f32 %v3465, %v3577
      %v3607 = vadd.f32 %v3466, %v3580
      %v3608 = vadd.f32 %v3467, %v3582
      %v3609 = vadd.f32 %v3468, %v3585
      %v3610 = vadd.f32 %v3469, %v3587
      %v3611 = vadd.f32 %v3470, %v3590
      %v3612 = vadd.f32 %v3471, %v3592
      %v3613 = vadd.f32 %v3472, %v3595
      %v3614 = vadd.f32 %v3473, %v3597
      %v3615 = vadd.f32 %v3474, %v3600
      %v3616 = vld [vmem:[%s381 + $0xc] sm:$0xff]
      %v3617 = vld [vmem:[%s381 + $0x14] sm:$0xff]
      %v3618 = vld [vmem:[%s381 + $0x1c] sm:$0xff]
      %v3619 = vld [vmem:[%s381 + $0x24] sm:$0xff]
      %v3620 = vld [vmem:[%s381 + $0x2c] sm:$0xff]
      %v3621 = vld [vmem:[%s381 + $0x34] sm:$0xff]
      %v3622 = vld [vmem:[%s381 + $0x3c] sm:$0xff]
      %v3623 = vld [vmem:[%s381 + $0x44] sm:$0xff]
      %v3624 = vld [vmem:[%s381 + $0x4c] sm:$0xff]
      %v3625 = vld [vmem:[%s381 + $0x54] sm:$0xff]
      %v3626 = vld [vmem:[%s381 + $0x5c] sm:$0xff]
      %v3627 = vld [vmem:[%s381 + $0x64] sm:$0xff]
      %v3628 = vld [vmem:[%s381 + $0x6c] sm:$0xf]
      %v3629 = vpack.c.bf16 %v3617, %v3616
      %v3630 = vpack.c.bf16 %v3619, %v3618
      %v3631 = vpack.c.bf16 %v3621, %v3620
      %v3632 = vpack.c.bf16 %v3623, %v3622
      %v3633 = vpack.c.bf16 %v3625, %v3624
      %v3634 = vpack.c.bf16 %v3627, %v3626
      %v3635 = vpack.c.bf16 %v3628, %v3628
      %s3636 = scalar_lea.vmem %s3, 1472
      %v3637 = vld [vmem:[%s3636] sm:$0xf]
      %v3638 = vld [vmem:[%s3636 + $0x4] sm:$0xf]
      %v3639 = vld [vmem:[%s3636 + $0x8] sm:$0xf]
      %v3640 = vld [vmem:[%s3636 + $0xc] sm:$0xf]
      %v3641 = vld [vmem:[%s3636 + $0x10] sm:$0xf]
      %v3642 = vld [vmem:[%s3636 + $0x14] sm:$0xf]
      %v3643 = vld [vmem:[%s3636 + $0x18] sm:$0xf]
      %v3644 = vld [vmem:[%s3636 + $0x1c] sm:$0xf]
      %v3645 = vld [vmem:[%s3636 + $0x20] sm:$0xf]
      %v3646 = vld [vmem:[%s3636 + $0x24] sm:$0xf]
      %v3647 = vld [vmem:[%s3636 + $0x28] sm:$0xf]
      %v3648 = vld [vmem:[%s3636 + $0x2c] sm:$0xf]
      %v3649 = vld [vmem:[%s3636 + $0x30] sm:$0xf]
      %v3650 = vld [vmem:[%s3636 + $0x34] sm:$0xf]
      %v3651 = vld [vmem:[%s3636 + $0x38] sm:$0xf]
      %v3652 = vld [vmem:[%s3636 + $0x3c] sm:$0xf]
      %v3669 = vunpack.c.l.b16 %v3637
      %v3670 = vunpack.c.l.b16 %v3638
      %v3671 = vunpack.c.l.b16 %v3639
      %v3672 = vunpack.c.l.b16 %v3640
      %v3673 = vunpack.c.l.b16 %v3641
      %v3674 = vunpack.c.l.b16 %v3642
      %v3675 = vunpack.c.l.b16 %v3643
      %v3676 = vunpack.c.l.b16 %v3644
      %v3677 = vunpack.c.l.b16 %v3645
      %v3678 = vunpack.c.l.b16 %v3646
      %v3679 = vunpack.c.l.b16 %v3647
      %v3680 = vunpack.c.l.b16 %v3648
      %v3681 = vunpack.c.l.b16 %v3649
      %v3682 = vunpack.c.l.b16 %v3650
      %v3683 = vunpack.c.l.b16 %v3651
      %v3684 = vunpack.c.l.b16 %v3652
      %v3685 = vpack.c.b16 %v3670, %v3669
      %v3686 = vpack.c.b16 %v3672, %v3671
      %v3687 = vpack.c.b16 %v3674, %v3673
      %v3688 = vpack.c.b16 %v3676, %v3675
      %v3689 = vpack.c.b16 %v3678, %v3677
      %v3690 = vpack.c.b16 %v3680, %v3679
      %v3691 = vpack.c.b16 %v3682, %v3681
      %v3692 = vpack.c.b16 %v3684, %v3683
      %3701 = vmatpush.bf16.msra.mxu0 %v3692
      %3702 = vmatpush.bf16.msra.mxu0 %v3691
      %3703 = vmatpush.bf16.msra.mxu0 %v3690
      %3704 = vmatpush.bf16.msra.mxu0 %v3689
      %3705 = vmatpush.bf16.msra.mxu0 %v3688
      %3706 = vmatpush.bf16.msra.mxu0 %v3687
      %3707 = vmatpush.bf16.msra.mxu0 %v3686
      %3708 = vmatpush.bf16.msra.mxu0 %v3685
      %3709 = vmatmul.bf16.gmra.mxu0 %v3629
      %v3710 = vpop.f32.mrf.mxu0
      %v3711 = vadd.f32 0.0, %v3710
      %v3712 = vpop.f32.mrf.mxu0
      %v3713 = vadd.f32 0.0, %v3712
      %3714 = vmatmul.bf16.gmra.mxu0 %v3630
      %v3715 = vpop.f32.mrf.mxu0
      %v3716 = vadd.f32 0.0, %v3715
      %v3717 = vpop.f32.mrf.mxu0
      %v3718 = vadd.f32 0.0, %v3717
      %3719 = vmatmul.bf16.gmra.mxu0 %v3631
      %v3720 = vpop.f32.mrf.mxu0
      %v3721 = vadd.f32 0.0, %v3720
      %v3722 = vpop.f32.mrf.mxu0
      %v3723 = vadd.f32 0.0, %v3722
      %3724 = vmatmul.bf16.gmra.mxu0 %v3632
      %v3725 = vpop.f32.mrf.mxu0
      %v3726 = vadd.f32 0.0, %v3725
      %v3727 = vpop.f32.mrf.mxu0
      %v3728 = vadd.f32 0.0, %v3727
      %3729 = vmatmul.bf16.gmra.mxu0 %v3633
      %v3730 = vpop.f32.mrf.mxu0
      %v3731 = vadd.f32 0.0, %v3730
      %v3732 = vpop.f32.mrf.mxu0
      %v3733 = vadd.f32 0.0, %v3732
      %3734 = vmatmul.bf16.gmra.mxu0 %v3634
      %v3735 = vpop.f32.mrf.mxu0
      %v3736 = vadd.f32 0.0, %v3735
      %v3737 = vpop.f32.mrf.mxu0
      %v3738 = vadd.f32 0.0, %v3737
      %3739 = vmatmul.bf16.gmra.mxu0 %v3635
      %v3740 = vpop.f32.mrf.mxu0
      %v3741 = vadd.f32 0.0, %v3740
      %v3742 = vpop.f32.mrf.mxu0
      %3743 = vdwg.mxu0
      %v3744 = vadd.f32 %v3603, %v3711
      %v3745 = vadd.f32 %v3604, %v3713
      %v3746 = vadd.f32 %v3605, %v3716
      %v3747 = vadd.f32 %v3606, %v3718
      %v3748 = vadd.f32 %v3607, %v3721
      %v3749 = vadd.f32 %v3608, %v3723
      %v3750 = vadd.f32 %v3609, %v3726
      %v3751 = vadd.f32 %v3610, %v3728
      %v3752 = vadd.f32 %v3611, %v3731
      %v3753 = vadd.f32 %v3612, %v3733
      %v3754 = vadd.f32 %v3613, %v3736
      %v3755 = vadd.f32 %v3614, %v3738
      %v3756 = vadd.f32 %v3615, %v3741
      %v3757 = vld [vmem:[%s381 + $0x14] sm:$0xff]
      %v3758 = vld [vmem:[%s381 + $0x1c] sm:$0xff]
      %v3759 = vld [vmem:[%s381 + $0x24] sm:$0xff]
      %v3760 = vld [vmem:[%s381 + $0x2c] sm:$0xff]
      %v3761 = vld [vmem:[%s381 + $0x34] sm:$0xff]
      %v3762 = vld [vmem:[%s381 + $0x3c] sm:$0xff]
      %v3763 = vld [vmem:[%s381 + $0x44] sm:$0xff]
      %v3764 = vld [vmem:[%s381 + $0x4c] sm:$0xff]
      %v3765 = vld [vmem:[%s381 + $0x54] sm:$0xff]
      %v3766 = vld [vmem:[%s381 + $0x5c] sm:$0xff]
      %v3767 = vld [vmem:[%s381 + $0x64] sm:$0xff]
      %v3768 = vld [vmem:[%s381 + $0x6c] sm:$0xff]
      %v3769 = vld [vmem:[%s381 + $0x74] sm:$0xf]
      %v3770 = vpack.c.bf16 %v3758, %v3757
      %v3771 = vpack.c.bf16 %v3760, %v3759
      %v3772 = vpack.c.bf16 %v3762, %v3761
      %v3773 = vpack.c.bf16 %v3764, %v3763
      %v3774 = vpack.c.bf16 %v3766, %v3765
      %v3775 = vpack.c.bf16 %v3768, %v3767
      %v3776 = vpack.c.bf16 %v3769, %v3769
      %s3777 = scalar_lea.vmem %s3, 1536
      %v3778 = vld [vmem:[%s3777] sm:$0xf]
      %v3779 = vld [vmem:[%s3777 + $0x4] sm:$0xf]
      %v3780 = vld [vmem:[%s3777 + $0x8] sm:$0xf]
      %v3781 = vld [vmem:[%s3777 + $0xc] sm:$0xf]
      %v3782 = vld [vmem:[%s3777 + $0x10] sm:$0xf]
      %v3783 = vld [vmem:[%s3777 + $0x14] sm:$0xf]
      %v3784 = vld [vmem:[%s3777 + $0x18] sm:$0xf]
      %v3785 = vld [vmem:[%s3777 + $0x1c] sm:$0xf]
      %v3786 = vld [vmem:[%s3777 + $0x20] sm:$0xf]
      %v3787 = vld [vmem:[%s3777 + $0x24] sm:$0xf]
      %v3788 = vld [vmem:[%s3777 + $0x28] sm:$0xf]
      %v3789 = vld [vmem:[%s3777 + $0x2c] sm:$0xf]
      %v3790 = vld [vmem:[%s3777 + $0x30] sm:$0xf]
      %v3791 = vld [vmem:[%s3777 + $0x34] sm:$0xf]
      %v3792 = vld [vmem:[%s3777 + $0x38] sm:$0xf]
      %v3793 = vld [vmem:[%s3777 + $0x3c] sm:$0xf]
      %v3810 = vunpack.c.l.b16 %v3778
      %v3811 = vunpack.c.l.b16 %v3779
      %v3812 = vunpack.c.l.b16 %v3780
      %v3813 = vunpack.c.l.b16 %v3781
      %v3814 = vunpack.c.l.b16 %v3782
      %v3815 = vunpack.c.l.b16 %v3783
      %v3816 = vunpack.c.l.b16 %v3784
      %v3817 = vunpack.c.l.b16 %v3785
      %v3818 = vunpack.c.l.b16 %v3786
      %v3819 = vunpack.c.l.b16 %v3787
      %v3820 = vunpack.c.l.b16 %v3788
      %v3821 = vunpack.c.l.b16 %v3789
      %v3822 = vunpack.c.l.b16 %v3790
      %v3823 = vunpack.c.l.b16 %v3791
      %v3824 = vunpack.c.l.b16 %v3792
      %v3825 = vunpack.c.l.b16 %v3793
      %v3826 = vpack.c.b16 %v3811, %v3810
      %v3827 = vpack.c.b16 %v3813, %v3812
      %v3828 = vpack.c.b16 %v3815, %v3814
      %v3829 = vpack.c.b16 %v3817, %v3816
      %v3830 = vpack.c.b16 %v3819, %v3818
      %v3831 = vpack.c.b16 %v3821, %v3820
      %v3832 = vpack.c.b16 %v3823, %v3822
      %v3833 = vpack.c.b16 %v3825, %v3824
      %3842 = vmatpush.bf16.msra.mxu0 %v3833
      %3843 = vmatpush.bf16.msra.mxu0 %v3832
      %3844 = vmatpush.bf16.msra.mxu0 %v3831
      %3845 = vmatpush.bf16.msra.mxu0 %v3830
      %3846 = vmatpush.bf16.msra.mxu0 %v3829
      %3847 = vmatpush.bf16.msra.mxu0 %v3828
      %3848 = vmatpush.bf16.msra.mxu0 %v3827
      %3849 = vmatpush.bf16.msra.mxu0 %v3826
      %3850 = vmatmul.bf16.gmra.mxu0 %v3770
      %v3851 = vpop.f32.mrf.mxu0
      %v3852 = vadd.f32 0.0, %v3851
      %v3853 = vpop.f32.mrf.mxu0
      %v3854 = vadd.f32 0.0, %v3853
      %3855 = vmatmul.bf16.gmra.mxu0 %v3771
      %v3856 = vpop.f32.mrf.mxu0
      %v3857 = vadd.f32 0.0, %v3856
      %v3858 = vpop.f32.mrf.mxu0
      %v3859 = vadd.f32 0.0, %v3858
      %3860 = vmatmul.bf16.gmra.mxu0 %v3772
      %v3861 = vpop.f32.mrf.mxu0
      %v3862 = vadd.f32 0.0, %v3861
      %v3863 = vpop.f32.mrf.mxu0
      %v3864 = vadd.f32 0.0, %v3863
      %3865 = vmatmul.bf16.gmra.mxu0 %v3773
      %v3866 = vpop.f32.mrf.mxu0
      %v3867 = vadd.f32 0.0, %v3866
      %v3868 = vpop.f32.mrf.mxu0
      %v3869 = vadd.f32 0.0, %v3868
      %3870 = vmatmul.bf16.gmra.mxu0 %v3774
      %v3871 = vpop.f32.mrf.mxu0
      %v3872 = vadd.f32 0.0, %v3871
      %v3873 = vpop.f32.mrf.mxu0
      %v3874 = vadd.f32 0.0, %v3873
      %3875 = vmatmul.bf16.gmra.mxu0 %v3775
      %v3876 = vpop.f32.mrf.mxu0
      %v3877 = vadd.f32 0.0, %v3876
      %v3878 = vpop.f32.mrf.mxu0
      %v3879 = vadd.f32 0.0, %v3878
      %3880 = vmatmul.bf16.gmra.mxu0 %v3776
      %v3881 = vpop.f32.mrf.mxu0
      %v3882 = vadd.f32 0.0, %v3881
      %v3883 = vpop.f32.mrf.mxu0
      %3884 = vdwg.mxu0
      %v3885 = vadd.f32 %v3744, %v3852
      %v3886 = vadd.f32 %v3745, %v3854
      %v3887 = vadd.f32 %v3746, %v3857
      %v3888 = vadd.f32 %v3747, %v3859
      %v3889 = vadd.f32 %v3748, %v3862
      %v3890 = vadd.f32 %v3749, %v3864
      %v3891 = vadd.f32 %v3750, %v3867
      %v3892 = vadd.f32 %v3751, %v3869
      %v3893 = vadd.f32 %v3752, %v3872
      %v3894 = vadd.f32 %v3753, %v3874
      %v3895 = vadd.f32 %v3754, %v3877
      %v3896 = vadd.f32 %v3755, %v3879
      %v3897 = vadd.f32 %v3756, %v3882
      %v3898 = vld [vmem:[%s381 + $0x15] sm:$0xff]
      %v3899 = vld [vmem:[%s381 + $0x1d] sm:$0xff]
      %v3900 = vld [vmem:[%s381 + $0x25] sm:$0xff]
      %v3901 = vld [vmem:[%s381 + $0x2d] sm:$0xff]
      %v3902 = vld [vmem:[%s381 + $0x35] sm:$0xff]
      %v3903 = vld [vmem:[%s381 + $0x3d] sm:$0xff]
      %v3904 = vld [vmem:[%s381 + $0x45] sm:$0xff]
      %v3905 = vld [vmem:[%s381 + $0x4d] sm:$0xff]
      %v3906 = vld [vmem:[%s381 + $0x55] sm:$0xff]
      %v3907 = vld [vmem:[%s381 + $0x5d] sm:$0xff]
      %v3908 = vld [vmem:[%s381 + $0x65] sm:$0xff]
      %v3909 = vld [vmem:[%s381 + $0x6d] sm:$0xff]
      %v3910 = vld [vmem:[%s381 + $0x75] sm:$0xf]
      %v3911 = vpack.c.bf16 %v3899, %v3898
      %v3912 = vpack.c.bf16 %v3901, %v3900
      %v3913 = vpack.c.bf16 %v3903, %v3902
      %v3914 = vpack.c.bf16 %v3905, %v3904
      %v3915 = vpack.c.bf16 %v3907, %v3906
      %v3916 = vpack.c.bf16 %v3909, %v3908
      %v3917 = vpack.c.bf16 %v3910, %v3910
      %s3918 = scalar_lea.vmem %s3, 1600
      %v3919 = vld [vmem:[%s3918] sm:$0xf]
      %v3920 = vld [vmem:[%s3918 + $0x4] sm:$0xf]
      %v3921 = vld [vmem:[%s3918 + $0x8] sm:$0xf]
      %v3922 = vld [vmem:[%s3918 + $0xc] sm:$0xf]
      %v3923 = vld [vmem:[%s3918 + $0x10] sm:$0xf]
      %v3924 = vld [vmem:[%s3918 + $0x14] sm:$0xf]
      %v3925 = vld [vmem:[%s3918 + $0x18] sm:$0xf]
      %v3926 = vld [vmem:[%s3918 + $0x1c] sm:$0xf]
      %v3927 = vld [vmem:[%s3918 + $0x20] sm:$0xf]
      %v3928 = vld [vmem:[%s3918 + $0x24] sm:$0xf]
      %v3929 = vld [vmem:[%s3918 + $0x28] sm:$0xf]
      %v3930 = vld [vmem:[%s3918 + $0x2c] sm:$0xf]
      %v3931 = vld [vmem:[%s3918 + $0x30] sm:$0xf]
      %v3932 = vld [vmem:[%s3918 + $0x34] sm:$0xf]
      %v3933 = vld [vmem:[%s3918 + $0x38] sm:$0xf]
      %v3934 = vld [vmem:[%s3918 + $0x3c] sm:$0xf]
      %v3951 = vunpack.c.l.b16 %v3919
      %v3952 = vunpack.c.l.b16 %v3920
      %v3953 = vunpack.c.l.b16 %v3921
      %v3954 = vunpack.c.l.b16 %v3922
      %v3955 = vunpack.c.l.b16 %v3923
      %v3956 = vunpack.c.l.b16 %v3924
      %v3957 = vunpack.c.l.b16 %v3925
      %v3958 = vunpack.c.l.b16 %v3926
      %v3959 = vunpack.c.l.b16 %v3927
      %v3960 = vunpack.c.l.b16 %v3928
      %v3961 = vunpack.c.l.b16 %v3929
      %v3962 = vunpack.c.l.b16 %v3930
      %v3963 = vunpack.c.l.b16 %v3931
      %v3964 = vunpack.c.l.b16 %v3932
      %v3965 = vunpack.c.l.b16 %v3933
      %v3966 = vunpack.c.l.b16 %v3934
      %v3967 = vpack.c.b16 %v3952, %v3951
      %v3968 = vpack.c.b16 %v3954, %v3953
      %v3969 = vpack.c.b16 %v3956, %v3955
      %v3970 = vpack.c.b16 %v3958, %v3957
      %v3971 = vpack.c.b16 %v3960, %v3959
      %v3972 = vpack.c.b16 %v3962, %v3961
      %v3973 = vpack.c.b16 %v3964, %v3963
      %v3974 = vpack.c.b16 %v3966, %v3965
      %3983 = vmatpush.bf16.msra.mxu0 %v3974
      %3984 = vmatpush.bf16.msra.mxu0 %v3973
      %3985 = vmatpush.bf16.msra.mxu0 %v3972
      %3986 = vmatpush.bf16.msra.mxu0 %v3971
      %3987 = vmatpush.bf16.msra.mxu0 %v3970
      %3988 = vmatpush.bf16.msra.mxu0 %v3969
      %3989 = vmatpush.bf16.msra.mxu0 %v3968
      %3990 = vmatpush.bf16.msra.mxu0 %v3967
      %3991 = vmatmul.bf16.gmra.mxu0 %v3911
      %v3992 = vpop.f32.mrf.mxu0
      %v3993 = vadd.f32 0.0, %v3992
      %v3994 = vpop.f32.mrf.mxu0
      %v3995 = vadd.f32 0.0, %v3994
      %3996 = vmatmul.bf16.gmra.mxu0 %v3912
      %v3997 = vpop.f32.mrf.mxu0
      %v3998 = vadd.f32 0.0, %v3997
      %v3999 = vpop.f32.mrf.mxu0
      %v4000 = vadd.f32 0.0, %v3999
      %4001 = vmatmul.bf16.gmra.mxu0 %v3913
      %v4002 = vpop.f32.mrf.mxu0
      %v4003 = vadd.f32 0.0, %v4002
      %v4004 = vpop.f32.mrf.mxu0
      %v4005 = vadd.f32 0.0, %v4004
      %4006 = vmatmul.bf16.gmra.mxu0 %v3914
      %v4007 = vpop.f32.mrf.mxu0
      %v4008 = vadd.f32 0.0, %v4007
      %v4009 = vpop.f32.mrf.mxu0
      %v4010 = vadd.f32 0.0, %v4009
      %4011 = vmatmul.bf16.gmra.mxu0 %v3915
      %v4012 = vpop.f32.mrf.mxu0
      %v4013 = vadd.f32 0.0, %v4012
      %v4014 = vpop.f32.mrf.mxu0
      %v4015 = vadd.f32 0.0, %v4014
      %4016 = vmatmul.bf16.gmra.mxu0 %v3916
      %v4017 = vpop.f32.mrf.mxu0
      %v4018 = vadd.f32 0.0, %v4017
      %v4019 = vpop.f32.mrf.mxu0
      %v4020 = vadd.f32 0.0, %v4019
      %4021 = vmatmul.bf16.gmra.mxu0 %v3917
      %v4022 = vpop.f32.mrf.mxu0
      %v4023 = vadd.f32 0.0, %v4022
      %v4024 = vpop.f32.mrf.mxu0
      %4025 = vdwg.mxu0
      %v4026 = vadd.f32 %v3885, %v3993
      %v4027 = vadd.f32 %v3886, %v3995
      %v4028 = vadd.f32 %v3887, %v3998
      %v4029 = vadd.f32 %v3888, %v4000
      %v4030 = vadd.f32 %v3889, %v4003
      %v4031 = vadd.f32 %v3890, %v4005
      %v4032 = vadd.f32 %v3891, %v4008
      %v4033 = vadd.f32 %v3892, %v4010
      %v4034 = vadd.f32 %v3893, %v4013
      %v4035 = vadd.f32 %v3894, %v4015
      %v4036 = vadd.f32 %v3895, %v4018
      %v4037 = vadd.f32 %v3896, %v4020
      %v4038 = vadd.f32 %v3897, %v4023
      %v4039 = vld [vmem:[%s381 + $0x16] sm:$0xff]
      %v4040 = vld [vmem:[%s381 + $0x1e] sm:$0xff]
      %v4041 = vld [vmem:[%s381 + $0x26] sm:$0xff]
      %v4042 = vld [vmem:[%s381 + $0x2e] sm:$0xff]
      %v4043 = vld [vmem:[%s381 + $0x36] sm:$0xff]
      %v4044 = vld [vmem:[%s381 + $0x3e] sm:$0xff]
      %v4045 = vld [vmem:[%s381 + $0x46] sm:$0xff]
      %v4046 = vld [vmem:[%s381 + $0x4e] sm:$0xff]
      %v4047 = vld [vmem:[%s381 + $0x56] sm:$0xff]
      %v4048 = vld [vmem:[%s381 + $0x5e] sm:$0xff]
      %v4049 = vld [vmem:[%s381 + $0x66] sm:$0xff]
      %v4050 = vld [vmem:[%s381 + $0x6e] sm:$0xff]
      %v4051 = vld [vmem:[%s381 + $0x76] sm:$0xf]
      %v4052 = vpack.c.bf16 %v4040, %v4039
      %v4053 = vpack.c.bf16 %v4042, %v4041
      %v4054 = vpack.c.bf16 %v4044, %v4043
      %v4055 = vpack.c.bf16 %v4046, %v4045
      %v4056 = vpack.c.bf16 %v4048, %v4047
      %v4057 = vpack.c.bf16 %v4050, %v4049
      %v4058 = vpack.c.bf16 %v4051, %v4051
      %s4059 = scalar_lea.vmem %s3, 1664
      %v4060 = vld [vmem:[%s4059] sm:$0xf]
      %v4061 = vld [vmem:[%s4059 + $0x4] sm:$0xf]
      %v4062 = vld [vmem:[%s4059 + $0x8] sm:$0xf]
      %v4063 = vld [vmem:[%s4059 + $0xc] sm:$0xf]
      %v4064 = vld [vmem:[%s4059 + $0x10] sm:$0xf]
      %v4065 = vld [vmem:[%s4059 + $0x14] sm:$0xf]
      %v4066 = vld [vmem:[%s4059 + $0x18] sm:$0xf]
      %v4067 = vld [vmem:[%s4059 + $0x1c] sm:$0xf]
      %v4068 = vld [vmem:[%s4059 + $0x20] sm:$0xf]
      %v4069 = vld [vmem:[%s4059 + $0x24] sm:$0xf]
      %v4070 = vld [vmem:[%s4059 + $0x28] sm:$0xf]
      %v4071 = vld [vmem:[%s4059 + $0x2c] sm:$0xf]
      %v4072 = vld [vmem:[%s4059 + $0x30] sm:$0xf]
      %v4073 = vld [vmem:[%s4059 + $0x34] sm:$0xf]
      %v4074 = vld [vmem:[%s4059 + $0x38] sm:$0xf]
      %v4075 = vld [vmem:[%s4059 + $0x3c] sm:$0xf]
      %v4092 = vunpack.c.l.b16 %v4060
      %v4093 = vunpack.c.l.b16 %v4061
      %v4094 = vunpack.c.l.b16 %v4062
      %v4095 = vunpack.c.l.b16 %v4063
      %v4096 = vunpack.c.l.b16 %v4064
      %v4097 = vunpack.c.l.b16 %v4065
      %v4098 = vunpack.c.l.b16 %v4066
      %v4099 = vunpack.c.l.b16 %v4067
      %v4100 = vunpack.c.l.b16 %v4068
      %v4101 = vunpack.c.l.b16 %v4069
      %v4102 = vunpack.c.l.b16 %v4070
      %v4103 = vunpack.c.l.b16 %v4071
      %v4104 = vunpack.c.l.b16 %v4072
      %v4105 = vunpack.c.l.b16 %v4073
      %v4106 = vunpack.c.l.b16 %v4074
      %v4107 = vunpack.c.l.b16 %v4075
      %v4108 = vpack.c.b16 %v4093, %v4092
      %v4109 = vpack.c.b16 %v4095, %v4094
      %v4110 = vpack.c.b16 %v4097, %v4096
      %v4111 = vpack.c.b16 %v4099, %v4098
      %v4112 = vpack.c.b16 %v4101, %v4100
      %v4113 = vpack.c.b16 %v4103, %v4102
      %v4114 = vpack.c.b16 %v4105, %v4104
      %v4115 = vpack.c.b16 %v4107, %v4106
      %4124 = vmatpush.bf16.msra.mxu0 %v4115
      %4125 = vmatpush.bf16.msra.mxu0 %v4114
      %4126 = vmatpush.bf16.msra.mxu0 %v4113
      %4127 = vmatpush.bf16.msra.mxu0 %v4112
      %4128 = vmatpush.bf16.msra.mxu0 %v4111
      %4129 = vmatpush.bf16.msra.mxu0 %v4110
      %4130 = vmatpush.bf16.msra.mxu0 %v4109
      %4131 = vmatpush.bf16.msra.mxu0 %v4108
      %4132 = vmatmul.bf16.gmra.mxu0 %v4052
      %v4133 = vpop.f32.mrf.mxu0
      %v4134 = vadd.f32 0.0, %v4133
      %v4135 = vpop.f32.mrf.mxu0
      %v4136 = vadd.f32 0.0, %v4135
      %4137 = vmatmul.bf16.gmra.mxu0 %v4053
      %v4138 = vpop.f32.mrf.mxu0
      %v4139 = vadd.f32 0.0, %v4138
      %v4140 = vpop.f32.mrf.mxu0
      %v4141 = vadd.f32 0.0, %v4140
      %4142 = vmatmul.bf16.gmra.mxu0 %v4054
      %v4143 = vpop.f32.mrf.mxu0
      %v4144 = vadd.f32 0.0, %v4143
      %v4145 = vpop.f32.mrf.mxu0
      %v4146 = vadd.f32 0.0, %v4145
      %4147 = vmatmul.bf16.gmra.mxu0 %v4055
      %v4148 = vpop.f32.mrf.mxu0
      %v4149 = vadd.f32 0.0, %v4148
      %v4150 = vpop.f32.mrf.mxu0
      %v4151 = vadd.f32 0.0, %v4150
      %4152 = vmatmul.bf16.gmra.mxu0 %v4056
      %v4153 = vpop.f32.mrf.mxu0
      %v4154 = vadd.f32 0.0, %v4153
      %v4155 = vpop.f32.mrf.mxu0
      %v4156 = vadd.f32 0.0, %v4155
      %4157 = vmatmul.bf16.gmra.mxu0 %v4057
      %v4158 = vpop.f32.mrf.mxu0
      %v4159 = vadd.f32 0.0, %v4158
      %v4160 = vpop.f32.mrf.mxu0
      %v4161 = vadd.f32 0.0, %v4160
      %4162 = vmatmul.bf16.gmra.mxu0 %v4058
      %v4163 = vpop.f32.mrf.mxu0
      %v4164 = vadd.f32 0.0, %v4163
      %v4165 = vpop.f32.mrf.mxu0
      %4166 = vdwg.mxu0
      %v4167 = vadd.f32 %v4026, %v4134
      %v4168 = vadd.f32 %v4027, %v4136
      %v4169 = vadd.f32 %v4028, %v4139
      %v4170 = vadd.f32 %v4029, %v4141
      %v4171 = vadd.f32 %v4030, %v4144
      %v4172 = vadd.f32 %v4031, %v4146
      %v4173 = vadd.f32 %v4032, %v4149
      %v4174 = vadd.f32 %v4033, %v4151
      %v4175 = vadd.f32 %v4034, %v4154
      %v4176 = vadd.f32 %v4035, %v4156
      %v4177 = vadd.f32 %v4036, %v4159
      %v4178 = vadd.f32 %v4037, %v4161
      %v4179 = vadd.f32 %v4038, %v4164
      %4180 = vst [vmem:[%s391] sm:$0xff] %v4167
      %4181 = vst [vmem:[%s391 + $0x8] sm:$0xff] %v4168
      %4182 = vst [vmem:[%s391 + $0x10] sm:$0xff] %v4169
      %4183 = vst [vmem:[%s391 + $0x18] sm:$0xff] %v4170
      %4184 = vst [vmem:[%s391 + $0x20] sm:$0xff] %v4171
      %4185 = vst [vmem:[%s391 + $0x28] sm:$0xff] %v4172
      %4186 = vst [vmem:[%s391 + $0x30] sm:$0xff] %v4173
      %4187 = vst [vmem:[%s391 + $0x38] sm:$0xff] %v4174
      %4188 = vst [vmem:[%s391 + $0x40] sm:$0xff] %v4175
      %4189 = vst [vmem:[%s391 + $0x48] sm:$0xff] %v4176
      %4190 = vst [vmem:[%s391 + $0x50] sm:$0xff] %v4177
      %4191 = vst [vmem:[%s391 + $0x58] sm:$0xff] %v4178
      %4192 = vst [vmem:[%s391 + $0x60] sm:$0xf] %v4179
      %v4193 = vld [vmem:[%s4] sm:$0xff]
      %v4194 = vld [vmem:[%s4 + $0x8] sm:$0xff]
      %v4195 = vld [vmem:[%s4 + $0x10] sm:$0xff]
      %v4196 = vld [vmem:[%s4 + $0x18] sm:$0xff]
      %v4197 = vld [vmem:[%s4 + $0x20] sm:$0xff]
      %v4198 = vld [vmem:[%s4 + $0x28] sm:$0xff]
      %v4199 = vld [vmem:[%s4 + $0x30] sm:$0xff]
      %v4200 = vld [vmem:[%s4 + $0x38] sm:$0xff]
      %v4201 = vld [vmem:[%s4 + $0x40] sm:$0xff]
      %v4202 = vld [vmem:[%s4 + $0x48] sm:$0xff]
      %v4203 = vld [vmem:[%s4 + $0x50] sm:$0xff]
      %v4204 = vld [vmem:[%s4 + $0x58] sm:$0xff]
      %v4205 = vld [vmem:[%s4 + $0x60] sm:$0xf]
      %4207 = vset.pattern.permute.xlu0 0
      %4208 = vperm.xlu0 %4207, %v4193
      %v4209 = vpop.permute.xlu0 %4208
      %4212 = vset.pattern.permute.xlu0 0
      %4213 = vperm.xlu0 %4212, %v4194
      %v4214 = vpop.permute.xlu0 %4213
      %4217 = vset.pattern.permute.xlu0 0
      %4218 = vperm.xlu0 %4217, %v4195
      %v4219 = vpop.permute.xlu0 %4218
      %4222 = vset.pattern.permute.xlu0 0
      %4223 = vperm.xlu0 %4222, %v4196
      %v4224 = vpop.permute.xlu0 %4223
      %4227 = vset.pattern.permute.xlu0 0
      %4228 = vperm.xlu0 %4227, %v4197
      %v4229 = vpop.permute.xlu0 %4228
      %4232 = vset.pattern.permute.xlu0 0
      %4233 = vperm.xlu0 %4232, %v4198
      %v4234 = vpop.permute.xlu0 %4233
      %4237 = vset.pattern.permute.xlu0 0
      %4238 = vperm.xlu0 %4237, %v4199
      %v4239 = vpop.permute.xlu0 %4238
      %4242 = vset.pattern.permute.xlu0 0
      %4243 = vperm.xlu0 %4242, %v4200
      %v4244 = vpop.permute.xlu0 %4243
      %4247 = vset.pattern.permute.xlu0 0
      %4248 = vperm.xlu0 %4247, %v4201
      %v4249 = vpop.permute.xlu0 %4248
      %4252 = vset.pattern.permute.xlu0 0
      %4253 = vperm.xlu0 %4252, %v4202
      %v4254 = vpop.permute.xlu0 %4253
      %4257 = vset.pattern.permute.xlu0 0
      %4258 = vperm.xlu0 %4257, %v4203
      %v4259 = vpop.permute.xlu0 %4258
      %4262 = vset.pattern.permute.xlu0 0
      %4263 = vperm.xlu0 %4262, %v4204
      %v4264 = vpop.permute.xlu0 %4263
      %4267 = vset.pattern.permute.xlu0 0
      %4268 = vperm.xlu0 %4267, %v4205
      %v4269 = vpop.permute.xlu0 %4268
      %v4271 = vmul.f32 %v4167, %v4209
      %v4272 = vmul.f32 %v4168, %v4214
      %v4273 = vmul.f32 %v4169, %v4219
      %v4274 = vmul.f32 %v4170, %v4224
      %v4275 = vmul.f32 %v4171, %v4229
      %v4276 = vmul.f32 %v4172, %v4234
      %v4277 = vmul.f32 %v4173, %v4239
      %v4278 = vmul.f32 %v4174, %v4244
      %v4279 = vmul.f32 %v4175, %v4249
      %v4280 = vmul.f32 %v4176, %v4254
      %v4281 = vmul.f32 %v4177, %v4259
      %v4282 = vmul.f32 %v4178, %v4264
      %v4283 = vmul.f32 %v4179, %v4269
      %v4284 = vld [vmem:[%s6] sm:$0x1]
      %v4285 = vadd.f32 %v4271, %v4272
      %v4286 = vadd.f32 %v4285, %v4273
      %v4287 = vadd.f32 %v4286, %v4274
      %v4288 = vadd.f32 %v4287, %v4275
      %v4289 = vadd.f32 %v4288, %v4276
      %v4290 = vadd.f32 %v4289, %v4277
      %v4291 = vadd.f32 %v4290, %v4278
      %v4292 = vadd.f32 %v4291, %v4279
      %v4293 = vadd.f32 %v4292, %v4280
      %v4294 = vadd.f32 %v4293, %v4281
      %v4295 = vadd.f32 %v4294, %v4282
      %vm4296 = vcmask 1043456
      %v4297 = vsel %vm4296, %v4283, 0.0
      %v4298 = vadd.f32 %v4295, %v4297
      %v4299 = vrot.slane %v4298, 4
      %v4300 = vadd.f32 %v4298, %v4299
      %v4301 = vrot.slane %v4300, 2
      %v4302 = vadd.f32 %v4300, %v4301
      %v4303 = vrot.slane %v4302, 1
      %v4304 = vadd.f32 %v4302, %v4303
      %v4305 = vadd.f32 %v4284, %v4304
      %4306 = vst [vmem:[%s6] sm:$0x1] %v4305
      %v4307 = vld [vmem:[%s7] sm:$0x1]
      %v4308 = vmul.f32 %v4271, %v4167
      %v4309 = vmul.f32 %v4272, %v4168
      %v4310 = vmul.f32 %v4273, %v4169
      %v4311 = vmul.f32 %v4274, %v4170
      %v4312 = vmul.f32 %v4275, %v4171
      %v4313 = vmul.f32 %v4276, %v4172
      %v4314 = vmul.f32 %v4277, %v4173
      %v4315 = vmul.f32 %v4278, %v4174
      %v4316 = vmul.f32 %v4279, %v4175
      %v4317 = vmul.f32 %v4280, %v4176
      %v4318 = vmul.f32 %v4281, %v4177
      %v4319 = vmul.f32 %v4282, %v4178
      %v4320 = vmul.f32 %v4283, %v4179
      %v4321 = vadd.f32 %v4308, %v4309
      %v4322 = vadd.f32 %v4321, %v4310
      %v4323 = vadd.f32 %v4322, %v4311
      %v4324 = vadd.f32 %v4323, %v4312
      %v4325 = vadd.f32 %v4324, %v4313
      %v4326 = vadd.f32 %v4325, %v4314
      %v4327 = vadd.f32 %v4326, %v4315
      %v4328 = vadd.f32 %v4327, %v4316
      %v4329 = vadd.f32 %v4328, %v4317
      %v4330 = vadd.f32 %v4329, %v4318
      %v4331 = vadd.f32 %v4330, %v4319
      %v4332 = vsel %vm4296, %v4320, 0.0
      %v4333 = vadd.f32 %v4331, %v4332
      %v4334 = vrot.slane %v4333, 4
      %v4335 = vadd.f32 %v4333, %v4334
      %v4336 = vrot.slane %v4335, 2
      %v4337 = vadd.f32 %v4335, %v4336
      %v4338 = vrot.slane %v4337, 1
      %v4339 = vadd.f32 %v4337, %v4338
      %v4340 = vadd.f32 %v4307, %v4339
      %4341 = vst [vmem:[%s7] sm:$0x1] %v4340
      %p4342 = scmp.lt.s32.totalorder %s23, 1
      %s4343 = scalar_select %p4342, %s23, 1
      %p4344 = scmp.lt.s32.totalorder %s24, 7
      %s4345 = scalar_select %p4344, %s24, 7
      %s4346 = smul.addr %s4345, 13
      %s4347 = smul.addr %s4343, 104
      %s4348 = sadd.s32 %s4346, %s4347
      %s4349 = smul.addr %s4348, 8
      %s4350 = scalar_lea.vmem %s5, %s4349
      // Predicated region
      $region45: #{basic_block_forward.4} parent=39 // pred_check
        %p4351 = pneg %p181
      $region46: #{basic_block_forward.4} parent=39 // pred_check_branch
        %4353 = sbr.rel (%p4351) target = $region48
      $region47: #{basic_block_forward.4} parent=39 // pred_region
        _
      $region48: #{basic_block_forward.4} parent=39 // pred_fallthru
        _
      // Predicated region
      $region49: #{basic_block_forward.4} parent=39 // pred_check
        %p4354 = pneg %p202
      $region50: #{basic_block_forward.4} parent=39 // pred_check_branch
        %4356 = sbr.rel (%p4354) target = $region52
      $region51: #{basic_block_forward.4} parent=39 // pred_region
        _
      $region52: #{basic_block_forward.4} parent=39 // pred_fallthru
        _
      // Predicated region
      $region53: #{basic_block_forward.4} parent=39 // pred_check
        %p4357 = pneg %p223
      $region54: #{basic_block_forward.4} parent=39 // pred_check_branch
        %4359 = sbr.rel (%p4357) target = $region56
      $region55: #{basic_block_forward.4} parent=39 // pred_region
        _
      $region56: #{basic_block_forward.4} parent=39 // pred_fallthru
        _
      // Predicated region
      $region57: #{basic_block_forward.4} parent=39 // pred_check
        %p4360 = pneg %p202
      $region58: #{basic_block_forward.4} parent=39 // pred_check_branch
        %4362 = sbr.rel (%p4360) target = $region60
      $region59: #{basic_block_forward.4} parent=39 // pred_region
        _
      $region60: #{basic_block_forward.4} parent=39 // pred_fallthru
        _
      // Predicated region
      $region61: #{basic_block_forward.4} parent=39 // pred_check
        %p4363 = pneg %p223
      $region62: #{basic_block_forward.4} parent=39 // pred_check_branch
        %4365 = sbr.rel (%p4363) target = $region64
      $region63: #{basic_block_forward.4} parent=39 // pred_region
        _
      $region64: #{basic_block_forward.4} parent=39 // pred_fallthru
        _
    $region40: #{basic_block_forward.4} parent=5 // pred_fallthru
      _
    %p4366 = scmp.le.s32.totalorder 2, %s14
    // Predicated region
    $region65: #{basic_block_forward.4} parent=5 // pred_check
      %p4367 = pneg %p4366
    $region66: #{basic_block_forward.4} parent=5 // pred_check_branch
      %4369 = sbr.rel (%p4367) target = $region68
    $region67: #{basic_block_forward.4} parent=5 // pred_region
      %s4370 = ssub.s32 %s14, 2
      // Predicated region
      $region69: #{basic_block_forward.4} parent=67 // pred_check
        %p4371 = pneg %p187
      $region70: #{basic_block_forward.4} parent=67 // pred_check_branch
        %4373 = sbr.rel (%p4371) target = $region72
      $region71: #{basic_block_forward.4} parent=67 // pred_region
        %p4374 = scmp.lt.s32.totalorder %s25, 1
        %s4375 = scalar_select %p4374, %s25, 1
        %p4376 = scmp.lt.s32.totalorder %s26, 7
        %s4377 = scalar_select %p4376, %s26, 7
        %s4378 = smul.addr %s4377, 13
        %s4379 = smul.addr %s4375, 104
        %s4380 = sadd.s32 %s4378, %s4379
        %s4381 = smul.addr %s4380, 8
        %s4382 = scalar_lea.vmem %s5, %s4381
      $region72: #{basic_block_forward.4} parent=67 // pred_fallthru
        _
    $region68: #{basic_block_forward.4} parent=5 // pred_fallthru
      _
  $region6: #{basic_block_forward.4} parent=0 // loop_footer
    %s18 = sadd.s32 1, %s14
  $region7: #{basic_block_forward.4} parent=0 // loop_footer_branch
    %13 = sbr.rel target = $region3
  $region8: #{basic_block_forward.4} parent=0 // loop_exit
    _

</llo_original>
